<compile_context>
chip_gen: v5e
topology: v5e:2x2
jax: 0.10.0
libtpu: 0.0.40
codegen_flags: <defaults>
</compile_context>

<pallas_src>
import functools

import jax
import jax.numpy as jnp
from jax import lax
from jax.experimental import pallas as pl
from jax.experimental.pallas import tpu as pltpu


def _round_up(x, m):
    return (x + m - 1) // m * m


# ----------------------------------------------------------------------------
# Kernel: one batch tile through all 5 layers (5 matmuls + bias adds + 4 ReLUs).
# Weights stay resident in VMEM; the batch block is swept in `sub_tile`-row
# chunks to bound register pressure.
# ----------------------------------------------------------------------------
def mlp_kernel(x_ref,
               w1_ref, b1_ref, w2_ref, b2_ref, w3_ref, b3_ref,
               w4_ref, b4_ref, w5_ref, b5_ref,
               o_ref, *, sub_tile, matmul_dtype):
    num_sub = x_ref.shape[0] // sub_tile  # static

    def layer(h, w_ref, b_ref, relu):
        acc = jnp.dot(h, w_ref[...], preferred_element_type=jnp.float32)
        acc = acc + b_ref[...]                 # bias / ReLU in f32 (VPU)
        if relu:
            acc = jnp.maximum(acc, 0.0)
        return acc

    def body(s, carry):
        row = pl.multiple_of(s * sub_tile, sub_tile)
        h = x_ref[pl.ds(row, sub_tile), :].astype(matmul_dtype)
        h = layer(h, w1_ref, b1_ref, True).astype(matmul_dtype)
        h = layer(h, w2_ref, b2_ref, True).astype(matmul_dtype)
        h = layer(h, w3_ref, b3_ref, True).astype(matmul_dtype)
        h = layer(h, w4_ref, b4_ref, True).astype(matmul_dtype)
        out = layer(h, w5_ref, b5_ref, False)  # final layer, no ReLU, f32
        o_ref[pl.ds(row, sub_tile), :] = out.astype(o_ref.dtype)
        return carry

    lax.fori_loop(0, num_sub, body, 0, unroll=True)


# ----------------------------------------------------------------------------
# Wrapper: batch tiling, lane-padding of the output, bf16 MXU weights.
# ----------------------------------------------------------------------------
def mlp_forward(x, params, *, batch_tile=256, sub_tile=128,
                matmul_dtype=jnp.bfloat16):
    (w1, b1), (w2, b2), (w3, b3), (w4, b4), (w5, b5) = params
    batch, in_dim = x.shape
    out_dim = w5.shape[1]

    # Lane-pad the last layer so output stores are 128-lane dense.
    out_pad = _round_up(out_dim, 128)
    if out_pad != out_dim:
        w5 = jnp.pad(w5, ((0, 0), (0, out_pad - out_dim)))
        b5 = jnp.pad(b5, ((0, 0), (0, out_pad - out_dim)))

    # MXU operands in bf16 (f32 accumulation inside the kernel); biases f32.
    ws = [w.astype(matmul_dtype) for w in (w1, w2, w3, w4, w5)]
    bs = [b.astype(jnp.float32) for b in (b1, b2, b3, b4, b5)]

    # Batch tile (multiple of sub_tile); pad the batch to a whole number of tiles.
    bt = max(sub_tile, min(batch_tile, _round_up(batch, sub_tile)))
    bt = _round_up(bt, sub_tile)
    padded_batch = _round_up(batch, bt)
    if padded_batch != batch:
        x = jnp.pad(x, ((0, padded_batch - batch), (0, 0)))
    grid = (padded_batch // bt,)

    def rep(shape):
        # Constant block index across the grid -> fetched once, kept resident
        # in VMEM by the pipeline (no per-step re-DMA).
        return pl.BlockSpec(shape, lambda i: (0, 0))

    in_specs = [pl.BlockSpec((bt, in_dim), lambda i: (i, 0))]
    for w, b in zip(ws, bs):
        in_specs += [rep(w.shape), rep(b.shape)]
    out_specs = pl.BlockSpec((bt, out_pad), lambda i: (i, 0))

    dims = [in_dim, 512, 256, 128, 64, out_pad]
    flops = 2 * padded_batch * sum(a * b for a, b in zip(dims[:-1], dims[1:]))
    bytes_accessed = (x.size * x.dtype.itemsize
                      + sum(w.size * w.dtype.itemsize for w in ws)
                      + sum(b.size * b.dtype.itemsize for b in bs)
                      + padded_batch * out_pad * x.dtype.itemsize)

    kernel = functools.partial(mlp_kernel, sub_tile=sub_tile,
                               matmul_dtype=matmul_dtype)

    out = pl.pallas_call(
        kernel,
        out_shape=jax.ShapeDtypeStruct((padded_batch, out_pad), x.dtype),
        grid=grid,
        in_specs=in_specs,
        out_specs=out_specs,
        compiler_params=pltpu.CompilerParams(
            dimension_semantics=("parallel",),
            vmem_limit_bytes=32 * 1024 * 1024,   # working set < 2 MiB; safe on v7x
        ),
        cost_estimate=pl.CostEstimate(
            flops=flops, transcendentals=0, bytes_accessed=bytes_accessed),
    )(x, *[a for wb in zip(ws, bs) for a in wb])

    return out[:batch, :out_dim]


# ----------------------------------------------------------------------------
# Deterministic init mimicking nn.Linear's U(-1/sqrt(fan_in), 1/sqrt(fan_in)).
# ----------------------------------------------------------------------------
def init_params(key, input_size, output_size, dtype=jnp.float32):
    dims = [input_size, 512, 256, 128, 64, output_size]
    params = []
    for fan_in, fan_out in zip(dims[:-1], dims[1:]):
        key, kw, kb = jax.random.split(key, 3)
        bound = 1.0 / float(fan_in) ** 0.5
        w = jax.random.uniform(kw, (fan_in, fan_out), dtype, -bound, bound)
        b = jax.random.uniform(kb, (1, fan_out), dtype, -bound, bound)
        params.append((w, b))
    return params


def mlp_reference(x, params, matmul_dtype=jnp.float32):
    """Pure-jnp reference; with matmul_dtype=bf16 it mirrors the kernel numerics."""
    h = x.astype(matmul_dtype)
    n = len(params)
    for i, (w, b) in enumerate(params):
        h = jnp.dot(h, w.astype(matmul_dtype),
                    preferred_element_type=jnp.float32) + b.astype(jnp.float32)
        if i < n - 1:
            h = jnp.maximum(h, 0.0).astype(matmul_dtype)
    return h


if __name__ == "__main__":
    key = jax.random.PRNGKey(0)
    k_x, k_p = jax.random.split(key)

    input_size, output_size = 32, 16
    batch = 512   # 2 grid steps of 256 rows -> both v7x TensorCores get a tile

    x = jax.random.normal(k_x, (batch, input_size), jnp.float32)
    params = init_params(k_p, input_size, output_size)

    out = jax.block_until_ready(mlp_forward(x, params))
    assert out.shape == (batch, output_size)

    # Reference with the same numerics (bf16 matmul operands, f32 accumulate).
    ref_bf16 = mlp_reference(x, params, matmul_dtype=jnp.bfloat16)
    assert jnp.allclose(out, ref_bf16, atol=1e-2, rtol=1e-2), "mismatch vs bf16 reference"

    # Sanity vs. the full-f32 module semantics (loose: bf16 operand rounding).
    ref_f32 = mlp_reference(x, params, matmul_dtype=jnp.float32)
    assert jnp.allclose(out, ref_f32, atol=1e-1, rtol=1e-1), "bf16 drift too large"

    print("KERNEL_OK")
</pallas_src>

<mosaic_0001>
module attributes {stable_mosaic.version = 11 : i64} {
  func.func @mlp_kernel(%arg0: i32, %arg1: memref<256x32xf32, #tpu.memory_space<vmem>>, %arg2: memref<32x512xbf16, #tpu.memory_space<vmem>>, %arg3: memref<1x512xf32, #tpu.memory_space<vmem>>, %arg4: memref<512x256xbf16, #tpu.memory_space<vmem>>, %arg5: memref<1x256xf32, #tpu.memory_space<vmem>>, %arg6: memref<256x128xbf16, #tpu.memory_space<vmem>>, %arg7: memref<1x128xf32, #tpu.memory_space<vmem>>, %arg8: memref<128x64xbf16, #tpu.memory_space<vmem>>, %arg9: memref<1x64xf32, #tpu.memory_space<vmem>>, %arg10: memref<64x128xbf16, #tpu.memory_space<vmem>>, %arg11: memref<1x128xf32, #tpu.memory_space<vmem>>, %arg12: memref<256x128xf32, #tpu.memory_space<vmem>>) attributes {dimension_semantics = [#tpu.dimension_semantics<parallel>], iteration_bounds = array<i64: 2>, scalar_prefetch = 0 : i64, scratch_operands = 0 : i64, tpu.core_type = #tpu.core_type<tc>, window_params = [{transform_indices = @transform_0, window_bounds = array<i64: 256, 32>}, {pipeline_mode = #tpu.pipeline_mode<synchronous>, transform_indices = @transform_1, window_bounds = array<i64: 32, 512>}, {pipeline_mode = #tpu.pipeline_mode<synchronous>, transform_indices = @transform_2, window_bounds = array<i64: 1, 512>}, {pipeline_mode = #tpu.pipeline_mode<synchronous>, transform_indices = @transform_3, window_bounds = array<i64: 512, 256>}, {pipeline_mode = #tpu.pipeline_mode<synchronous>, transform_indices = @transform_4, window_bounds = array<i64: 1, 256>}, {pipeline_mode = #tpu.pipeline_mode<synchronous>, transform_indices = @transform_5, window_bounds = array<i64: 256, 128>}, {pipeline_mode = #tpu.pipeline_mode<synchronous>, transform_indices = @transform_6, window_bounds = array<i64: 1, 128>}, {pipeline_mode = #tpu.pipeline_mode<synchronous>, transform_indices = @transform_7, window_bounds = array<i64: 128, 64>}, {pipeline_mode = #tpu.pipeline_mode<synchronous>, transform_indices = @transform_8, window_bounds = array<i64: 1, 64>}, {pipeline_mode = #tpu.pipeline_mode<synchronous>, transform_indices = @transform_9, window_bounds = array<i64: 64, 128>}, {pipeline_mode = #tpu.pipeline_mode<synchronous>, transform_indices = @transform_10, window_bounds = array<i64: 1, 128>}, {transform_indices = @transform_11, window_bounds = array<i64: 256, 128>}]} {
    %c0_i32 = arith.constant 0 : i32
    %c128_i32 = arith.constant 128 : i32
    %0 = arith.muli %c0_i32, %c128_i32 : i32
    %1 = tpu.assume_multiple %0, 128 : i32
    %2 = arith.index_cast %1 : i32 to index
    %c0 = arith.constant 0 : index
    %3 = vector.load %arg1[%2, %c0] : memref<256x32xf32, #tpu.memory_space<vmem>>, vector<128x32xf32>
    %4 = arith.truncf %3 : vector<128x32xf32> to vector<128x32xbf16>
    %c0_0 = arith.constant 0 : index
    %c0_1 = arith.constant 0 : index
    %5 = vector.load %arg2[%c0_0, %c0_1] : memref<32x512xbf16, #tpu.memory_space<vmem>>, vector<32x512xbf16>
    %cst = arith.constant dense<0.000000e+00> : vector<128x512xf32>
    %6 = tpu.matmul %4, %5, %cst {dimension_numbers = #tpu.dot_dimension_numbers<[1], [0], [0], [1], [0, 0, 1, 1], [], []>} : vector<128x32xbf16>, vector<32x512xbf16>, vector<128x512xf32> -> vector<128x512xf32>
    %c0_2 = arith.constant 0 : index
    %c0_3 = arith.constant 0 : index
    %7 = vector.load %arg3[%c0_2, %c0_3] : memref<1x512xf32, #tpu.memory_space<vmem>>, vector<1x512xf32>
    %8 = vector.broadcast %7 : vector<1x512xf32> to vector<128x512xf32>
    %9 = arith.addf %6, %8 : vector<128x512xf32>
    %cst_4 = arith.constant 0.000000e+00 : f32
    %10 = vector.broadcast %cst_4 : f32 to vector<128x512xf32>
    %11 = arith.maximumf %9, %10 : vector<128x512xf32>
    %12 = arith.truncf %11 : vector<128x512xf32> to vector<128x512xbf16>
    %c0_5 = arith.constant 0 : index
    %c0_6 = arith.constant 0 : index
    %13 = vector.load %arg4[%c0_5, %c0_6] : memref<512x256xbf16, #tpu.memory_space<vmem>>, vector<512x256xbf16>
    %cst_7 = arith.constant dense<0.000000e+00> : vector<128x256xf32>
    %14 = tpu.matmul %12, %13, %cst_7 {dimension_numbers = #tpu.dot_dimension_numbers<[1], [0], [0], [1], [0, 0, 1, 1], [], []>} : vector<128x512xbf16>, vector<512x256xbf16>, vector<128x256xf32> -> vector<128x256xf32>
    %c0_8 = arith.constant 0 : index
    %c0_9 = arith.constant 0 : index
    %15 = vector.load %arg5[%c0_8, %c0_9] : memref<1x256xf32, #tpu.memory_space<vmem>>, vector<1x256xf32>
    %16 = vector.broadcast %15 : vector<1x256xf32> to vector<128x256xf32>
    %17 = arith.addf %14, %16 : vector<128x256xf32>
    %cst_10 = arith.constant 0.000000e+00 : f32
    %18 = vector.broadcast %cst_10 : f32 to vector<128x256xf32>
    %19 = arith.maximumf %17, %18 : vector<128x256xf32>
    %20 = arith.truncf %19 : vector<128x256xf32> to vector<128x256xbf16>
    %c0_11 = arith.constant 0 : index
    %c0_12 = arith.constant 0 : index
    %21 = vector.load %arg6[%c0_11, %c0_12] : memref<256x128xbf16, #tpu.memory_space<vmem>>, vector<256x128xbf16>
    %cst_13 = arith.constant dense<0.000000e+00> : vector<128x128xf32>
    %22 = tpu.matmul %20, %21, %cst_13 {dimension_numbers = #tpu.dot_dimension_numbers<[1], [0], [0], [1], [0, 0, 1, 1], [], []>} : vector<128x256xbf16>, vector<256x128xbf16>, vector<128x128xf32> -> vector<128x128xf32>
    %c0_14 = arith.constant 0 : index
    %c0_15 = arith.constant 0 : index
    %23 = vector.load %arg7[%c0_14, %c0_15] : memref<1x128xf32, #tpu.memory_space<vmem>>, vector<1x128xf32>
    %24 = vector.broadcast %23 : vector<1x128xf32> to vector<128x128xf32>
    %25 = arith.addf %22, %24 : vector<128x128xf32>
    %cst_16 = arith.constant 0.000000e+00 : f32
    %26 = vector.broadcast %cst_16 : f32 to vector<128x128xf32>
    %27 = arith.maximumf %25, %26 : vector<128x128xf32>
    %28 = arith.truncf %27 : vector<128x128xf32> to vector<128x128xbf16>
    %c0_17 = arith.constant 0 : index
    %c0_18 = arith.constant 0 : index
    %29 = vector.load %arg8[%c0_17, %c0_18] : memref<128x64xbf16, #tpu.memory_space<vmem>>, vector<128x64xbf16>
    %cst_19 = arith.constant dense<0.000000e+00> : vector<128x64xf32>
    %30 = tpu.matmul %28, %29, %cst_19 {dimension_numbers = #tpu.dot_dimension_numbers<[1], [0], [0], [1], [0, 0, 1, 1], [], []>} : vector<128x128xbf16>, vector<128x64xbf16>, vector<128x64xf32> -> vector<128x64xf32>
    %c0_20 = arith.constant 0 : index
    %c0_21 = arith.constant 0 : index
    %31 = vector.load %arg9[%c0_20, %c0_21] : memref<1x64xf32, #tpu.memory_space<vmem>>, vector<1x64xf32>
    %32 = vector.broadcast %31 : vector<1x64xf32> to vector<128x64xf32>
    %33 = arith.addf %30, %32 : vector<128x64xf32>
    %cst_22 = arith.constant 0.000000e+00 : f32
    %34 = vector.broadcast %cst_22 : f32 to vector<128x64xf32>
    %35 = arith.maximumf %33, %34 : vector<128x64xf32>
    %36 = arith.truncf %35 : vector<128x64xf32> to vector<128x64xbf16>
    %c0_23 = arith.constant 0 : index
    %c0_24 = arith.constant 0 : index
    %37 = vector.load %arg10[%c0_23, %c0_24] : memref<64x128xbf16, #tpu.memory_space<vmem>>, vector<64x128xbf16>
    %cst_25 = arith.constant dense<0.000000e+00> : vector<128x128xf32>
    %38 = tpu.matmul %36, %37, %cst_25 {dimension_numbers = #tpu.dot_dimension_numbers<[1], [0], [0], [1], [0, 0, 1, 1], [], []>} : vector<128x64xbf16>, vector<64x128xbf16>, vector<128x128xf32> -> vector<128x128xf32>
    %c0_26 = arith.constant 0 : index
    %c0_27 = arith.constant 0 : index
    %39 = vector.load %arg11[%c0_26, %c0_27] : memref<1x128xf32, #tpu.memory_space<vmem>>, vector<1x128xf32>
    %40 = vector.broadcast %39 : vector<1x128xf32> to vector<128x128xf32>
    %41 = arith.addf %38, %40 : vector<128x128xf32>
    %42 = arith.index_cast %1 : i32 to index
    %c0_28 = arith.constant 0 : index
    %43 = vector.load %arg12[%42, %c0_28] : memref<256x128xf32, #tpu.memory_space<vmem>>, vector<128x128xf32>
    tpu.vector_store %arg12[%42, %c0_28], %41 {strides = array<i32>} : memref<256x128xf32, #tpu.memory_space<vmem>>, vector<128x128xf32>,
    %c1_i32 = arith.constant 1 : i32
    %c128_i32_29 = arith.constant 128 : i32
    %44 = arith.muli %c1_i32, %c128_i32_29 : i32
    %45 = tpu.assume_multiple %44, 128 : i32
    %46 = arith.index_cast %45 : i32 to index
    %c0_30 = arith.constant 0 : index
    %47 = vector.load %arg1[%46, %c0_30] : memref<256x32xf32, #tpu.memory_space<vmem>>, vector<128x32xf32>
    %48 = arith.truncf %47 : vector<128x32xf32> to vector<128x32xbf16>
    %c0_31 = arith.constant 0 : index
    %c0_32 = arith.constant 0 : index
    %49 = vector.load %arg2[%c0_31, %c0_32] : memref<32x512xbf16, #tpu.memory_space<vmem>>, vector<32x512xbf16>
    %cst_33 = arith.constant dense<0.000000e+00> : vector<128x512xf32>
    %50 = tpu.matmul %48, %49, %cst_33 {dimension_numbers = #tpu.dot_dimension_numbers<[1], [0], [0], [1], [0, 0, 1, 1], [], []>} : vector<128x32xbf16>, vector<32x512xbf16>, vector<128x512xf32> -> vector<128x512xf32>
    %c0_34 = arith.constant 0 : index
    %c0_35 = arith.constant 0 : index
    %51 = vector.load %arg3[%c0_34, %c0_35] : memref<1x512xf32, #tpu.memory_space<vmem>>, vector<1x512xf32>
    %52 = vector.broadcast %51 : vector<1x512xf32> to vector<128x512xf32>
    %53 = arith.addf %50, %52 : vector<128x512xf32>
    %cst_36 = arith.constant 0.000000e+00 : f32
    %54 = vector.broadcast %cst_36 : f32 to vector<128x512xf32>
    %55 = arith.maximumf %53, %54 : vector<128x512xf32>
    %56 = arith.truncf %55 : vector<128x512xf32> to vector<128x512xbf16>
    %c0_37 = arith.constant 0 : index
    %c0_38 = arith.constant 0 : index
    %57 = vector.load %arg4[%c0_37, %c0_38] : memref<512x256xbf16, #tpu.memory_space<vmem>>, vector<512x256xbf16>
    %cst_39 = arith.constant dense<0.000000e+00> : vector<128x256xf32>
    %58 = tpu.matmul %56, %57, %cst_39 {dimension_numbers = #tpu.dot_dimension_numbers<[1], [0], [0], [1], [0, 0, 1, 1], [], []>} : vector<128x512xbf16>, vector<512x256xbf16>, vector<128x256xf32> -> vector<128x256xf32>
    %c0_40 = arith.constant 0 : index
    %c0_41 = arith.constant 0 : index
    %59 = vector.load %arg5[%c0_40, %c0_41] : memref<1x256xf32, #tpu.memory_space<vmem>>, vector<1x256xf32>
    %60 = vector.broadcast %59 : vector<1x256xf32> to vector<128x256xf32>
    %61 = arith.addf %58, %60 : vector<128x256xf32>
    %cst_42 = arith.constant 0.000000e+00 : f32
    %62 = vector.broadcast %cst_42 : f32 to vector<128x256xf32>
    %63 = arith.maximumf %61, %62 : vector<128x256xf32>
    %64 = arith.truncf %63 : vector<128x256xf32> to vector<128x256xbf16>
    %c0_43 = arith.constant 0 : index
    %c0_44 = arith.constant 0 : index
    %65 = vector.load %arg6[%c0_43, %c0_44] : memref<256x128xbf16, #tpu.memory_space<vmem>>, vector<256x128xbf16>
    %cst_45 = arith.constant dense<0.000000e+00> : vector<128x128xf32>
    %66 = tpu.matmul %64, %65, %cst_45 {dimension_numbers = #tpu.dot_dimension_numbers<[1], [0], [0], [1], [0, 0, 1, 1], [], []>} : vector<128x256xbf16>, vector<256x128xbf16>, vector<128x128xf32> -> vector<128x128xf32>
    %c0_46 = arith.constant 0 : index
    %c0_47 = arith.constant 0 : index
    %67 = vector.load %arg7[%c0_46, %c0_47] : memref<1x128xf32, #tpu.memory_space<vmem>>, vector<1x128xf32>
    %68 = vector.broadcast %67 : vector<1x128xf32> to vector<128x128xf32>
    %69 = arith.addf %66, %68 : vector<128x128xf32>
    %cst_48 = arith.constant 0.000000e+00 : f32
    %70 = vector.broadcast %cst_48 : f32 to vector<128x128xf32>
    %71 = arith.maximumf %69, %70 : vector<128x128xf32>
    %72 = arith.truncf %71 : vector<128x128xf32> to vector<128x128xbf16>
    %c0_49 = arith.constant 0 : index
    %c0_50 = arith.constant 0 : index
    %73 = vector.load %arg8[%c0_49, %c0_50] : memref<128x64xbf16, #tpu.memory_space<vmem>>, vector<128x64xbf16>
    %cst_51 = arith.constant dense<0.000000e+00> : vector<128x64xf32>
    %74 = tpu.matmul %72, %73, %cst_51 {dimension_numbers = #tpu.dot_dimension_numbers<[1], [0], [0], [1], [0, 0, 1, 1], [], []>} : vector<128x128xbf16>, vector<128x64xbf16>, vector<128x64xf32> -> vector<128x64xf32>
    %c0_52 = arith.constant 0 : index
    %c0_53 = arith.constant 0 : index
    %75 = vector.load %arg9[%c0_52, %c0_53] : memref<1x64xf32, #tpu.memory_space<vmem>>, vector<1x64xf32>
    %76 = vector.broadcast %75 : vector<1x64xf32> to vector<128x64xf32>
    %77 = arith.addf %74, %76 : vector<128x64xf32>
    %cst_54 = arith.constant 0.000000e+00 : f32
    %78 = vector.broadcast %cst_54 : f32 to vector<128x64xf32>
    %79 = arith.maximumf %77, %78 : vector<128x64xf32>
    %80 = arith.truncf %79 : vector<128x64xf32> to vector<128x64xbf16>
    %c0_55 = arith.constant 0 : index
    %c0_56 = arith.constant 0 : index
    %81 = vector.load %arg10[%c0_55, %c0_56] : memref<64x128xbf16, #tpu.memory_space<vmem>>, vector<64x128xbf16>
    %cst_57 = arith.constant dense<0.000000e+00> : vector<128x128xf32>
    %82 = tpu.matmul %80, %81, %cst_57 {dimension_numbers = #tpu.dot_dimension_numbers<[1], [0], [0], [1], [0, 0, 1, 1], [], []>} : vector<128x64xbf16>, vector<64x128xbf16>, vector<128x128xf32> -> vector<128x128xf32>
    %c0_58 = arith.constant 0 : index
    %c0_59 = arith.constant 0 : index
    %83 = vector.load %arg11[%c0_58, %c0_59] : memref<1x128xf32, #tpu.memory_space<vmem>>, vector<1x128xf32>
    %84 = vector.broadcast %83 : vector<1x128xf32> to vector<128x128xf32>
    %85 = arith.addf %82, %84 : vector<128x128xf32>
    %86 = arith.index_cast %45 : i32 to index
    %c0_60 = arith.constant 0 : index
    %87 = vector.load %arg12[%86, %c0_60] : memref<256x128xf32, #tpu.memory_space<vmem>>, vector<128x128xf32>
    tpu.vector_store %arg12[%86, %c0_60], %85 {strides = array<i32>} : memref<256x128xf32, #tpu.memory_space<vmem>>, vector<128x128xf32>,
    %c2_i32 = arith.constant 2 : i32
    return
  }
  func.func @transform_0(%arg0: i32) -> (i32, i32) {
    %c0_i32 = arith.constant 0 : i32
    %c0_i32_0 = arith.constant 0 : i32
    return %arg0, %c0_i32 : i32, i32
  }
  func.func @transform_1(%arg0: i32) -> (i32, i32) {
    %c0_i32 = arith.constant 0 : i32
    %c0_i32_0 = arith.constant 0 : i32
    %c0_i32_1 = arith.constant 0 : i32
    return %c0_i32, %c0_i32_0 : i32, i32
  }
  func.func @transform_2(%arg0: i32) -> (i32, i32) {
    %c0_i32 = arith.constant 0 : i32
    %c0_i32_0 = arith.constant 0 : i32
    %c0_i32_1 = arith.constant 0 : i32
    return %c0_i32, %c0_i32_0 : i32, i32
  }
  func.func @transform_3(%arg0: i32) -> (i32, i32) {
    %c0_i32 = arith.constant 0 : i32
    %c0_i32_0 = arith.constant 0 : i32
    %c0_i32_1 = arith.constant 0 : i32
    return %c0_i32, %c0_i32_0 : i32, i32
  }
  func.func @transform_4(%arg0: i32) -> (i32, i32) {
    %c0_i32 = arith.constant 0 : i32
    %c0_i32_0 = arith.constant 0 : i32
    %c0_i32_1 = arith.constant 0 : i32
    return %c0_i32, %c0_i32_0 : i32, i32
  }
  func.func @transform_5(%arg0: i32) -> (i32, i32) {
    %c0_i32 = arith.constant 0 : i32
    %c0_i32_0 = arith.constant 0 : i32
    %c0_i32_1 = arith.constant 0 : i32
    return %c0_i32, %c0_i32_0 : i32, i32
  }
  func.func @transform_6(%arg0: i32) -> (i32, i32) {
    %c0_i32 = arith.constant 0 : i32
    %c0_i32_0 = arith.constant 0 : i32
    %c0_i32_1 = arith.constant 0 : i32
    return %c0_i32, %c0_i32_0 : i32, i32
  }
  func.func @transform_7(%arg0: i32) -> (i32, i32) {
    %c0_i32 = arith.constant 0 : i32
    %c0_i32_0 = arith.constant 0 : i32
    %c0_i32_1 = arith.constant 0 : i32
    return %c0_i32, %c0_i32_0 : i32, i32
  }
  func.func @transform_8(%arg0: i32) -> (i32, i32) {
    %c0_i32 = arith.constant 0 : i32
    %c0_i32_0 = arith.constant 0 : i32
    %c0_i32_1 = arith.constant 0 : i32
    return %c0_i32, %c0_i32_0 : i32, i32
  }
  func.func @transform_9(%arg0: i32) -> (i32, i32) {
    %c0_i32 = arith.constant 0 : i32
    %c0_i32_0 = arith.constant 0 : i32
    %c0_i32_1 = arith.constant 0 : i32
    return %c0_i32, %c0_i32_0 : i32, i32
  }
  func.func @transform_10(%arg0: i32) -> (i32, i32) {
    %c0_i32 = arith.constant 0 : i32
    %c0_i32_0 = arith.constant 0 : i32
    %c0_i32_1 = arith.constant 0 : i32
    return %c0_i32, %c0_i32_0 : i32, i32
  }
  func.func @transform_11(%arg0: i32) -> (i32, i32) {
    %c0_i32 = arith.constant 0 : i32
    %c0_i32_0 = arith.constant 0 : i32
    return %arg0, %c0_i32 : i32, i32
  }
}

</mosaic_0001>

<llo_original>
// kernel: tpu_custom_call.1
$region0: #{tpu_custom_call.1}
  #allocation0 [shape = 'u32[]', space=smem, size = 0x4, offset = 0x4, fixed_abs, tag = 'smem constant byte address 0x4 - core index']
  #allocation1 [shape = 'u32[72,128]{1,0:T(1,128)}', space=vmem, size = 0x9000, scoped, tag = 'internal scratch']
  %s0 = inlined_call_operand.vmem [shape: f32[512,32], index: 0, kind: input, shape index: {}]
  %s1 = inlined_call_operand.vmem [shape: bf16[32,512], index: 1, kind: input, shape index: {}]
  %s2 = inlined_call_operand.hbm [shape: f32[1,512], index: 2, kind: input, shape index: {}]
  %s3 = inlined_call_operand.vmem [shape: bf16[512,256], index: 3, kind: input, shape index: {}]
  %s4 = inlined_call_operand.vmem [shape: f32[1,256], index: 4, kind: input, shape index: {}]
  %s5 = inlined_call_operand.vmem [shape: bf16[256,128], index: 5, kind: input, shape index: {}]
  %s6 = inlined_call_operand.hbm [shape: f32[1,128], index: 6, kind: input, shape index: {}]
  %s7 = inlined_call_operand.vmem [shape: bf16[128,64], index: 7, kind: input, shape index: {}]
  %s8 = inlined_call_operand.vmem [shape: f32[1,64], index: 8, kind: input, shape index: {}]
  %s9 = inlined_call_operand.vmem [shape: bf16[64,128], index: 9, kind: input, shape index: {}]
  %s10 = inlined_call_operand.vmem [shape: f32[1,128], index: 10, kind: input, shape index: {}]
  %s11 = inlined_call_operand.hbm [shape: f32[512,128], index: 11, kind: output, shape index: {}]
  %s12 = sld [smem:[#allocation0]]
  $region85: #{tpu_custom_call.1} parent=0
    _
  %s14 = ssub.s32 1, %s12
  %s15 = scalar_select 0, %s14, %s12
  $region1: #{tpu_custom_call.1} parent=0
    #allocation2 [shape = 'u8[2048]{0}', space=vmem, size = 0x800, scoped, tag = 'input window, operand 2, single buffered']
    #allocation3 [shape = 's32[2]{0}', space=sflag, size = 0x8, scoped, tag = 'scoped memory for tpu_custom_call.1']
    #allocation4 [shape = 's32[2]{0}', space=sflag, size = 0x8, scoped, tag = 'scoped memory for tpu_custom_call.1']
    #allocation5 [shape = 'u8[512]{0}', space=vmem, size = 0x400, scoped, tag = 'input window, operand 6, single buffered']
    #allocation6 [shape = 's32[1]{0}', space=sflag, size = 0x4, scoped, tag = 'scoped memory for tpu_custom_call.1']
    #allocation7 [shape = 'u8[262144]{0}', space=vmem, size = 0x40000, scoped, tag = 'output window, operand 0']
    %16 = vsyncpa [#allocation3], 0
    %17 = vsyncpa [#allocation6], 0
    %18 = vsyncpa [#allocation4], 0
    %s19 = scalar_lea.sflag [#allocation4], 1
    %20 = vsyncpa %s19, 0
    loop: start=0, step=1, limit=4
    $region2: #{tpu_custom_call.1} parent=1 // loop_pre_header
      _
    $region3: #{tpu_custom_call.1} parent=1 // loop_header
      %s22 = sphi 0, %s26
      %p23 = scmp.ge.s32.totalorder %s22, 4
      %s32 = sphi 0, %s34
      %s35 = sphi 0, %s32
      %s36 = sphi 0, %s35
      %s52 = sphi 0, %s36
      %s56 = sphi 0, %s56
      %s58 = sphi 0, %s56
      %s59 = sphi 0, %s58
      %s73 = sphi 0, %s59
      %s77 = sphi 0, %s77
      %s79 = sphi 0, %s77
      %s80 = sphi 0, %s79
      %s94 = sphi 0, %s80
      %s98 = sphi 0, %s98
      %s100 = sphi 0, %s98
      %s101 = sphi 0, %s100
      %s115 = sphi 0, %s101
      %s119 = sphi 0, %s119
      %s121 = sphi 0, %s119
      %s122 = sphi 0, %s121
      %s136 = sphi 0, %s122
      %s140 = sphi 0, %s140
      %s142 = sphi 0, %s140
      %s143 = sphi 0, %s142
      %s157 = sphi 0, %s143
      %s161 = sphi 0, %s161
      %s163 = sphi 0, %s161
      %s164 = sphi 0, %s163
      %s178 = sphi 0, %s164
      %s182 = sphi 0, %s182
      %s184 = sphi 0, %s182
      %s185 = sphi 0, %s184
      %s199 = sphi 0, %s185
      %s203 = sphi 0, %s203
      %s205 = sphi 0, %s203
      %s206 = sphi 0, %s205
      %s220 = sphi 0, %s206
      %s224 = sphi 0, %s224
      %s226 = sphi 0, %s224
      %s227 = sphi 0, %s226
      %s241 = sphi 0, %s227
      %s245 = sphi 0, %s245
      %s247 = sphi 0, %s245
      %s248 = sphi 0, %s247
      %s262 = sphi 0, %s248
      %s268 = sphi 0, %s270
      %s271 = sphi 0, %s268
      %s272 = sphi 0, %s271
      %s288 = sphi 0, %s272
    $region4: #{tpu_custom_call.1} parent=1 // loop_header_branch
      %25 = sbr.rel (%p23) target = $region8
    $region5: #{tpu_custom_call.1} parent=1 // loop_body
      %s27 = ssub.s32 %s22, 1
      %s28 = ssub.s32 %s22, 2
      %s29 = sadd.s32 %s22, 1
      %s30 = ssub.s32 %s22, %s29
      %p31 = scmp.eq.s32.totalorder %s30, 0
      %s33 = sadd.s32 %s32, 1
      %s34 = scalar_select %p31, %s32, %s33
      %p37 = pneg %p31
      %p38 = scmp.eq.s32.totalorder %s22, 1
      %p39 = por %p37, %p38
      %p40 = scmp.ne.s32.totalorder %s32, %s35
      %p41 = scmp.eq.s32.totalorder %s22, 0
      %p42 = por %p40, %p41
      %p43 = scmp.ne.s32.totalorder %s32, %s35
      %p44 = scmp.eq.s32.totalorder %s27, 1
      %p45 = por %p43, %p44
      %p46 = scmp.ne.s32.totalorder %s35, %s36
      %p47 = scmp.eq.s32.totalorder %s27, 0
      %p48 = por %p46, %p47
      %p49 = scmp.ne.s32.totalorder %s35, %s36
      %p50 = scmp.eq.s32.totalorder %s28, 1
      %p51 = por %p49, %p50
      %p53 = scmp.ne.s32.totalorder %s36, %s52
      %p54 = scmp.eq.s32.totalorder %s28, 0
      %p55 = por %p53, %p54
      %s57 = sadd.s32 %s56, 1
      %p60 = scmp.eq.s32.totalorder %s22, 1
      %p61 = scmp.ne.s32.totalorder %s56, %s58
      %p62 = scmp.eq.s32.totalorder %s22, 0
      %p63 = por %p61, %p62
      %p64 = scmp.ne.s32.totalorder %s56, %s58
      %p65 = scmp.eq.s32.totalorder %s27, 1
      %p66 = por %p64, %p65
      %p67 = scmp.ne.s32.totalorder %s58, %s59
      %p68 = scmp.eq.s32.totalorder %s27, 0
      %p69 = por %p67, %p68
      %p70 = scmp.ne.s32.totalorder %s58, %s59
      %p71 = scmp.eq.s32.totalorder %s28, 1
      %p72 = por %p70, %p71
      %p74 = scmp.ne.s32.totalorder %s59, %s73
      %p75 = scmp.eq.s32.totalorder %s28, 0
      %p76 = por %p74, %p75
      %s78 = sadd.s32 %s77, 1
      %p81 = scmp.eq.s32.totalorder %s22, 1
      %p82 = scmp.ne.s32.totalorder %s77, %s79
      %p83 = scmp.eq.s32.totalorder %s22, 0
      %p84 = por %p82, %p83
      %p85 = scmp.ne.s32.totalorder %s77, %s79
      %p86 = scmp.eq.s32.totalorder %s27, 1
      %p87 = por %p85, %p86
      %p88 = scmp.ne.s32.totalorder %s79, %s80
      %p89 = scmp.eq.s32.totalorder %s27, 0
      %p90 = por %p88, %p89
      %p91 = scmp.ne.s32.totalorder %s79, %s80
      %p92 = scmp.eq.s32.totalorder %s28, 1
      %p93 = por %p91, %p92
      %p95 = scmp.ne.s32.totalorder %s80, %s94
      %p96 = scmp.eq.s32.totalorder %s28, 0
      %p97 = por %p95, %p96
      %s99 = sadd.s32 %s98, 1
      %p102 = scmp.eq.s32.totalorder %s22, 1
      %p103 = scmp.ne.s32.totalorder %s98, %s100
      %p104 = scmp.eq.s32.totalorder %s22, 0
      %p105 = por %p103, %p104
      %p106 = scmp.ne.s32.totalorder %s98, %s100
      %p107 = scmp.eq.s32.totalorder %s27, 1
      %p108 = por %p106, %p107
      %p109 = scmp.ne.s32.totalorder %s100, %s101
      %p110 = scmp.eq.s32.totalorder %s27, 0
      %p111 = por %p109, %p110
      %p112 = scmp.ne.s32.totalorder %s100, %s101
      %p113 = scmp.eq.s32.totalorder %s28, 1
      %p114 = por %p112, %p113
      %p116 = scmp.ne.s32.totalorder %s101, %s115
      %p117 = scmp.eq.s32.totalorder %s28, 0
      %p118 = por %p116, %p117
      %s120 = sadd.s32 %s119, 1
      %p123 = scmp.eq.s32.totalorder %s22, 1
      %p124 = scmp.ne.s32.totalorder %s119, %s121
      %p125 = scmp.eq.s32.totalorder %s22, 0
      %p126 = por %p124, %p125
      %p127 = scmp.ne.s32.totalorder %s119, %s121
      %p128 = scmp.eq.s32.totalorder %s27, 1
      %p129 = por %p127, %p128
      %p130 = scmp.ne.s32.totalorder %s121, %s122
      %p131 = scmp.eq.s32.totalorder %s27, 0
      %p132 = por %p130, %p131
      %p133 = scmp.ne.s32.totalorder %s121, %s122
      %p134 = scmp.eq.s32.totalorder %s28, 1
      %p135 = por %p133, %p134
      %p137 = scmp.ne.s32.totalorder %s122, %s136
      %p138 = scmp.eq.s32.totalorder %s28, 0
      %p139 = por %p137, %p138
      %s141 = sadd.s32 %s140, 1
      %p144 = scmp.eq.s32.totalorder %s22, 1
      %p145 = scmp.ne.s32.totalorder %s140, %s142
      %p146 = scmp.eq.s32.totalorder %s22, 0
      %p147 = por %p145, %p146
      %p148 = scmp.ne.s32.totalorder %s140, %s142
      %p149 = scmp.eq.s32.totalorder %s27, 1
      %p150 = por %p148, %p149
      %p151 = scmp.ne.s32.totalorder %s142, %s143
      %p152 = scmp.eq.s32.totalorder %s27, 0
      %p153 = por %p151, %p152
      %p154 = scmp.ne.s32.totalorder %s142, %s143
      %p155 = scmp.eq.s32.totalorder %s28, 1
      %p156 = por %p154, %p155
      %p158 = scmp.ne.s32.totalorder %s143, %s157
      %p159 = scmp.eq.s32.totalorder %s28, 0
      %p160 = por %p158, %p159
      %s162 = sadd.s32 %s161, 1
      %p165 = scmp.eq.s32.totalorder %s22, 1
      %p166 = scmp.ne.s32.totalorder %s161, %s163
      %p167 = scmp.eq.s32.totalorder %s22, 0
      %p168 = por %p166, %p167
      %p169 = scmp.ne.s32.totalorder %s161, %s163
      %p170 = scmp.eq.s32.totalorder %s27, 1
      %p171 = por %p169, %p170
      %p172 = scmp.ne.s32.totalorder %s163, %s164
      %p173 = scmp.eq.s32.totalorder %s27, 0
      %p174 = por %p172, %p173
      %p175 = scmp.ne.s32.totalorder %s163, %s164
      %p176 = scmp.eq.s32.totalorder %s28, 1
      %p177 = por %p175, %p176
      %p179 = scmp.ne.s32.totalorder %s164, %s178
      %p180 = scmp.eq.s32.totalorder %s28, 0
      %p181 = por %p179, %p180
      %s183 = sadd.s32 %s182, 1
      %p186 = scmp.eq.s32.totalorder %s22, 1
      %p187 = scmp.ne.s32.totalorder %s182, %s184
      %p188 = scmp.eq.s32.totalorder %s22, 0
      %p189 = por %p187, %p188
      %p190 = scmp.ne.s32.totalorder %s182, %s184
      %p191 = scmp.eq.s32.totalorder %s27, 1
      %p192 = por %p190, %p191
      %p193 = scmp.ne.s32.totalorder %s184, %s185
      %p194 = scmp.eq.s32.totalorder %s27, 0
      %p195 = por %p193, %p194
      %p196 = scmp.ne.s32.totalorder %s184, %s185
      %p197 = scmp.eq.s32.totalorder %s28, 1
      %p198 = por %p196, %p197
      %p200 = scmp.ne.s32.totalorder %s185, %s199
      %p201 = scmp.eq.s32.totalorder %s28, 0
      %p202 = por %p200, %p201
      %s204 = sadd.s32 %s203, 1
      %p207 = scmp.eq.s32.totalorder %s22, 1
      %p208 = scmp.ne.s32.totalorder %s203, %s205
      %p209 = scmp.eq.s32.totalorder %s22, 0
      %p210 = por %p208, %p209
      %p211 = scmp.ne.s32.totalorder %s203, %s205
      %p212 = scmp.eq.s32.totalorder %s27, 1
      %p213 = por %p211, %p212
      %p214 = scmp.ne.s32.totalorder %s205, %s206
      %p215 = scmp.eq.s32.totalorder %s27, 0
      %p216 = por %p214, %p215
      %p217 = scmp.ne.s32.totalorder %s205, %s206
      %p218 = scmp.eq.s32.totalorder %s28, 1
      %p219 = por %p217, %p218
      %p221 = scmp.ne.s32.totalorder %s206, %s220
      %p222 = scmp.eq.s32.totalorder %s28, 0
      %p223 = por %p221, %p222
      %s225 = sadd.s32 %s224, 1
      %p228 = scmp.eq.s32.totalorder %s22, 1
      %p229 = scmp.ne.s32.totalorder %s224, %s226
      %p230 = scmp.eq.s32.totalorder %s22, 0
      %p231 = por %p229, %p230
      %p232 = scmp.ne.s32.totalorder %s224, %s226
      %p233 = scmp.eq.s32.totalorder %s27, 1
      %p234 = por %p232, %p233
      %p235 = scmp.ne.s32.totalorder %s226, %s227
      %p236 = scmp.eq.s32.totalorder %s27, 0
      %p237 = por %p235, %p236
      %p238 = scmp.ne.s32.totalorder %s226, %s227
      %p239 = scmp.eq.s32.totalorder %s28, 1
      %p240 = por %p238, %p239
      %p242 = scmp.ne.s32.totalorder %s227, %s241
      %p243 = scmp.eq.s32.totalorder %s28, 0
      %p244 = por %p242, %p243
      %s246 = sadd.s32 %s245, 1
      %p249 = scmp.eq.s32.totalorder %s22, 1
      %p250 = scmp.ne.s32.totalorder %s245, %s247
      %p251 = scmp.eq.s32.totalorder %s22, 0
      %p252 = por %p250, %p251
      %p253 = scmp.ne.s32.totalorder %s245, %s247
      %p254 = scmp.eq.s32.totalorder %s27, 1
      %p255 = por %p253, %p254
      %p256 = scmp.ne.s32.totalorder %s247, %s248
      %p257 = scmp.eq.s32.totalorder %s27, 0
      %p258 = por %p256, %p257
      %p259 = scmp.ne.s32.totalorder %s247, %s248
      %p260 = scmp.eq.s32.totalorder %s28, 1
      %p261 = por %p259, %p260
      %p263 = scmp.ne.s32.totalorder %s248, %s262
      %p264 = scmp.eq.s32.totalorder %s28, 0
      %p265 = por %p263, %p264
      %s266 = ssub.s32 %s22, %s29
      %p267 = scmp.eq.s32.totalorder %s266, 0
      %s269 = sadd.s32 %s268, 1
      %s270 = scalar_select %p267, %s268, %s269
      %p273 = pneg %p267
      %p274 = scmp.eq.s32.totalorder %s22, 1
      %p275 = por %p273, %p274
      %p276 = scmp.ne.s32.totalorder %s268, %s271
      %p277 = scmp.eq.s32.totalorder %s22, 0
      %p278 = por %p276, %p277
      %p279 = scmp.ne.s32.totalorder %s268, %s271
      %p280 = scmp.eq.s32.totalorder %s27, 1
      %p281 = por %p279, %p280
      %p282 = scmp.ne.s32.totalorder %s271, %s272
      %p283 = scmp.eq.s32.totalorder %s27, 0
      %p284 = por %p282, %p283
      %p285 = scmp.ne.s32.totalorder %s271, %s272
      %p286 = scmp.eq.s32.totalorder %s28, 1
      %p287 = por %p285, %p286
      %p289 = scmp.ne.s32.totalorder %s272, %s288
      %p290 = scmp.eq.s32.totalorder %s28, 0
      %p291 = por %p289, %p290
      %p292 = scmp.le.s32.totalorder 1, %s22
      %p293 = scmp.lt.s32.totalorder %s22, 3
      %p294 = pnand %p292, %p293
      %p295 = pneg %p294
      // Predicated region
      $region9: #{tpu_custom_call.1} parent=5 // pred_check
        _
      $region10: #{tpu_custom_call.1} parent=5 // pred_check_branch
        %297 = sbr.rel (%p294) target = $region12
      $region11: #{tpu_custom_call.1} parent=5 // pred_region
        %s298 = ssub.s32 %s22, 1
        // Predicated region
        $region13: #{tpu_custom_call.1} parent=11 // pred_check
          %p299 = pneg %p69
        $region14: #{tpu_custom_call.1} parent=11 // pred_check_branch
          %301 = sbr.rel (%p299) target = $region16
        $region15: #{tpu_custom_call.1} parent=11 // pred_region
          _
        $region16: #{tpu_custom_call.1} parent=11 // pred_fallthru
          _
        // Predicated region
        $region17: #{tpu_custom_call.1} parent=11 // pred_check
          %p302 = pneg %p90
        $region18: #{tpu_custom_call.1} parent=11 // pred_check_branch
          %304 = sbr.rel (%p302) target = $region20
        $region19: #{tpu_custom_call.1} parent=11 // pred_region
          %306 = vsyncadd [#allocation3], 0
          %s308 = sshll.u32 %s2, 4
          %s309 = int_to_ptr.hbm [resolvable:$true] %s308
          %s310 = sshll.u32 [#allocation2], 4
          %s311 = int_to_ptr.vmem [resolvable:$true] %s310
          %313 = dma.hbm_to_vmem [thread:$0]  %s309, 64, %s311, [#allocation3]
        $region20: #{tpu_custom_call.1} parent=11 // pred_fallthru
          _
        // Predicated region
        $region21: #{tpu_custom_call.1} parent=11 // pred_check
          %p314 = pneg %p111
        $region22: #{tpu_custom_call.1} parent=11 // pred_check_branch
          %316 = sbr.rel (%p314) target = $region24
        $region23: #{tpu_custom_call.1} parent=11 // pred_region
          _
        $region24: #{tpu_custom_call.1} parent=11 // pred_fallthru
          _
        // Predicated region
        $region25: #{tpu_custom_call.1} parent=11 // pred_check
          %p317 = pneg %p132
        $region26: #{tpu_custom_call.1} parent=11 // pred_check_branch
          %319 = sbr.rel (%p317) target = $region28
        $region27: #{tpu_custom_call.1} parent=11 // pred_region
          _
        $region28: #{tpu_custom_call.1} parent=11 // pred_fallthru
          _
        // Predicated region
        $region29: #{tpu_custom_call.1} parent=11 // pred_check
          %p320 = pneg %p153
        $region30: #{tpu_custom_call.1} parent=11 // pred_check_branch
          %322 = sbr.rel (%p320) target = $region32
        $region31: #{tpu_custom_call.1} parent=11 // pred_region
          _
        $region32: #{tpu_custom_call.1} parent=11 // pred_fallthru
          _
        // Predicated region
        $region33: #{tpu_custom_call.1} parent=11 // pred_check
          %p323 = pneg %p174
        $region34: #{tpu_custom_call.1} parent=11 // pred_check_branch
          %325 = sbr.rel (%p323) target = $region36
        $region35: #{tpu_custom_call.1} parent=11 // pred_region
          %327 = vsyncadd [#allocation6], 0
          %s329 = sshll.u32 %s6, 4
          %s330 = int_to_ptr.hbm [resolvable:$true] %s329
          %s331 = sshll.u32 [#allocation5], 4
          %s332 = int_to_ptr.vmem [resolvable:$true] %s331
          %334 = dma.hbm_to_vmem [thread:$0]  %s330, 16, %s332, [#allocation6]
        $region36: #{tpu_custom_call.1} parent=11 // pred_fallthru
          _
        // Predicated region
        $region37: #{tpu_custom_call.1} parent=11 // pred_check
          %p335 = pneg %p195
        $region38: #{tpu_custom_call.1} parent=11 // pred_check_branch
          %337 = sbr.rel (%p335) target = $region40
        $region39: #{tpu_custom_call.1} parent=11 // pred_region
          _
        $region40: #{tpu_custom_call.1} parent=11 // pred_fallthru
          _
        // Predicated region
        $region41: #{tpu_custom_call.1} parent=11 // pred_check
          %p338 = pneg %p216
        $region42: #{tpu_custom_call.1} parent=11 // pred_check_branch
          %340 = sbr.rel (%p338) target = $region44
        $region43: #{tpu_custom_call.1} parent=11 // pred_region
          _
        $region44: #{tpu_custom_call.1} parent=11 // pred_fallthru
          _
        // Predicated region
        $region45: #{tpu_custom_call.1} parent=11 // pred_check
          %p341 = pneg %p237
        $region46: #{tpu_custom_call.1} parent=11 // pred_check_branch
          %343 = sbr.rel (%p341) target = $region48
        $region47: #{tpu_custom_call.1} parent=11 // pred_region
          _
        $region48: #{tpu_custom_call.1} parent=11 // pred_fallthru
          _
        // Predicated region
        $region49: #{tpu_custom_call.1} parent=11 // pred_check
          %p344 = pneg %p258
        $region50: #{tpu_custom_call.1} parent=11 // pred_check_branch
          %346 = sbr.rel (%p344) target = $region52
        $region51: #{tpu_custom_call.1} parent=11 // pred_region
          _
        $region52: #{tpu_custom_call.1} parent=11 // pred_fallthru
          _
      $region12: #{tpu_custom_call.1} parent=5 // pred_fallthru
        _
      %p347 = scmp.lt.s32.totalorder %s22, 2
      // Predicated region
      $region53: #{tpu_custom_call.1} parent=5 // pred_check
        %p348 = pneg %p347
      $region54: #{tpu_custom_call.1} parent=5 // pred_check_branch
        %350 = sbr.rel (%p348) target = $region56
      $region55: #{tpu_custom_call.1} parent=5 // pred_region
        // Predicated region
        $region57: #{tpu_custom_call.1} parent=55 // pred_check
          %p351 = pneg %p42
        $region58: #{tpu_custom_call.1} parent=55 // pred_check_branch
          %353 = sbr.rel (%p351) target = $region60
        $region59: #{tpu_custom_call.1} parent=55 // pred_region
          %s354 = smul.u32 32, %s22
          %p355 = scmp.lt.s32.totalorder %s354, 63
          %s356 = scalar_select %p355, %s354, 63
          %s357 = smul.addr %s356, 8
          %s358 = scalar_lea.vmem %s0, %s357
          %s359 = smul.u32 32, %s22
        $region60: #{tpu_custom_call.1} parent=55 // pred_fallthru
          _
      $region56: #{tpu_custom_call.1} parent=5 // pred_fallthru
        _
      %p360 = scmp.le.s32.totalorder 1, %s22
      %p361 = scmp.lt.s32.totalorder %s22, 3
      %p362 = pnand %p360, %p361
      %p363 = pneg %p362
      // Predicated region
      $region61: #{tpu_custom_call.1} parent=5 // pred_check
        _
      $region62: #{tpu_custom_call.1} parent=5 // pred_check_branch
        %365 = sbr.rel (%p362) target = $region64
      $region63: #{tpu_custom_call.1} parent=5 // pred_region
        %s366 = ssub.s32 %s22, 1
        // Predicated region
        $region65: #{tpu_custom_call.1} parent=63 // pred_check
          %p367 = pneg %p90
        $region66: #{tpu_custom_call.1} parent=63 // pred_check_branch
          %369 = sbr.rel (%p367) target = $region68
        $region67: #{tpu_custom_call.1} parent=63 // pred_region
          %371 = dma.done [#allocation3], 64
        $region68: #{tpu_custom_call.1} parent=63 // pred_fallthru
          _
        // Predicated region
        $region69: #{tpu_custom_call.1} parent=63 // pred_check
          %p372 = pneg %p174
        $region70: #{tpu_custom_call.1} parent=63 // pred_check_branch
          %374 = sbr.rel (%p372) target = $region72
        $region71: #{tpu_custom_call.1} parent=63 // pred_region
          %376 = dma.done [#allocation6], 16
        $region72: #{tpu_custom_call.1} parent=63 // pred_fallthru
          _
        %s377 = smul.u32 32, %s27
        %p378 = scmp.lt.s32.totalorder %s377, 63
        %s379 = scalar_select %p378, %s377, 63
        %s380 = smul.addr %s379, 8
        %s381 = scalar_lea.vmem %s0, %s380
        %p382 = pneg %p48
        %p383 = pneg %p45
        %p384 = pneg %p69
        %p385 = pneg %p66
        %p386 = pneg %p90
        %p387 = pneg %p87
        %p388 = pneg %p111
        %p389 = pneg %p108
        %p390 = pneg %p132
        %p391 = pneg %p129
        %p392 = pneg %p153
        %p393 = pneg %p150
        %p394 = pneg %p174
        %p395 = pneg %p171
        %p396 = pneg %p195
        %p397 = pneg %p192
        %p398 = pneg %p216
        %p399 = pneg %p213
        %p400 = pneg %p237
        %p401 = pneg %p234
        %p402 = pneg %p258
        %p403 = pneg %p255
        %p404 = pneg %p284
        %p405 = pneg %p281
        %s406 = sand.u32 %s271, 1
        %s407 = scalar_lea.sflag [#allocation4], %s406
        %s408 = sand.u32 %s271, 1
        %s409 = smul.addr %s408, 256
        %s410 = scalar_lea.vmem [#allocation7], %s409
        %s411 = smul.u32 32, %s27
        %p412 = scmp.lt.s32.totalorder %s411, 63
        %s413 = scalar_select %p412, %s411, 63
        %s414 = smul.addr %s413, 8
        %s415 = scalar_lea.vmem %s0, %s414
        %s416 = smul.u32 32, %s27
        %s417 = smul.u32 32, %s27
        %v419 = vld [vmem:[%s415] sm:$0xff]
        %v420 = vld [vmem:[%s415 + $0x8] sm:$0xff]
        %v421 = vld [vmem:[%s415 + $0x10] sm:$0xff]
        %v422 = vld [vmem:[%s415 + $0x18] sm:$0xff]
        %v423 = vld [vmem:[%s415 + $0x20] sm:$0xff]
        %v424 = vld [vmem:[%s415 + $0x28] sm:$0xff]
        %v425 = vld [vmem:[%s415 + $0x30] sm:$0xff]
        %v426 = vld [vmem:[%s415 + $0x38] sm:$0xff]
        %v427 = vld [vmem:[%s415 + $0x40] sm:$0xff]
        %v428 = vld [vmem:[%s415 + $0x48] sm:$0xff]
        %v429 = vld [vmem:[%s415 + $0x50] sm:$0xff]
        %v430 = vld [vmem:[%s415 + $0x58] sm:$0xff]
        %v431 = vld [vmem:[%s415 + $0x60] sm:$0xff]
        %v432 = vld [vmem:[%s415 + $0x68] sm:$0xff]
        %v433 = vld [vmem:[%s415 + $0x70] sm:$0xff]
        %v434 = vld [vmem:[%s415 + $0x78] sm:$0xff]
        %v435 = vpack.c.bf16 %v420, %v419
        %v436 = vpack.c.bf16 %v422, %v421
        %v437 = vpack.c.bf16 %v424, %v423
        %v438 = vpack.c.bf16 %v426, %v425
        %v439 = vpack.c.bf16 %v428, %v427
        %v440 = vpack.c.bf16 %v430, %v429
        %v441 = vpack.c.bf16 %v432, %v431
        %v442 = vpack.c.bf16 %v434, %v433
        %v443 = vld [vmem:[%s1] sm:$0xff]
        %v444 = vld [vmem:[%s1 + $0x8] sm:$0xff]
        %v445 = vld [vmem:[%s1 + $0x10] sm:$0xff]
        %v446 = vld [vmem:[%s1 + $0x18] sm:$0xff]
        %v447 = vld [vmem:[%s1 + $0x20] sm:$0xff]
        %v448 = vld [vmem:[%s1 + $0x28] sm:$0xff]
        %v449 = vld [vmem:[%s1 + $0x30] sm:$0xff]
        %v450 = vld [vmem:[%s1 + $0x38] sm:$0xff]
        %v451 = vld [vmem:[#allocation2] sm:$0xf]
        %v453 = vperm.slane %v451, 0
        %v454 = vperm.slane %v451, 1
        %v455 = vperm.slane %v451, 2
        %v456 = vperm.slane %v451, 3
        %v469 = vunpack.c.l.b16 %v443
        %v470 = vunpack.c.h.b16 %v443
        %v471 = vunpack.c.l.b16 %v444
        %v472 = vunpack.c.h.b16 %v444
        %v473 = vunpack.c.l.b16 %v445
        %v474 = vunpack.c.h.b16 %v445
        %v475 = vunpack.c.l.b16 %v446
        %v476 = vunpack.c.h.b16 %v446
        %v477 = vunpack.c.l.b16 %v447
        %v478 = vunpack.c.h.b16 %v447
        %v479 = vunpack.c.l.b16 %v448
        %v480 = vunpack.c.h.b16 %v448
        %v481 = vunpack.c.l.b16 %v449
        %v482 = vunpack.c.h.b16 %v449
        %v483 = vunpack.c.l.b16 %v450
        %v484 = vunpack.c.h.b16 %v450
        %v485 = vpack.c.b16 %v473, %v469
        %v486 = vpack.c.b16 %v474, %v470
        %v487 = vpack.c.b16 %v475, %v471
        %v488 = vpack.c.b16 %v476, %v472
        %v489 = vpack.c.b16 %v481, %v477
        %v490 = vpack.c.b16 %v482, %v478
        %v491 = vpack.c.b16 %v483, %v479
        %v492 = vpack.c.b16 %v484, %v480
        %vm501 = vcmask 261120
        %v503 = vsel %vm501, %v435, 0
        %v506 = vsel %vm501, %v436, 0
        %v509 = vsel %vm501, %v437, 0
        %v512 = vsel %vm501, %v438, 0
        %v515 = vsel %vm501, %v439, 0
        %v518 = vsel %vm501, %v440, 0
        %v521 = vsel %vm501, %v441, 0
        %v524 = vsel %vm501, %v442, 0
        %526 = vmatpush.bf16.msra.mxu0 0
        %527 = vmatpush.bf16.msra.mxu0 0
        %528 = vmatpush.bf16.msra.mxu0 0
        %529 = vmatpush.bf16.msra.mxu0 0
        %530 = vmatpush.bf16.msra.mxu0 0
        %531 = vmatpush.bf16.msra.mxu0 0
        %532 = vmatpush.bf16.msra.mxu0 %v489
        %533 = vmatpush.bf16.msra.mxu0 %v485
        %534 = vmatmul.bf16.gmra.mxu0 %v503
        %v535 = vpop.f32.mrf.mxu0
        %v536 = vadd.f32 %v453, %v535
        %v537 = vpop.f32.mrf.mxu0
        %v538 = vadd.f32 %v453, %v537
        %539 = vmatmul.bf16.gmra.mxu0 %v506
        %v540 = vpop.f32.mrf.mxu0
        %v541 = vadd.f32 %v453, %v540
        %v542 = vpop.f32.mrf.mxu0
        %v543 = vadd.f32 %v453, %v542
        %544 = vmatmul.bf16.gmra.mxu0 %v509
        %v545 = vpop.f32.mrf.mxu0
        %v546 = vadd.f32 %v453, %v545
        %v547 = vpop.f32.mrf.mxu0
        %v548 = vadd.f32 %v453, %v547
        %549 = vmatmul.bf16.gmra.mxu0 %v512
        %v550 = vpop.f32.mrf.mxu0
        %v551 = vadd.f32 %v453, %v550
        %v552 = vpop.f32.mrf.mxu0
        %v553 = vadd.f32 %v453, %v552
        %554 = vmatmul.bf16.gmra.mxu0 %v515
        %v555 = vpop.f32.mrf.mxu0
        %v556 = vadd.f32 %v453, %v555
        %v557 = vpop.f32.mrf.mxu0
        %v558 = vadd.f32 %v453, %v557
        %559 = vmatmul.bf16.gmra.mxu0 %v518
        %v560 = vpop.f32.mrf.mxu0
        %v561 = vadd.f32 %v453, %v560
        %v562 = vpop.f32.mrf.mxu0
        %v563 = vadd.f32 %v453, %v562
        %564 = vmatmul.bf16.gmra.mxu0 %v521
        %v565 = vpop.f32.mrf.mxu0
        %v566 = vadd.f32 %v453, %v565
        %v567 = vpop.f32.mrf.mxu0
        %v568 = vadd.f32 %v453, %v567
        %569 = vmatmul.bf16.gmra.mxu0 %v524
        %v570 = vpop.f32.mrf.mxu0
        %v571 = vadd.f32 %v453, %v570
        %v572 = vpop.f32.mrf.mxu0
        %v573 = vadd.f32 %v453, %v572
        %574 = vdwg.mxu0
        %575 = vmatpush.bf16.msra.mxu0 0
        %576 = vmatpush.bf16.msra.mxu0 0
        %577 = vmatpush.bf16.msra.mxu0 0
        %578 = vmatpush.bf16.msra.mxu0 0
        %579 = vmatpush.bf16.msra.mxu0 0
        %580 = vmatpush.bf16.msra.mxu0 0
        %581 = vmatpush.bf16.msra.mxu0 %v490
        %582 = vmatpush.bf16.msra.mxu0 %v486
        %583 = vmatmul.bf16.gmra.mxu0 %v503
        %v584 = vpop.f32.mrf.mxu0
        %v585 = vadd.f32 %v454, %v584
        %v586 = vpop.f32.mrf.mxu0
        %v587 = vadd.f32 %v454, %v586
        %588 = vmatmul.bf16.gmra.mxu0 %v506
        %v589 = vpop.f32.mrf.mxu0
        %v590 = vadd.f32 %v454, %v589
        %v591 = vpop.f32.mrf.mxu0
        %v592 = vadd.f32 %v454, %v591
        %593 = vmatmul.bf16.gmra.mxu0 %v509
        %v594 = vpop.f32.mrf.mxu0
        %v595 = vadd.f32 %v454, %v594
        %v596 = vpop.f32.mrf.mxu0
        %v597 = vadd.f32 %v454, %v596
        %598 = vmatmul.bf16.gmra.mxu0 %v512
        %v599 = vpop.f32.mrf.mxu0
        %v600 = vadd.f32 %v454, %v599
        %v601 = vpop.f32.mrf.mxu0
        %v602 = vadd.f32 %v454, %v601
        %603 = vmatmul.bf16.gmra.mxu0 %v515
        %v604 = vpop.f32.mrf.mxu0
        %v605 = vadd.f32 %v454, %v604
        %v606 = vpop.f32.mrf.mxu0
        %v607 = vadd.f32 %v454, %v606
        %608 = vmatmul.bf16.gmra.mxu0 %v518
        %v609 = vpop.f32.mrf.mxu0
        %v610 = vadd.f32 %v454, %v609
        %v611 = vpop.f32.mrf.mxu0
        %v612 = vadd.f32 %v454, %v611
        %613 = vmatmul.bf16.gmra.mxu0 %v521
        %v614 = vpop.f32.mrf.mxu0
        %v615 = vadd.f32 %v454, %v614
        %v616 = vpop.f32.mrf.mxu0
        %v617 = vadd.f32 %v454, %v616
        %618 = vmatmul.bf16.gmra.mxu0 %v524
        %v619 = vpop.f32.mrf.mxu0
        %v620 = vadd.f32 %v454, %v619
        %v621 = vpop.f32.mrf.mxu0
        %v622 = vadd.f32 %v454, %v621
        %623 = vdwg.mxu0
        %624 = vmatpush.bf16.msra.mxu0 0
        %625 = vmatpush.bf16.msra.mxu0 0
        %626 = vmatpush.bf16.msra.mxu0 0
        %627 = vmatpush.bf16.msra.mxu0 0
        %628 = vmatpush.bf16.msra.mxu0 0
        %629 = vmatpush.bf16.msra.mxu0 0
        %630 = vmatpush.bf16.msra.mxu0 %v491
        %631 = vmatpush.bf16.msra.mxu0 %v487
        %632 = vmatmul.bf16.gmra.mxu0 %v503
        %v633 = vpop.f32.mrf.mxu0
        %v634 = vadd.f32 %v455, %v633
        %v635 = vpop.f32.mrf.mxu0
        %v636 = vadd.f32 %v455, %v635
        %637 = vmatmul.bf16.gmra.mxu0 %v506
        %v638 = vpop.f32.mrf.mxu0
        %v639 = vadd.f32 %v455, %v638
        %v640 = vpop.f32.mrf.mxu0
        %v641 = vadd.f32 %v455, %v640
        %642 = vmatmul.bf16.gmra.mxu0 %v509
        %v643 = vpop.f32.mrf.mxu0
        %v644 = vadd.f32 %v455, %v643
        %v645 = vpop.f32.mrf.mxu0
        %v646 = vadd.f32 %v455, %v645
        %647 = vmatmul.bf16.gmra.mxu0 %v512
        %v648 = vpop.f32.mrf.mxu0
        %v649 = vadd.f32 %v455, %v648
        %v650 = vpop.f32.mrf.mxu0
        %v651 = vadd.f32 %v455, %v650
        %652 = vmatmul.bf16.gmra.mxu0 %v515
        %v653 = vpop.f32.mrf.mxu0
        %v654 = vadd.f32 %v455, %v653
        %v655 = vpop.f32.mrf.mxu0
        %v656 = vadd.f32 %v455, %v655
        %657 = vmatmul.bf16.gmra.mxu0 %v518
        %v658 = vpop.f32.mrf.mxu0
        %v659 = vadd.f32 %v455, %v658
        %v660 = vpop.f32.mrf.mxu0
        %v661 = vadd.f32 %v455, %v660
        %662 = vmatmul.bf16.gmra.mxu0 %v521
        %v663 = vpop.f32.mrf.mxu0
        %v664 = vadd.f32 %v455, %v663
        %v665 = vpop.f32.mrf.mxu0
        %v666 = vadd.f32 %v455, %v665
        %667 = vmatmul.bf16.gmra.mxu0 %v524
        %v668 = vpop.f32.mrf.mxu0
        %v669 = vadd.f32 %v455, %v668
        %v670 = vpop.f32.mrf.mxu0
        %v671 = vadd.f32 %v455, %v670
        %672 = vdwg.mxu0
        %673 = vmatpush.bf16.msra.mxu0 0
        %674 = vmatpush.bf16.msra.mxu0 0
        %675 = vmatpush.bf16.msra.mxu0 0
        %676 = vmatpush.bf16.msra.mxu0 0
        %677 = vmatpush.bf16.msra.mxu0 0
        %678 = vmatpush.bf16.msra.mxu0 0
        %679 = vmatpush.bf16.msra.mxu0 %v492
        %680 = vmatpush.bf16.msra.mxu0 %v488
        %681 = vmatmul.bf16.gmra.mxu0 %v503
        %v682 = vpop.f32.mrf.mxu0
        %v683 = vadd.f32 %v456, %v682
        %v684 = vpop.f32.mrf.mxu0
        %v685 = vadd.f32 %v456, %v684
        %686 = vmatmul.bf16.gmra.mxu0 %v506
        %v687 = vpop.f32.mrf.mxu0
        %v688 = vadd.f32 %v456, %v687
        %v689 = vpop.f32.mrf.mxu0
        %v690 = vadd.f32 %v456, %v689
        %691 = vmatmul.bf16.gmra.mxu0 %v509
        %v692 = vpop.f32.mrf.mxu0
        %v693 = vadd.f32 %v456, %v692
        %v694 = vpop.f32.mrf.mxu0
        %v695 = vadd.f32 %v456, %v694
        %696 = vmatmul.bf16.gmra.mxu0 %v512
        %v697 = vpop.f32.mrf.mxu0
        %v698 = vadd.f32 %v456, %v697
        %v699 = vpop.f32.mrf.mxu0
        %v700 = vadd.f32 %v456, %v699
        %701 = vmatmul.bf16.gmra.mxu0 %v515
        %v702 = vpop.f32.mrf.mxu0
        %v703 = vadd.f32 %v456, %v702
        %v704 = vpop.f32.mrf.mxu0
        %v705 = vadd.f32 %v456, %v704
        %706 = vmatmul.bf16.gmra.mxu0 %v518
        %v707 = vpop.f32.mrf.mxu0
        %v708 = vadd.f32 %v456, %v707
        %v709 = vpop.f32.mrf.mxu0
        %v710 = vadd.f32 %v456, %v709
        %711 = vmatmul.bf16.gmra.mxu0 %v521
        %v712 = vpop.f32.mrf.mxu0
        %v713 = vadd.f32 %v456, %v712
        %v714 = vpop.f32.mrf.mxu0
        %v715 = vadd.f32 %v456, %v714
        %716 = vmatmul.bf16.gmra.mxu0 %v524
        %v717 = vpop.f32.mrf.mxu0
        %v718 = vadd.f32 %v456, %v717
        %v719 = vpop.f32.mrf.mxu0
        %v720 = vadd.f32 %v456, %v719
        %721 = vdwg.mxu0
        %v722 = vmax.f32 %v536, 0.0
        %v723 = vmax.f32 %v585, 0.0
        %v724 = vmax.f32 %v634, 0.0
        %v725 = vmax.f32 %v683, 0.0
        %v726 = vmax.f32 %v538, 0.0
        %v727 = vmax.f32 %v587, 0.0
        %v728 = vmax.f32 %v636, 0.0
        %v729 = vmax.f32 %v685, 0.0
        %v730 = vmax.f32 %v541, 0.0
        %v731 = vmax.f32 %v590, 0.0
        %v732 = vmax.f32 %v639, 0.0
        %v733 = vmax.f32 %v688, 0.0
        %v734 = vmax.f32 %v543, 0.0
        %v735 = vmax.f32 %v592, 0.0
        %v736 = vmax.f32 %v641, 0.0
        %v737 = vmax.f32 %v690, 0.0
        %v738 = vmax.f32 %v546, 0.0
        %v739 = vmax.f32 %v595, 0.0
        %v740 = vmax.f32 %v644, 0.0
        %v741 = vmax.f32 %v693, 0.0
        %v742 = vmax.f32 %v548, 0.0
        %v743 = vmax.f32 %v597, 0.0
        %v744 = vmax.f32 %v646, 0.0
        %v745 = vmax.f32 %v695, 0.0
        %v746 = vmax.f32 %v551, 0.0
        %v747 = vmax.f32 %v600, 0.0
        %v748 = vmax.f32 %v649, 0.0
        %v749 = vmax.f32 %v698, 0.0
        %v750 = vmax.f32 %v553, 0.0
        %v751 = vmax.f32 %v602, 0.0
        %v752 = vmax.f32 %v651, 0.0
        %v753 = vmax.f32 %v700, 0.0
        %v754 = vmax.f32 %v556, 0.0
        %v755 = vmax.f32 %v605, 0.0
        %v756 = vmax.f32 %v654, 0.0
        %v757 = vmax.f32 %v703, 0.0
        %v758 = vmax.f32 %v558, 0.0
        %v759 = vmax.f32 %v607, 0.0
        %v760 = vmax.f32 %v656, 0.0
        %v761 = vmax.f32 %v705, 0.0
        %v762 = vmax.f32 %v561, 0.0
        %v763 = vmax.f32 %v610, 0.0
        %v764 = vmax.f32 %v659, 0.0
        %v765 = vmax.f32 %v708, 0.0
        %v766 = vmax.f32 %v563, 0.0
        %v767 = vmax.f32 %v612, 0.0
        %v768 = vmax.f32 %v661, 0.0
        %v769 = vmax.f32 %v710, 0.0
        %v770 = vmax.f32 %v566, 0.0
        %v771 = vmax.f32 %v615, 0.0
        %v772 = vmax.f32 %v664, 0.0
        %v773 = vmax.f32 %v713, 0.0
        %v774 = vmax.f32 %v568, 0.0
        %v775 = vmax.f32 %v617, 0.0
        %v776 = vmax.f32 %v666, 0.0
        %v777 = vmax.f32 %v715, 0.0
        %v778 = vmax.f32 %v571, 0.0
        %v779 = vmax.f32 %v620, 0.0
        %v780 = vmax.f32 %v669, 0.0
        %v781 = vmax.f32 %v718, 0.0
        %v782 = vmax.f32 %v573, 0.0
        %v783 = vmax.f32 %v622, 0.0
        %v784 = vmax.f32 %v671, 0.0
        %v785 = vmax.f32 %v720, 0.0
        %v786 = vpack.c.bf16 %v726, %v722
        %v787 = vpack.c.bf16 %v727, %v723
        %v788 = vpack.c.bf16 %v728, %v724
        %v789 = vpack.c.bf16 %v729, %v725
        %v790 = vpack.c.bf16 %v734, %v730
        %v791 = vpack.c.bf16 %v735, %v731
        %v792 = vpack.c.bf16 %v736, %v732
        %v793 = vpack.c.bf16 %v737, %v733
        %v794 = vpack.c.bf16 %v742, %v738
        %v795 = vpack.c.bf16 %v743, %v739
        %v796 = vpack.c.bf16 %v744, %v740
        %v797 = vpack.c.bf16 %v745, %v741
        %v798 = vpack.c.bf16 %v750, %v746
        %v799 = vpack.c.bf16 %v751, %v747
        %v800 = vpack.c.bf16 %v752, %v748
        %v801 = vpack.c.bf16 %v753, %v749
        %v802 = vpack.c.bf16 %v758, %v754
        %v803 = vpack.c.bf16 %v759, %v755
        %v804 = vpack.c.bf16 %v760, %v756
        %v805 = vpack.c.bf16 %v761, %v757
        %v806 = vpack.c.bf16 %v766, %v762
        %v807 = vpack.c.bf16 %v767, %v763
        %v808 = vpack.c.bf16 %v768, %v764
        %v809 = vpack.c.bf16 %v769, %v765
        %v810 = vpack.c.bf16 %v774, %v770
        %v811 = vpack.c.bf16 %v775, %v771
        %v812 = vpack.c.bf16 %v776, %v772
        %v813 = vpack.c.bf16 %v777, %v773
        %v814 = vpack.c.bf16 %v782, %v778
        %v815 = vpack.c.bf16 %v783, %v779
        %v816 = vpack.c.bf16 %v784, %v780
        %v817 = vpack.c.bf16 %v785, %v781
        %v818 = vld [vmem:[%s3] sm:$0xff]
        %v819 = vld [vmem:[%s3 + $0x8] sm:$0xff]
        %v820 = vld [vmem:[%s3 + $0x10] sm:$0xff]
        %v821 = vld [vmem:[%s3 + $0x18] sm:$0xff]
        %v822 = vld [vmem:[%s3 + $0x20] sm:$0xff]
        %v823 = vld [vmem:[%s3 + $0x28] sm:$0xff]
        %v824 = vld [vmem:[%s3 + $0x30] sm:$0xff]
        %v825 = vld [vmem:[%s3 + $0x38] sm:$0xff]
        %v826 = vld [vmem:[%s3 + $0x40] sm:$0xff]
        %v827 = vld [vmem:[%s3 + $0x48] sm:$0xff]
        %v828 = vld [vmem:[%s3 + $0x50] sm:$0xff]
        %v829 = vld [vmem:[%s3 + $0x58] sm:$0xff]
        %v830 = vld [vmem:[%s3 + $0x60] sm:$0xff]
        %v831 = vld [vmem:[%s3 + $0x68] sm:$0xff]
        %v832 = vld [vmem:[%s3 + $0x70] sm:$0xff]
        %v833 = vld [vmem:[%s3 + $0x78] sm:$0xff]
        %v834 = vld [vmem:[%s3 + $0x80] sm:$0xff]
        %v835 = vld [vmem:[%s3 + $0x88] sm:$0xff]
        %v836 = vld [vmem:[%s3 + $0x90] sm:$0xff]
        %v837 = vld [vmem:[%s3 + $0x98] sm:$0xff]
        %v838 = vld [vmem:[%s3 + $0xa0] sm:$0xff]
        %v839 = vld [vmem:[%s3 + $0xa8] sm:$0xff]
        %v840 = vld [vmem:[%s3 + $0xb0] sm:$0xff]
        %v841 = vld [vmem:[%s3 + $0xb8] sm:$0xff]
        %v842 = vld [vmem:[%s3 + $0xc0] sm:$0xff]
        %v843 = vld [vmem:[%s3 + $0xc8] sm:$0xff]
        %v844 = vld [vmem:[%s3 + $0xd0] sm:$0xff]
        %v845 = vld [vmem:[%s3 + $0xd8] sm:$0xff]
        %v846 = vld [vmem:[%s3 + $0xe0] sm:$0xff]
        %v847 = vld [vmem:[%s3 + $0xe8] sm:$0xff]
        %v848 = vld [vmem:[%s3 + $0xf0] sm:$0xff]
        %v849 = vld [vmem:[%s3 + $0xf8] sm:$0xff]
        %v850 = vld [vmem:[%s3 + $0x100] sm:$0xff]
        %v851 = vld [vmem:[%s3 + $0x108] sm:$0xff]
        %v852 = vld [vmem:[%s3 + $0x110] sm:$0xff]
        %v853 = vld [vmem:[%s3 + $0x118] sm:$0xff]
        %v854 = vld [vmem:[%s3 + $0x120] sm:$0xff]
        %v855 = vld [vmem:[%s3 + $0x128] sm:$0xff]
        %v856 = vld [vmem:[%s3 + $0x130] sm:$0xff]
        %v857 = vld [vmem:[%s3 + $0x138] sm:$0xff]
        %v858 = vld [vmem:[%s3 + $0x140] sm:$0xff]
        %v859 = vld [vmem:[%s3 + $0x148] sm:$0xff]
        %v860 = vld [vmem:[%s3 + $0x150] sm:$0xff]
        %v861 = vld [vmem:[%s3 + $0x158] sm:$0xff]
        %v862 = vld [vmem:[%s3 + $0x160] sm:$0xff]
        %v863 = vld [vmem:[%s3 + $0x168] sm:$0xff]
        %v864 = vld [vmem:[%s3 + $0x170] sm:$0xff]
        %v865 = vld [vmem:[%s3 + $0x178] sm:$0xff]
        %v866 = vld [vmem:[%s3 + $0x180] sm:$0xff]
        %v867 = vld [vmem:[%s3 + $0x188] sm:$0xff]
        %v868 = vld [vmem:[%s3 + $0x190] sm:$0xff]
        %v869 = vld [vmem:[%s3 + $0x198] sm:$0xff]
        %v870 = vld [vmem:[%s3 + $0x1a0] sm:$0xff]
        %v871 = vld [vmem:[%s3 + $0x1a8] sm:$0xff]
        %v872 = vld [vmem:[%s3 + $0x1b0] sm:$0xff]
        %v873 = vld [vmem:[%s3 + $0x1b8] sm:$0xff]
        %v874 = vld [vmem:[%s3 + $0x1c0] sm:$0xff]
        %v875 = vld [vmem:[%s3 + $0x1c8] sm:$0xff]
        %v876 = vld [vmem:[%s3 + $0x1d0] sm:$0xff]
        %v877 = vld [vmem:[%s3 + $0x1d8] sm:$0xff]
        %v878 = vld [vmem:[%s3 + $0x1e0] sm:$0xff]
        %v879 = vld [vmem:[%s3 + $0x1e8] sm:$0xff]
        %v880 = vld [vmem:[%s3 + $0x1f0] sm:$0xff]
        %v881 = vld [vmem:[%s3 + $0x1f8] sm:$0xff]
        %v882 = vld [vmem:[%s4] sm:$0x3]
        %v884 = vperm.slane %v882, 0
        %v885 = vperm.slane %v882, 1
        %v952 = vunpack.c.l.b16 %v818
        %v953 = vunpack.c.h.b16 %v818
        %v954 = vunpack.c.l.b16 %v819
        %v955 = vunpack.c.h.b16 %v819
        %v956 = vunpack.c.l.b16 %v820
        %v957 = vunpack.c.h.b16 %v820
        %v958 = vunpack.c.l.b16 %v821
        %v959 = vunpack.c.h.b16 %v821
        %v960 = vunpack.c.l.b16 %v822
        %v961 = vunpack.c.h.b16 %v822
        %v962 = vunpack.c.l.b16 %v823
        %v963 = vunpack.c.h.b16 %v823
        %v964 = vunpack.c.l.b16 %v824
        %v965 = vunpack.c.h.b16 %v824
        %v966 = vunpack.c.l.b16 %v825
        %v967 = vunpack.c.h.b16 %v825
        %v968 = vunpack.c.l.b16 %v826
        %v969 = vunpack.c.h.b16 %v826
        %v970 = vunpack.c.l.b16 %v827
        %v971 = vunpack.c.h.b16 %v827
        %v972 = vunpack.c.l.b16 %v828
        %v973 = vunpack.c.h.b16 %v828
        %v974 = vunpack.c.l.b16 %v829
        %v975 = vunpack.c.h.b16 %v829
        %v976 = vunpack.c.l.b16 %v830
        %v977 = vunpack.c.h.b16 %v830
        %v978 = vunpack.c.l.b16 %v831
        %v979 = vunpack.c.h.b16 %v831
        %v980 = vunpack.c.l.b16 %v832
        %v981 = vunpack.c.h.b16 %v832
        %v982 = vunpack.c.l.b16 %v833
        %v983 = vunpack.c.h.b16 %v833
        %v984 = vunpack.c.l.b16 %v834
        %v985 = vunpack.c.h.b16 %v834
        %v986 = vunpack.c.l.b16 %v835
        %v987 = vunpack.c.h.b16 %v835
        %v988 = vunpack.c.l.b16 %v836
        %v989 = vunpack.c.h.b16 %v836
        %v990 = vunpack.c.l.b16 %v837
        %v991 = vunpack.c.h.b16 %v837
        %v992 = vunpack.c.l.b16 %v838
        %v993 = vunpack.c.h.b16 %v838
        %v994 = vunpack.c.l.b16 %v839
        %v995 = vunpack.c.h.b16 %v839
        %v996 = vunpack.c.l.b16 %v840
        %v997 = vunpack.c.h.b16 %v840
        %v998 = vunpack.c.l.b16 %v841
        %v999 = vunpack.c.h.b16 %v841
        %v1000 = vunpack.c.l.b16 %v842
        %v1001 = vunpack.c.h.b16 %v842
        %v1002 = vunpack.c.l.b16 %v843
        %v1003 = vunpack.c.h.b16 %v843
        %v1004 = vunpack.c.l.b16 %v844
        %v1005 = vunpack.c.h.b16 %v844
        %v1006 = vunpack.c.l.b16 %v845
        %v1007 = vunpack.c.h.b16 %v845
        %v1008 = vunpack.c.l.b16 %v846
        %v1009 = vunpack.c.h.b16 %v846
        %v1010 = vunpack.c.l.b16 %v847
        %v1011 = vunpack.c.h.b16 %v847
        %v1012 = vunpack.c.l.b16 %v848
        %v1013 = vunpack.c.h.b16 %v848
        %v1014 = vunpack.c.l.b16 %v849
        %v1015 = vunpack.c.h.b16 %v849
        %v1016 = vunpack.c.l.b16 %v850
        %v1017 = vunpack.c.h.b16 %v850
        %v1018 = vunpack.c.l.b16 %v851
        %v1019 = vunpack.c.h.b16 %v851
        %v1020 = vunpack.c.l.b16 %v852
        %v1021 = vunpack.c.h.b16 %v852
        %v1022 = vunpack.c.l.b16 %v853
        %v1023 = vunpack.c.h.b16 %v853
        %v1024 = vunpack.c.l.b16 %v854
        %v1025 = vunpack.c.h.b16 %v854
        %v1026 = vunpack.c.l.b16 %v855
        %v1027 = vunpack.c.h.b16 %v855
        %v1028 = vunpack.c.l.b16 %v856
        %v1029 = vunpack.c.h.b16 %v856
        %v1030 = vunpack.c.l.b16 %v857
        %v1031 = vunpack.c.h.b16 %v857
        %v1032 = vunpack.c.l.b16 %v858
        %v1033 = vunpack.c.h.b16 %v858
        %v1034 = vunpack.c.l.b16 %v859
        %v1035 = vunpack.c.h.b16 %v859
        %v1036 = vunpack.c.l.b16 %v860
        %v1037 = vunpack.c.h.b16 %v860
        %v1038 = vunpack.c.l.b16 %v861
        %v1039 = vunpack.c.h.b16 %v861
        %v1040 = vunpack.c.l.b16 %v862
        %v1041 = vunpack.c.h.b16 %v862
        %v1042 = vunpack.c.l.b16 %v863
        %v1043 = vunpack.c.h.b16 %v863
        %v1044 = vunpack.c.l.b16 %v864
        %v1045 = vunpack.c.h.b16 %v864
        %v1046 = vunpack.c.l.b16 %v865
        %v1047 = vunpack.c.h.b16 %v865
        %v1048 = vunpack.c.l.b16 %v866
        %v1049 = vunpack.c.h.b16 %v866
        %v1050 = vunpack.c.l.b16 %v867
        %v1051 = vunpack.c.h.b16 %v867
        %v1052 = vunpack.c.l.b16 %v868
        %v1053 = vunpack.c.h.b16 %v868
        %v1054 = vunpack.c.l.b16 %v869
        %v1055 = vunpack.c.h.b16 %v869
        %v1056 = vunpack.c.l.b16 %v870
        %v1057 = vunpack.c.h.b16 %v870
        %v1058 = vunpack.c.l.b16 %v871
        %v1059 = vunpack.c.h.b16 %v871
        %v1060 = vunpack.c.l.b16 %v872
        %v1061 = vunpack.c.h.b16 %v872
        %v1062 = vunpack.c.l.b16 %v873
        %v1063 = vunpack.c.h.b16 %v873
        %v1064 = vunpack.c.l.b16 %v874
        %v1065 = vunpack.c.h.b16 %v874
        %v1066 = vunpack.c.l.b16 %v875
        %v1067 = vunpack.c.h.b16 %v875
        %v1068 = vunpack.c.l.b16 %v876
        %v1069 = vunpack.c.h.b16 %v876
        %v1070 = vunpack.c.l.b16 %v877
        %v1071 = vunpack.c.h.b16 %v877
        %v1072 = vunpack.c.l.b16 %v878
        %v1073 = vunpack.c.h.b16 %v878
        %v1074 = vunpack.c.l.b16 %v879
        %v1075 = vunpack.c.h.b16 %v879
        %v1076 = vunpack.c.l.b16 %v880
        %v1077 = vunpack.c.h.b16 %v880
        %v1078 = vunpack.c.l.b16 %v881
        %v1079 = vunpack.c.h.b16 %v881
        %v1080 = vpack.c.b16 %v954, %v952
        %v1081 = vpack.c.b16 %v955, %v953
        %v1082 = vpack.c.b16 %v958, %v956
        %v1083 = vpack.c.b16 %v959, %v957
        %v1084 = vpack.c.b16 %v962, %v960
        %v1085 = vpack.c.b16 %v963, %v961
        %v1086 = vpack.c.b16 %v966, %v964
        %v1087 = vpack.c.b16 %v967, %v965
        %v1088 = vpack.c.b16 %v970, %v968
        %v1089 = vpack.c.b16 %v971, %v969
        %v1090 = vpack.c.b16 %v974, %v972
        %v1091 = vpack.c.b16 %v975, %v973
        %v1092 = vpack.c.b16 %v978, %v976
        %v1093 = vpack.c.b16 %v979, %v977
        %v1094 = vpack.c.b16 %v982, %v980
        %v1095 = vpack.c.b16 %v983, %v981
        %v1096 = vpack.c.b16 %v986, %v984
        %v1097 = vpack.c.b16 %v987, %v985
        %v1098 = vpack.c.b16 %v990, %v988
        %v1099 = vpack.c.b16 %v991, %v989
        %v1100 = vpack.c.b16 %v994, %v992
        %v1101 = vpack.c.b16 %v995, %v993
        %v1102 = vpack.c.b16 %v998, %v996
        %v1103 = vpack.c.b16 %v999, %v997
        %v1104 = vpack.c.b16 %v1002, %v1000
        %v1105 = vpack.c.b16 %v1003, %v1001
        %v1106 = vpack.c.b16 %v1006, %v1004
        %v1107 = vpack.c.b16 %v1007, %v1005
        %v1108 = vpack.c.b16 %v1010, %v1008
        %v1109 = vpack.c.b16 %v1011, %v1009
        %v1110 = vpack.c.b16 %v1014, %v1012
        %v1111 = vpack.c.b16 %v1015, %v1013
        %v1112 = vpack.c.b16 %v1018, %v1016
        %v1113 = vpack.c.b16 %v1019, %v1017
        %v1114 = vpack.c.b16 %v1022, %v1020
        %v1115 = vpack.c.b16 %v1023, %v1021
        %v1116 = vpack.c.b16 %v1026, %v1024
        %v1117 = vpack.c.b16 %v1027, %v1025
        %v1118 = vpack.c.b16 %v1030, %v1028
        %v1119 = vpack.c.b16 %v1031, %v1029
        %v1120 = vpack.c.b16 %v1034, %v1032
        %v1121 = vpack.c.b16 %v1035, %v1033
        %v1122 = vpack.c.b16 %v1038, %v1036
        %v1123 = vpack.c.b16 %v1039, %v1037
        %v1124 = vpack.c.b16 %v1042, %v1040
        %v1125 = vpack.c.b16 %v1043, %v1041
        %v1126 = vpack.c.b16 %v1046, %v1044
        %v1127 = vpack.c.b16 %v1047, %v1045
        %v1128 = vpack.c.b16 %v1050, %v1048
        %v1129 = vpack.c.b16 %v1051, %v1049
        %v1130 = vpack.c.b16 %v1054, %v1052
        %v1131 = vpack.c.b16 %v1055, %v1053
        %v1132 = vpack.c.b16 %v1058, %v1056
        %v1133 = vpack.c.b16 %v1059, %v1057
        %v1134 = vpack.c.b16 %v1062, %v1060
        %v1135 = vpack.c.b16 %v1063, %v1061
        %v1136 = vpack.c.b16 %v1066, %v1064
        %v1137 = vpack.c.b16 %v1067, %v1065
        %v1138 = vpack.c.b16 %v1070, %v1068
        %v1139 = vpack.c.b16 %v1071, %v1069
        %v1140 = vpack.c.b16 %v1074, %v1072
        %v1141 = vpack.c.b16 %v1075, %v1073
        %v1142 = vpack.c.b16 %v1078, %v1076
        %v1143 = vpack.c.b16 %v1079, %v1077
        %1208 = vmatpush.bf16.msra.mxu0 %v1094
        %1209 = vmatpush.bf16.msra.mxu0 %v1092
        %1210 = vmatpush.bf16.msra.mxu0 %v1090
        %1211 = vmatpush.bf16.msra.mxu0 %v1088
        %1212 = vmatpush.bf16.msra.mxu0 %v1086
        %1213 = vmatpush.bf16.msra.mxu0 %v1084
        %1214 = vmatpush.bf16.msra.mxu0 %v1082
        %1215 = vmatpush.bf16.msra.mxu0 %v1080
        %1216 = vmatmul.bf16.gmra.mxu0 %v786
        %v1217 = vpop.f32.mrf.mxu0
        %v1218 = vadd.f32 %v884, %v1217
        %v1219 = vpop.f32.mrf.mxu0
        %v1220 = vadd.f32 %v884, %v1219
        %1221 = vmatmul.bf16.gmra.mxu0 %v790
        %v1222 = vpop.f32.mrf.mxu0
        %v1223 = vadd.f32 %v884, %v1222
        %v1224 = vpop.f32.mrf.mxu0
        %v1225 = vadd.f32 %v884, %v1224
        %1226 = vmatmul.bf16.gmra.mxu0 %v794
        %v1227 = vpop.f32.mrf.mxu0
        %v1228 = vadd.f32 %v884, %v1227
        %v1229 = vpop.f32.mrf.mxu0
        %v1230 = vadd.f32 %v884, %v1229
        %1231 = vmatmul.bf16.gmra.mxu0 %v798
        %v1232 = vpop.f32.mrf.mxu0
        %v1233 = vadd.f32 %v884, %v1232
        %v1234 = vpop.f32.mrf.mxu0
        %v1235 = vadd.f32 %v884, %v1234
        %1236 = vmatmul.bf16.gmra.mxu0 %v802
        %v1237 = vpop.f32.mrf.mxu0
        %v1238 = vadd.f32 %v884, %v1237
        %v1239 = vpop.f32.mrf.mxu0
        %v1240 = vadd.f32 %v884, %v1239
        %1241 = vmatmul.bf16.gmra.mxu0 %v806
        %v1242 = vpop.f32.mrf.mxu0
        %v1243 = vadd.f32 %v884, %v1242
        %v1244 = vpop.f32.mrf.mxu0
        %v1245 = vadd.f32 %v884, %v1244
        %1246 = vmatmul.bf16.gmra.mxu0 %v810
        %v1247 = vpop.f32.mrf.mxu0
        %v1248 = vadd.f32 %v884, %v1247
        %v1249 = vpop.f32.mrf.mxu0
        %v1250 = vadd.f32 %v884, %v1249
        %1251 = vmatmul.bf16.gmra.mxu0 %v814
        %v1252 = vpop.f32.mrf.mxu0
        %v1253 = vadd.f32 %v884, %v1252
        %v1254 = vpop.f32.mrf.mxu0
        %v1255 = vadd.f32 %v884, %v1254
        %1256 = vdwg.mxu0
        %1257 = vmatpush.bf16.msra.mxu0 %v1110
        %1258 = vmatpush.bf16.msra.mxu0 %v1108
        %1259 = vmatpush.bf16.msra.mxu0 %v1106
        %1260 = vmatpush.bf16.msra.mxu0 %v1104
        %1261 = vmatpush.bf16.msra.mxu0 %v1102
        %1262 = vmatpush.bf16.msra.mxu0 %v1100
        %1263 = vmatpush.bf16.msra.mxu0 %v1098
        %1264 = vmatpush.bf16.msra.mxu0 %v1096
        %1265 = vmatmul.bf16.gmra.mxu0 %v787
        %v1266 = vpop.f32.mrf.mxu0
        %v1267 = vadd.f32 %v1218, %v1266
        %v1268 = vpop.f32.mrf.mxu0
        %v1269 = vadd.f32 %v1220, %v1268
        %1270 = vmatmul.bf16.gmra.mxu0 %v791
        %v1271 = vpop.f32.mrf.mxu0
        %v1272 = vadd.f32 %v1223, %v1271
        %v1273 = vpop.f32.mrf.mxu0
        %v1274 = vadd.f32 %v1225, %v1273
        %1275 = vmatmul.bf16.gmra.mxu0 %v795
        %v1276 = vpop.f32.mrf.mxu0
        %v1277 = vadd.f32 %v1228, %v1276
        %v1278 = vpop.f32.mrf.mxu0
        %v1279 = vadd.f32 %v1230, %v1278
        %1280 = vmatmul.bf16.gmra.mxu0 %v799
        %v1281 = vpop.f32.mrf.mxu0
        %v1282 = vadd.f32 %v1233, %v1281
        %v1283 = vpop.f32.mrf.mxu0
        %v1284 = vadd.f32 %v1235, %v1283
        %1285 = vmatmul.bf16.gmra.mxu0 %v803
        %v1286 = vpop.f32.mrf.mxu0
        %v1287 = vadd.f32 %v1238, %v1286
        %v1288 = vpop.f32.mrf.mxu0
        %v1289 = vadd.f32 %v1240, %v1288
        %1290 = vmatmul.bf16.gmra.mxu0 %v807
        %v1291 = vpop.f32.mrf.mxu0
        %v1292 = vadd.f32 %v1243, %v1291
        %v1293 = vpop.f32.mrf.mxu0
        %v1294 = vadd.f32 %v1245, %v1293
        %1295 = vmatmul.bf16.gmra.mxu0 %v811
        %v1296 = vpop.f32.mrf.mxu0
        %v1297 = vadd.f32 %v1248, %v1296
        %v1298 = vpop.f32.mrf.mxu0
        %v1299 = vadd.f32 %v1250, %v1298
        %1300 = vmatmul.bf16.gmra.mxu0 %v815
        %v1301 = vpop.f32.mrf.mxu0
        %v1302 = vadd.f32 %v1253, %v1301
        %v1303 = vpop.f32.mrf.mxu0
        %v1304 = vadd.f32 %v1255, %v1303
        %1305 = vdwg.mxu0
        %1306 = vmatpush.bf16.msra.mxu0 %v1126
        %1307 = vmatpush.bf16.msra.mxu0 %v1124
        %1308 = vmatpush.bf16.msra.mxu0 %v1122
        %1309 = vmatpush.bf16.msra.mxu0 %v1120
        %1310 = vmatpush.bf16.msra.mxu0 %v1118
        %1311 = vmatpush.bf16.msra.mxu0 %v1116
        %1312 = vmatpush.bf16.msra.mxu0 %v1114
        %1313 = vmatpush.bf16.msra.mxu0 %v1112
        %1314 = vmatmul.bf16.gmra.mxu0 %v788
        %v1315 = vpop.f32.mrf.mxu0
        %v1316 = vadd.f32 %v1267, %v1315
        %v1317 = vpop.f32.mrf.mxu0
        %v1318 = vadd.f32 %v1269, %v1317
        %1319 = vmatmul.bf16.gmra.mxu0 %v792
        %v1320 = vpop.f32.mrf.mxu0
        %v1321 = vadd.f32 %v1272, %v1320
        %v1322 = vpop.f32.mrf.mxu0
        %v1323 = vadd.f32 %v1274, %v1322
        %1324 = vmatmul.bf16.gmra.mxu0 %v796
        %v1325 = vpop.f32.mrf.mxu0
        %v1326 = vadd.f32 %v1277, %v1325
        %v1327 = vpop.f32.mrf.mxu0
        %v1328 = vadd.f32 %v1279, %v1327
        %1329 = vmatmul.bf16.gmra.mxu0 %v800
        %v1330 = vpop.f32.mrf.mxu0
        %v1331 = vadd.f32 %v1282, %v1330
        %v1332 = vpop.f32.mrf.mxu0
        %v1333 = vadd.f32 %v1284, %v1332
        %1334 = vmatmul.bf16.gmra.mxu0 %v804
        %v1335 = vpop.f32.mrf.mxu0
        %v1336 = vadd.f32 %v1287, %v1335
        %v1337 = vpop.f32.mrf.mxu0
        %v1338 = vadd.f32 %v1289, %v1337
        %1339 = vmatmul.bf16.gmra.mxu0 %v808
        %v1340 = vpop.f32.mrf.mxu0
        %v1341 = vadd.f32 %v1292, %v1340
        %v1342 = vpop.f32.mrf.mxu0
        %v1343 = vadd.f32 %v1294, %v1342
        %1344 = vmatmul.bf16.gmra.mxu0 %v812
        %v1345 = vpop.f32.mrf.mxu0
        %v1346 = vadd.f32 %v1297, %v1345
        %v1347 = vpop.f32.mrf.mxu0
        %v1348 = vadd.f32 %v1299, %v1347
        %1349 = vmatmul.bf16.gmra.mxu0 %v816
        %v1350 = vpop.f32.mrf.mxu0
        %v1351 = vadd.f32 %v1302, %v1350
        %v1352 = vpop.f32.mrf.mxu0
        %v1353 = vadd.f32 %v1304, %v1352
        %1354 = vdwg.mxu0
        %1355 = vmatpush.bf16.msra.mxu0 %v1142
        %1356 = vmatpush.bf16.msra.mxu0 %v1140
        %1357 = vmatpush.bf16.msra.mxu0 %v1138
        %1358 = vmatpush.bf16.msra.mxu0 %v1136
        %1359 = vmatpush.bf16.msra.mxu0 %v1134
        %1360 = vmatpush.bf16.msra.mxu0 %v1132
        %1361 = vmatpush.bf16.msra.mxu0 %v1130
        %1362 = vmatpush.bf16.msra.mxu0 %v1128
        %1363 = vmatmul.bf16.gmra.mxu0 %v789
        %v1364 = vpop.f32.mrf.mxu0
        %v1365 = vadd.f32 %v1316, %v1364
        %v1366 = vpop.f32.mrf.mxu0
        %v1367 = vadd.f32 %v1318, %v1366
        %1368 = vmatmul.bf16.gmra.mxu0 %v793
        %v1369 = vpop.f32.mrf.mxu0
        %v1370 = vadd.f32 %v1321, %v1369
        %v1371 = vpop.f32.mrf.mxu0
        %v1372 = vadd.f32 %v1323, %v1371
        %1373 = vmatmul.bf16.gmra.mxu0 %v797
        %v1374 = vpop.f32.mrf.mxu0
        %v1375 = vadd.f32 %v1326, %v1374
        %v1376 = vpop.f32.mrf.mxu0
        %v1377 = vadd.f32 %v1328, %v1376
        %1378 = vmatmul.bf16.gmra.mxu0 %v801
        %v1379 = vpop.f32.mrf.mxu0
        %v1380 = vadd.f32 %v1331, %v1379
        %v1381 = vpop.f32.mrf.mxu0
        %v1382 = vadd.f32 %v1333, %v1381
        %1383 = vmatmul.bf16.gmra.mxu0 %v805
        %v1384 = vpop.f32.mrf.mxu0
        %v1385 = vadd.f32 %v1336, %v1384
        %v1386 = vpop.f32.mrf.mxu0
        %v1387 = vadd.f32 %v1338, %v1386
        %1388 = vmatmul.bf16.gmra.mxu0 %v809
        %v1389 = vpop.f32.mrf.mxu0
        %v1390 = vadd.f32 %v1341, %v1389
        %v1391 = vpop.f32.mrf.mxu0
        %v1392 = vadd.f32 %v1343, %v1391
        %1393 = vmatmul.bf16.gmra.mxu0 %v813
        %v1394 = vpop.f32.mrf.mxu0
        %v1395 = vadd.f32 %v1346, %v1394
        %v1396 = vpop.f32.mrf.mxu0
        %v1397 = vadd.f32 %v1348, %v1396
        %1398 = vmatmul.bf16.gmra.mxu0 %v817
        %v1399 = vpop.f32.mrf.mxu0
        %v1400 = vadd.f32 %v1351, %v1399
        %v1401 = vpop.f32.mrf.mxu0
        %v1402 = vadd.f32 %v1353, %v1401
        %1403 = vdwg.mxu0
        %1404 = vmatpush.bf16.msra.mxu0 %v1095
        %1405 = vmatpush.bf16.msra.mxu0 %v1093
        %1406 = vmatpush.bf16.msra.mxu0 %v1091
        %1407 = vmatpush.bf16.msra.mxu0 %v1089
        %1408 = vmatpush.bf16.msra.mxu0 %v1087
        %1409 = vmatpush.bf16.msra.mxu0 %v1085
        %1410 = vmatpush.bf16.msra.mxu0 %v1083
        %1411 = vmatpush.bf16.msra.mxu0 %v1081
        %1412 = vmatmul.bf16.gmra.mxu0 %v786
        %v1413 = vpop.f32.mrf.mxu0
        %v1414 = vadd.f32 %v885, %v1413
        %v1415 = vpop.f32.mrf.mxu0
        %v1416 = vadd.f32 %v885, %v1415
        %1417 = vmatmul.bf16.gmra.mxu0 %v790
        %v1418 = vpop.f32.mrf.mxu0
        %v1419 = vadd.f32 %v885, %v1418
        %v1420 = vpop.f32.mrf.mxu0
        %v1421 = vadd.f32 %v885, %v1420
        %1422 = vmatmul.bf16.gmra.mxu0 %v794
        %v1423 = vpop.f32.mrf.mxu0
        %v1424 = vadd.f32 %v885, %v1423
        %v1425 = vpop.f32.mrf.mxu0
        %v1426 = vadd.f32 %v885, %v1425
        %1427 = vmatmul.bf16.gmra.mxu0 %v798
        %v1428 = vpop.f32.mrf.mxu0
        %v1429 = vadd.f32 %v885, %v1428
        %v1430 = vpop.f32.mrf.mxu0
        %v1431 = vadd.f32 %v885, %v1430
        %1432 = vmatmul.bf16.gmra.mxu0 %v802
        %v1433 = vpop.f32.mrf.mxu0
        %v1434 = vadd.f32 %v885, %v1433
        %v1435 = vpop.f32.mrf.mxu0
        %v1436 = vadd.f32 %v885, %v1435
        %1437 = vmatmul.bf16.gmra.mxu0 %v806
        %v1438 = vpop.f32.mrf.mxu0
        %v1439 = vadd.f32 %v885, %v1438
        %v1440 = vpop.f32.mrf.mxu0
        %v1441 = vadd.f32 %v885, %v1440
        %1442 = vmatmul.bf16.gmra.mxu0 %v810
        %v1443 = vpop.f32.mrf.mxu0
        %v1444 = vadd.f32 %v885, %v1443
        %v1445 = vpop.f32.mrf.mxu0
        %v1446 = vadd.f32 %v885, %v1445
        %1447 = vmatmul.bf16.gmra.mxu0 %v814
        %v1448 = vpop.f32.mrf.mxu0
        %v1449 = vadd.f32 %v885, %v1448
        %v1450 = vpop.f32.mrf.mxu0
        %v1451 = vadd.f32 %v885, %v1450
        %1452 = vdwg.mxu0
        %1453 = vmatpush.bf16.msra.mxu0 %v1111
        %1454 = vmatpush.bf16.msra.mxu0 %v1109
        %1455 = vmatpush.bf16.msra.mxu0 %v1107
        %1456 = vmatpush.bf16.msra.mxu0 %v1105
        %1457 = vmatpush.bf16.msra.mxu0 %v1103
        %1458 = vmatpush.bf16.msra.mxu0 %v1101
        %1459 = vmatpush.bf16.msra.mxu0 %v1099
        %1460 = vmatpush.bf16.msra.mxu0 %v1097
        %1461 = vmatmul.bf16.gmra.mxu0 %v787
        %v1462 = vpop.f32.mrf.mxu0
        %v1463 = vadd.f32 %v1414, %v1462
        %v1464 = vpop.f32.mrf.mxu0
        %v1465 = vadd.f32 %v1416, %v1464
        %1466 = vmatmul.bf16.gmra.mxu0 %v791
        %v1467 = vpop.f32.mrf.mxu0
        %v1468 = vadd.f32 %v1419, %v1467
        %v1469 = vpop.f32.mrf.mxu0
        %v1470 = vadd.f32 %v1421, %v1469
        %1471 = vmatmul.bf16.gmra.mxu0 %v795
        %v1472 = vpop.f32.mrf.mxu0
        %v1473 = vadd.f32 %v1424, %v1472
        %v1474 = vpop.f32.mrf.mxu0
        %v1475 = vadd.f32 %v1426, %v1474
        %1476 = vmatmul.bf16.gmra.mxu0 %v799
        %v1477 = vpop.f32.mrf.mxu0
        %v1478 = vadd.f32 %v1429, %v1477
        %v1479 = vpop.f32.mrf.mxu0
        %v1480 = vadd.f32 %v1431, %v1479
        %1481 = vmatmul.bf16.gmra.mxu0 %v803
        %v1482 = vpop.f32.mrf.mxu0
        %v1483 = vadd.f32 %v1434, %v1482
        %v1484 = vpop.f32.mrf.mxu0
        %v1485 = vadd.f32 %v1436, %v1484
        %1486 = vmatmul.bf16.gmra.mxu0 %v807
        %v1487 = vpop.f32.mrf.mxu0
        %v1488 = vadd.f32 %v1439, %v1487
        %v1489 = vpop.f32.mrf.mxu0
        %v1490 = vadd.f32 %v1441, %v1489
        %1491 = vmatmul.bf16.gmra.mxu0 %v811
        %v1492 = vpop.f32.mrf.mxu0
        %v1493 = vadd.f32 %v1444, %v1492
        %v1494 = vpop.f32.mrf.mxu0
        %v1495 = vadd.f32 %v1446, %v1494
        %1496 = vmatmul.bf16.gmra.mxu0 %v815
        %v1497 = vpop.f32.mrf.mxu0
        %v1498 = vadd.f32 %v1449, %v1497
        %v1499 = vpop.f32.mrf.mxu0
        %v1500 = vadd.f32 %v1451, %v1499
        %1501 = vdwg.mxu0
        %1502 = vmatpush.bf16.msra.mxu0 %v1127
        %1503 = vmatpush.bf16.msra.mxu0 %v1125
        %1504 = vmatpush.bf16.msra.mxu0 %v1123
        %1505 = vmatpush.bf16.msra.mxu0 %v1121
        %1506 = vmatpush.bf16.msra.mxu0 %v1119
        %1507 = vmatpush.bf16.msra.mxu0 %v1117
        %1508 = vmatpush.bf16.msra.mxu0 %v1115
        %1509 = vmatpush.bf16.msra.mxu0 %v1113
        %1510 = vmatmul.bf16.gmra.mxu0 %v788
        %v1511 = vpop.f32.mrf.mxu0
        %v1512 = vadd.f32 %v1463, %v1511
        %v1513 = vpop.f32.mrf.mxu0
        %v1514 = vadd.f32 %v1465, %v1513
        %1515 = vmatmul.bf16.gmra.mxu0 %v792
        %v1516 = vpop.f32.mrf.mxu0
        %v1517 = vadd.f32 %v1468, %v1516
        %v1518 = vpop.f32.mrf.mxu0
        %v1519 = vadd.f32 %v1470, %v1518
        %1520 = vmatmul.bf16.gmra.mxu0 %v796
        %v1521 = vpop.f32.mrf.mxu0
        %v1522 = vadd.f32 %v1473, %v1521
        %v1523 = vpop.f32.mrf.mxu0
        %v1524 = vadd.f32 %v1475, %v1523
        %1525 = vmatmul.bf16.gmra.mxu0 %v800
        %v1526 = vpop.f32.mrf.mxu0
        %v1527 = vadd.f32 %v1478, %v1526
        %v1528 = vpop.f32.mrf.mxu0
        %v1529 = vadd.f32 %v1480, %v1528
        %1530 = vmatmul.bf16.gmra.mxu0 %v804
        %v1531 = vpop.f32.mrf.mxu0
        %v1532 = vadd.f32 %v1483, %v1531
        %v1533 = vpop.f32.mrf.mxu0
        %v1534 = vadd.f32 %v1485, %v1533
        %1535 = vmatmul.bf16.gmra.mxu0 %v808
        %v1536 = vpop.f32.mrf.mxu0
        %v1537 = vadd.f32 %v1488, %v1536
        %v1538 = vpop.f32.mrf.mxu0
        %v1539 = vadd.f32 %v1490, %v1538
        %1540 = vmatmul.bf16.gmra.mxu0 %v812
        %v1541 = vpop.f32.mrf.mxu0
        %v1542 = vadd.f32 %v1493, %v1541
        %v1543 = vpop.f32.mrf.mxu0
        %v1544 = vadd.f32 %v1495, %v1543
        %1545 = vmatmul.bf16.gmra.mxu0 %v816
        %v1546 = vpop.f32.mrf.mxu0
        %v1547 = vadd.f32 %v1498, %v1546
        %v1548 = vpop.f32.mrf.mxu0
        %v1549 = vadd.f32 %v1500, %v1548
        %1550 = vdwg.mxu0
        %1551 = vmatpush.bf16.msra.mxu0 %v1143
        %1552 = vmatpush.bf16.msra.mxu0 %v1141
        %1553 = vmatpush.bf16.msra.mxu0 %v1139
        %1554 = vmatpush.bf16.msra.mxu0 %v1137
        %1555 = vmatpush.bf16.msra.mxu0 %v1135
        %1556 = vmatpush.bf16.msra.mxu0 %v1133
        %1557 = vmatpush.bf16.msra.mxu0 %v1131
        %1558 = vmatpush.bf16.msra.mxu0 %v1129
        %1559 = vmatmul.bf16.gmra.mxu0 %v789
        %v1560 = vpop.f32.mrf.mxu0
        %v1561 = vadd.f32 %v1512, %v1560
        %v1562 = vpop.f32.mrf.mxu0
        %v1563 = vadd.f32 %v1514, %v1562
        %1564 = vmatmul.bf16.gmra.mxu0 %v793
        %v1565 = vpop.f32.mrf.mxu0
        %v1566 = vadd.f32 %v1517, %v1565
        %v1567 = vpop.f32.mrf.mxu0
        %v1568 = vadd.f32 %v1519, %v1567
        %1569 = vmatmul.bf16.gmra.mxu0 %v797
        %v1570 = vpop.f32.mrf.mxu0
        %v1571 = vadd.f32 %v1522, %v1570
        %v1572 = vpop.f32.mrf.mxu0
        %v1573 = vadd.f32 %v1524, %v1572
        %1574 = vmatmul.bf16.gmra.mxu0 %v801
        %v1575 = vpop.f32.mrf.mxu0
        %v1576 = vadd.f32 %v1527, %v1575
        %v1577 = vpop.f32.mrf.mxu0
        %v1578 = vadd.f32 %v1529, %v1577
        %1579 = vmatmul.bf16.gmra.mxu0 %v805
        %v1580 = vpop.f32.mrf.mxu0
        %v1581 = vadd.f32 %v1532, %v1580
        %v1582 = vpop.f32.mrf.mxu0
        %v1583 = vadd.f32 %v1534, %v1582
        %1584 = vmatmul.bf16.gmra.mxu0 %v809
        %v1585 = vpop.f32.mrf.mxu0
        %v1586 = vadd.f32 %v1537, %v1585
        %v1587 = vpop.f32.mrf.mxu0
        %v1588 = vadd.f32 %v1539, %v1587
        %1589 = vmatmul.bf16.gmra.mxu0 %v813
        %v1590 = vpop.f32.mrf.mxu0
        %v1591 = vadd.f32 %v1542, %v1590
        %v1592 = vpop.f32.mrf.mxu0
        %v1593 = vadd.f32 %v1544, %v1592
        %1594 = vmatmul.bf16.gmra.mxu0 %v817
        %v1595 = vpop.f32.mrf.mxu0
        %v1596 = vadd.f32 %v1547, %v1595
        %v1597 = vpop.f32.mrf.mxu0
        %v1598 = vadd.f32 %v1549, %v1597
        %1599 = vdwg.mxu0
        %v1600 = vmax.f32 %v1365, 0.0
        %v1601 = vmax.f32 %v1561, 0.0
        %v1602 = vmax.f32 %v1367, 0.0
        %v1603 = vmax.f32 %v1563, 0.0
        %v1604 = vmax.f32 %v1370, 0.0
        %v1605 = vmax.f32 %v1566, 0.0
        %v1606 = vmax.f32 %v1372, 0.0
        %v1607 = vmax.f32 %v1568, 0.0
        %v1608 = vmax.f32 %v1375, 0.0
        %v1609 = vmax.f32 %v1571, 0.0
        %v1610 = vmax.f32 %v1377, 0.0
        %v1611 = vmax.f32 %v1573, 0.0
        %v1612 = vmax.f32 %v1380, 0.0
        %v1613 = vmax.f32 %v1576, 0.0
        %v1614 = vmax.f32 %v1382, 0.0
        %v1615 = vmax.f32 %v1578, 0.0
        %v1616 = vmax.f32 %v1385, 0.0
        %v1617 = vmax.f32 %v1581, 0.0
        %v1618 = vmax.f32 %v1387, 0.0
        %v1619 = vmax.f32 %v1583, 0.0
        %v1620 = vmax.f32 %v1390, 0.0
        %v1621 = vmax.f32 %v1586, 0.0
        %v1622 = vmax.f32 %v1392, 0.0
        %v1623 = vmax.f32 %v1588, 0.0
        %v1624 = vmax.f32 %v1395, 0.0
        %v1625 = vmax.f32 %v1591, 0.0
        %v1626 = vmax.f32 %v1397, 0.0
        %v1627 = vmax.f32 %v1593, 0.0
        %v1628 = vmax.f32 %v1400, 0.0
        %v1629 = vmax.f32 %v1596, 0.0
        %v1630 = vmax.f32 %v1402, 0.0
        %v1631 = vmax.f32 %v1598, 0.0
        %v1632 = vpack.c.bf16 %v1602, %v1600
        %v1633 = vpack.c.bf16 %v1603, %v1601
        %v1634 = vpack.c.bf16 %v1606, %v1604
        %v1635 = vpack.c.bf16 %v1607, %v1605
        %v1636 = vpack.c.bf16 %v1610, %v1608
        %v1637 = vpack.c.bf16 %v1611, %v1609
        %v1638 = vpack.c.bf16 %v1614, %v1612
        %v1639 = vpack.c.bf16 %v1615, %v1613
        %v1640 = vpack.c.bf16 %v1618, %v1616
        %v1641 = vpack.c.bf16 %v1619, %v1617
        %v1642 = vpack.c.bf16 %v1622, %v1620
        %v1643 = vpack.c.bf16 %v1623, %v1621
        %v1644 = vpack.c.bf16 %v1626, %v1624
        %v1645 = vpack.c.bf16 %v1627, %v1625
        %v1646 = vpack.c.bf16 %v1630, %v1628
        %v1647 = vpack.c.bf16 %v1631, %v1629
        %v1648 = vld [vmem:[%s5] sm:$0xf]
        %v1649 = vld [vmem:[%s5 + $0x4] sm:$0xf]
        %v1650 = vld [vmem:[%s5 + $0x8] sm:$0xf]
        %v1651 = vld [vmem:[%s5 + $0xc] sm:$0xf]
        %v1652 = vld [vmem:[%s5 + $0x10] sm:$0xf]
        %v1653 = vld [vmem:[%s5 + $0x14] sm:$0xf]
        %v1654 = vld [vmem:[%s5 + $0x18] sm:$0xf]
        %v1655 = vld [vmem:[%s5 + $0x1c] sm:$0xf]
        %v1656 = vld [vmem:[%s5 + $0x20] sm:$0xf]
        %v1657 = vld [vmem:[%s5 + $0x24] sm:$0xf]
        %v1658 = vld [vmem:[%s5 + $0x28] sm:$0xf]
        %v1659 = vld [vmem:[%s5 + $0x2c] sm:$0xf]
        %v1660 = vld [vmem:[%s5 + $0x30] sm:$0xf]
        %v1661 = vld [vmem:[%s5 + $0x34] sm:$0xf]
        %v1662 = vld [vmem:[%s5 + $0x38] sm:$0xf]
        %v1663 = vld [vmem:[%s5 + $0x3c] sm:$0xf]
        %v1664 = vld [vmem:[%s5 + $0x40] sm:$0xf]
        %v1665 = vld [vmem:[%s5 + $0x44] sm:$0xf]
        %v1666 = vld [vmem:[%s5 + $0x48] sm:$0xf]
        %v1667 = vld [vmem:[%s5 + $0x4c] sm:$0xf]
        %v1668 = vld [vmem:[%s5 + $0x50] sm:$0xf]
        %v1669 = vld [vmem:[%s5 + $0x54] sm:$0xf]
        %v1670 = vld [vmem:[%s5 + $0x58] sm:$0xf]
        %v1671 = vld [vmem:[%s5 + $0x5c] sm:$0xf]
        %v1672 = vld [vmem:[%s5 + $0x60] sm:$0xf]
        %v1673 = vld [vmem:[%s5 + $0x64] sm:$0xf]
        %v1674 = vld [vmem:[%s5 + $0x68] sm:$0xf]
        %v1675 = vld [vmem:[%s5 + $0x6c] sm:$0xf]
        %v1676 = vld [vmem:[%s5 + $0x70] sm:$0xf]
        %v1677 = vld [vmem:[%s5 + $0x74] sm:$0xf]
        %v1678 = vld [vmem:[%s5 + $0x78] sm:$0xf]
        %v1679 = vld [vmem:[%s5 + $0x7c] sm:$0xf]
        %v1680 = vld [vmem:[#allocation5] sm:$0x1]
        %v1682 = vperm.slane %v1680, 0
        %v1716 = vunpack.c.l.b16 %v1648
        %v1717 = vunpack.c.l.b16 %v1649
        %v1718 = vunpack.c.l.b16 %v1650
        %v1719 = vunpack.c.l.b16 %v1651
        %v1720 = vunpack.c.l.b16 %v1652
        %v1721 = vunpack.c.l.b16 %v1653
        %v1722 = vunpack.c.l.b16 %v1654
        %v1723 = vunpack.c.l.b16 %v1655
        %v1724 = vunpack.c.l.b16 %v1656
        %v1725 = vunpack.c.l.b16 %v1657
        %v1726 = vunpack.c.l.b16 %v1658
        %v1727 = vunpack.c.l.b16 %v1659
        %v1728 = vunpack.c.l.b16 %v1660
        %v1729 = vunpack.c.l.b16 %v1661
        %v1730 = vunpack.c.l.b16 %v1662
        %v1731 = vunpack.c.l.b16 %v1663
        %v1732 = vunpack.c.l.b16 %v1664
        %v1733 = vunpack.c.l.b16 %v1665
        %v1734 = vunpack.c.l.b16 %v1666
        %v1735 = vunpack.c.l.b16 %v1667
        %v1736 = vunpack.c.l.b16 %v1668
        %v1737 = vunpack.c.l.b16 %v1669
        %v1738 = vunpack.c.l.b16 %v1670
        %v1739 = vunpack.c.l.b16 %v1671
        %v1740 = vunpack.c.l.b16 %v1672
        %v1741 = vunpack.c.l.b16 %v1673
        %v1742 = vunpack.c.l.b16 %v1674
        %v1743 = vunpack.c.l.b16 %v1675
        %v1744 = vunpack.c.l.b16 %v1676
        %v1745 = vunpack.c.l.b16 %v1677
        %v1746 = vunpack.c.l.b16 %v1678
        %v1747 = vunpack.c.l.b16 %v1679
        %v1748 = vpack.c.b16 %v1717, %v1716
        %v1749 = vpack.c.b16 %v1719, %v1718
        %v1750 = vpack.c.b16 %v1721, %v1720
        %v1751 = vpack.c.b16 %v1723, %v1722
        %v1752 = vpack.c.b16 %v1725, %v1724
        %v1753 = vpack.c.b16 %v1727, %v1726
        %v1754 = vpack.c.b16 %v1729, %v1728
        %v1755 = vpack.c.b16 %v1731, %v1730
        %v1756 = vpack.c.b16 %v1733, %v1732
        %v1757 = vpack.c.b16 %v1735, %v1734
        %v1758 = vpack.c.b16 %v1737, %v1736
        %v1759 = vpack.c.b16 %v1739, %v1738
        %v1760 = vpack.c.b16 %v1741, %v1740
        %v1761 = vpack.c.b16 %v1743, %v1742
        %v1762 = vpack.c.b16 %v1745, %v1744
        %v1763 = vpack.c.b16 %v1747, %v1746
        %1780 = vmatpush.bf16.msra.mxu0 %v1755
        %1781 = vmatpush.bf16.msra.mxu0 %v1754
        %1782 = vmatpush.bf16.msra.mxu0 %v1753
        %1783 = vmatpush.bf16.msra.mxu0 %v1752
        %1784 = vmatpush.bf16.msra.mxu0 %v1751
        %1785 = vmatpush.bf16.msra.mxu0 %v1750
        %1786 = vmatpush.bf16.msra.mxu0 %v1749
        %1787 = vmatpush.bf16.msra.mxu0 %v1748
        %1788 = vmatmul.bf16.gmra.mxu0 %v1632
        %v1789 = vpop.f32.mrf.mxu0
        %v1790 = vadd.f32 %v1682, %v1789
        %v1791 = vpop.f32.mrf.mxu0
        %v1792 = vadd.f32 %v1682, %v1791
        %1793 = vmatmul.bf16.gmra.mxu0 %v1634
        %v1794 = vpop.f32.mrf.mxu0
        %v1795 = vadd.f32 %v1682, %v1794
        %v1796 = vpop.f32.mrf.mxu0
        %v1797 = vadd.f32 %v1682, %v1796
        %1798 = vmatmul.bf16.gmra.mxu0 %v1636
        %v1799 = vpop.f32.mrf.mxu0
        %v1800 = vadd.f32 %v1682, %v1799
        %v1801 = vpop.f32.mrf.mxu0
        %v1802 = vadd.f32 %v1682, %v1801
        %1803 = vmatmul.bf16.gmra.mxu0 %v1638
        %v1804 = vpop.f32.mrf.mxu0
        %v1805 = vadd.f32 %v1682, %v1804
        %v1806 = vpop.f32.mrf.mxu0
        %v1807 = vadd.f32 %v1682, %v1806
        %1808 = vmatmul.bf16.gmra.mxu0 %v1640
        %v1809 = vpop.f32.mrf.mxu0
        %v1810 = vadd.f32 %v1682, %v1809
        %v1811 = vpop.f32.mrf.mxu0
        %v1812 = vadd.f32 %v1682, %v1811
        %1813 = vmatmul.bf16.gmra.mxu0 %v1642
        %v1814 = vpop.f32.mrf.mxu0
        %v1815 = vadd.f32 %v1682, %v1814
        %v1816 = vpop.f32.mrf.mxu0
        %v1817 = vadd.f32 %v1682, %v1816
        %1818 = vmatmul.bf16.gmra.mxu0 %v1644
        %v1819 = vpop.f32.mrf.mxu0
        %v1820 = vadd.f32 %v1682, %v1819
        %v1821 = vpop.f32.mrf.mxu0
        %v1822 = vadd.f32 %v1682, %v1821
        %1823 = vmatmul.bf16.gmra.mxu0 %v1646
        %v1824 = vpop.f32.mrf.mxu0
        %v1825 = vadd.f32 %v1682, %v1824
        %v1826 = vpop.f32.mrf.mxu0
        %v1827 = vadd.f32 %v1682, %v1826
        %1828 = vdwg.mxu0
        %1829 = vmatpush.bf16.msra.mxu0 %v1763
        %1830 = vmatpush.bf16.msra.mxu0 %v1762
        %1831 = vmatpush.bf16.msra.mxu0 %v1761
        %1832 = vmatpush.bf16.msra.mxu0 %v1760
        %1833 = vmatpush.bf16.msra.mxu0 %v1759
        %1834 = vmatpush.bf16.msra.mxu0 %v1758
        %1835 = vmatpush.bf16.msra.mxu0 %v1757
        %1836 = vmatpush.bf16.msra.mxu0 %v1756
        %1837 = vmatmul.bf16.gmra.mxu0 %v1633
        %v1838 = vpop.f32.mrf.mxu0
        %v1839 = vadd.f32 %v1790, %v1838
        %v1840 = vpop.f32.mrf.mxu0
        %v1841 = vadd.f32 %v1792, %v1840
        %1842 = vmatmul.bf16.gmra.mxu0 %v1635
        %v1843 = vpop.f32.mrf.mxu0
        %v1844 = vadd.f32 %v1795, %v1843
        %v1845 = vpop.f32.mrf.mxu0
        %v1846 = vadd.f32 %v1797, %v1845
        %1847 = vmatmul.bf16.gmra.mxu0 %v1637
        %v1848 = vpop.f32.mrf.mxu0
        %v1849 = vadd.f32 %v1800, %v1848
        %v1850 = vpop.f32.mrf.mxu0
        %v1851 = vadd.f32 %v1802, %v1850
        %1852 = vmatmul.bf16.gmra.mxu0 %v1639
        %v1853 = vpop.f32.mrf.mxu0
        %v1854 = vadd.f32 %v1805, %v1853
        %v1855 = vpop.f32.mrf.mxu0
        %v1856 = vadd.f32 %v1807, %v1855
        %1857 = vmatmul.bf16.gmra.mxu0 %v1641
        %v1858 = vpop.f32.mrf.mxu0
        %v1859 = vadd.f32 %v1810, %v1858
        %v1860 = vpop.f32.mrf.mxu0
        %v1861 = vadd.f32 %v1812, %v1860
        %1862 = vmatmul.bf16.gmra.mxu0 %v1643
        %v1863 = vpop.f32.mrf.mxu0
        %v1864 = vadd.f32 %v1815, %v1863
        %v1865 = vpop.f32.mrf.mxu0
        %v1866 = vadd.f32 %v1817, %v1865
        %1867 = vmatmul.bf16.gmra.mxu0 %v1645
        %v1868 = vpop.f32.mrf.mxu0
        %v1869 = vadd.f32 %v1820, %v1868
        %v1870 = vpop.f32.mrf.mxu0
        %v1871 = vadd.f32 %v1822, %v1870
        %1872 = vmatmul.bf16.gmra.mxu0 %v1647
        %v1873 = vpop.f32.mrf.mxu0
        %v1874 = vadd.f32 %v1825, %v1873
        %v1875 = vpop.f32.mrf.mxu0
        %v1876 = vadd.f32 %v1827, %v1875
        %1877 = vdwg.mxu0
        %v1878 = vmax.f32 %v1839, 0.0
        %v1879 = vmax.f32 %v1841, 0.0
        %v1880 = vmax.f32 %v1844, 0.0
        %v1881 = vmax.f32 %v1846, 0.0
        %v1882 = vmax.f32 %v1849, 0.0
        %v1883 = vmax.f32 %v1851, 0.0
        %v1884 = vmax.f32 %v1854, 0.0
        %v1885 = vmax.f32 %v1856, 0.0
        %v1886 = vmax.f32 %v1859, 0.0
        %v1887 = vmax.f32 %v1861, 0.0
        %v1888 = vmax.f32 %v1864, 0.0
        %v1889 = vmax.f32 %v1866, 0.0
        %v1890 = vmax.f32 %v1869, 0.0
        %v1891 = vmax.f32 %v1871, 0.0
        %v1892 = vmax.f32 %v1874, 0.0
        %v1893 = vmax.f32 %v1876, 0.0
        %v1894 = vpack.c.bf16 %v1879, %v1878
        %v1895 = vpack.c.bf16 %v1881, %v1880
        %v1896 = vpack.c.bf16 %v1883, %v1882
        %v1897 = vpack.c.bf16 %v1885, %v1884
        %v1898 = vpack.c.bf16 %v1887, %v1886
        %v1899 = vpack.c.bf16 %v1889, %v1888
        %v1900 = vpack.c.bf16 %v1891, %v1890
        %v1901 = vpack.c.bf16 %v1893, %v1892
        %v1902 = vld [vmem:[%s7] sm:$0xf]
        %v1903 = vld [vmem:[%s7 + $0x4] sm:$0xf]
        %v1904 = vld [vmem:[%s7 + $0x8] sm:$0xf]
        %v1905 = vld [vmem:[%s7 + $0xc] sm:$0xf]
        %v1906 = vld [vmem:[%s7 + $0x10] sm:$0xf]
        %v1907 = vld [vmem:[%s7 + $0x14] sm:$0xf]
        %v1908 = vld [vmem:[%s7 + $0x18] sm:$0xf]
        %v1909 = vld [vmem:[%s7 + $0x1c] sm:$0xf]
        %v1910 = vld [vmem:[%s7 + $0x20] sm:$0xf]
        %v1911 = vld [vmem:[%s7 + $0x24] sm:$0xf]
        %v1912 = vld [vmem:[%s7 + $0x28] sm:$0xf]
        %v1913 = vld [vmem:[%s7 + $0x2c] sm:$0xf]
        %v1914 = vld [vmem:[%s7 + $0x30] sm:$0xf]
        %v1915 = vld [vmem:[%s7 + $0x34] sm:$0xf]
        %v1916 = vld [vmem:[%s7 + $0x38] sm:$0xf]
        %v1917 = vld [vmem:[%s7 + $0x3c] sm:$0xf]
        %v1918 = vld [vmem:[%s8] sm:$0x1]
        %v1920 = vperm.slane %v1918, 0
        %v1938 = vunpack.c.l.b16 %v1902
        %v1939 = vunpack.c.l.b16 %v1903
        %v1940 = vunpack.c.l.b16 %v1904
        %v1941 = vunpack.c.l.b16 %v1905
        %v1942 = vunpack.c.l.b16 %v1906
        %v1943 = vunpack.c.l.b16 %v1907
        %v1944 = vunpack.c.l.b16 %v1908
        %v1945 = vunpack.c.l.b16 %v1909
        %v1946 = vunpack.c.l.b16 %v1910
        %v1947 = vunpack.c.l.b16 %v1911
        %v1948 = vunpack.c.l.b16 %v1912
        %v1949 = vunpack.c.l.b16 %v1913
        %v1950 = vunpack.c.l.b16 %v1914
        %v1951 = vunpack.c.l.b16 %v1915
        %v1952 = vunpack.c.l.b16 %v1916
        %v1953 = vunpack.c.l.b16 %v1917
        %v1954 = vpack.c.b16 %v1939, %v1938
        %v1955 = vpack.c.b16 %v1941, %v1940
        %v1956 = vpack.c.b16 %v1943, %v1942
        %v1957 = vpack.c.b16 %v1945, %v1944
        %v1958 = vpack.c.b16 %v1947, %v1946
        %v1959 = vpack.c.b16 %v1949, %v1948
        %v1960 = vpack.c.b16 %v1951, %v1950
        %v1961 = vpack.c.b16 %v1953, %v1952
        %1970 = vmatpush.bf16.msra.mxu0 %v1961
        %1971 = vmatpush.bf16.msra.mxu0 %v1960
        %1972 = vmatpush.bf16.msra.mxu0 %v1959
        %1973 = vmatpush.bf16.msra.mxu0 %v1958
        %1974 = vmatpush.bf16.msra.mxu0 %v1957
        %1975 = vmatpush.bf16.msra.mxu0 %v1956
        %1976 = vmatpush.bf16.msra.mxu0 %v1955
        %1977 = vmatpush.bf16.msra.mxu0 %v1954
        %1978 = vmatmul.bf16.gmra.mxu0 %v1894
        %v1979 = vpop.f32.mrf.mxu0
        %v1980 = vadd.f32 %v1920, %v1979
        %v1981 = vpop.f32.mrf.mxu0
        %v1982 = vadd.f32 %v1920, %v1981
        %1983 = vmatmul.bf16.gmra.mxu0 %v1895
        %v1984 = vpop.f32.mrf.mxu0
        %v1985 = vadd.f32 %v1920, %v1984
        %v1986 = vpop.f32.mrf.mxu0
        %v1987 = vadd.f32 %v1920, %v1986
        %1988 = vmatmul.bf16.gmra.mxu0 %v1896
        %v1989 = vpop.f32.mrf.mxu0
        %v1990 = vadd.f32 %v1920, %v1989
        %v1991 = vpop.f32.mrf.mxu0
        %v1992 = vadd.f32 %v1920, %v1991
        %1993 = vmatmul.bf16.gmra.mxu0 %v1897
        %v1994 = vpop.f32.mrf.mxu0
        %v1995 = vadd.f32 %v1920, %v1994
        %v1996 = vpop.f32.mrf.mxu0
        %v1997 = vadd.f32 %v1920, %v1996
        %1998 = vmatmul.bf16.gmra.mxu0 %v1898
        %v1999 = vpop.f32.mrf.mxu0
        %v2000 = vadd.f32 %v1920, %v1999
        %v2001 = vpop.f32.mrf.mxu0
        %v2002 = vadd.f32 %v1920, %v2001
        %2003 = vmatmul.bf16.gmra.mxu0 %v1899
        %v2004 = vpop.f32.mrf.mxu0
        %v2005 = vadd.f32 %v1920, %v2004
        %v2006 = vpop.f32.mrf.mxu0
        %v2007 = vadd.f32 %v1920, %v2006
        %2008 = vmatmul.bf16.gmra.mxu0 %v1900
        %v2009 = vpop.f32.mrf.mxu0
        %v2010 = vadd.f32 %v1920, %v2009
        %v2011 = vpop.f32.mrf.mxu0
        %v2012 = vadd.f32 %v1920, %v2011
        %2013 = vmatmul.bf16.gmra.mxu0 %v1901
        %v2014 = vpop.f32.mrf.mxu0
        %v2015 = vadd.f32 %v1920, %v2014
        %v2016 = vpop.f32.mrf.mxu0
        %v2017 = vadd.f32 %v1920, %v2016
        %2018 = vdwg.mxu0
        %v2019 = vmax.f32 %v1980, 0.0
        %v2020 = vmax.f32 %v1982, 0.0
        %v2021 = vmax.f32 %v1985, 0.0
        %v2022 = vmax.f32 %v1987, 0.0
        %v2023 = vmax.f32 %v1990, 0.0
        %v2024 = vmax.f32 %v1992, 0.0
        %v2025 = vmax.f32 %v1995, 0.0
        %v2026 = vmax.f32 %v1997, 0.0
        %v2027 = vmax.f32 %v2000, 0.0
        %v2028 = vmax.f32 %v2002, 0.0
        %v2029 = vmax.f32 %v2005, 0.0
        %v2030 = vmax.f32 %v2007, 0.0
        %v2031 = vmax.f32 %v2010, 0.0
        %v2032 = vmax.f32 %v2012, 0.0
        %v2033 = vmax.f32 %v2015, 0.0
        %v2034 = vmax.f32 %v2017, 0.0
        %v2035 = vpack.c.bf16 %v2020, %v2019
        %v2036 = vpack.c.bf16 %v2022, %v2021
        %v2037 = vpack.c.bf16 %v2024, %v2023
        %v2038 = vpack.c.bf16 %v2026, %v2025
        %v2039 = vpack.c.bf16 %v2028, %v2027
        %v2040 = vpack.c.bf16 %v2030, %v2029
        %v2041 = vpack.c.bf16 %v2032, %v2031
        %v2042 = vpack.c.bf16 %v2034, %v2033
        %v2043 = vld [vmem:[%s9] sm:$0xf]
        %v2044 = vld [vmem:[%s9 + $0x4] sm:$0xf]
        %v2045 = vld [vmem:[%s9 + $0x8] sm:$0xf]
        %v2046 = vld [vmem:[%s9 + $0xc] sm:$0xf]
        %v2047 = vld [vmem:[%s9 + $0x10] sm:$0xf]
        %v2048 = vld [vmem:[%s9 + $0x14] sm:$0xf]
        %v2049 = vld [vmem:[%s9 + $0x18] sm:$0xf]
        %v2050 = vld [vmem:[%s9 + $0x1c] sm:$0xf]
        %v2051 = vld [vmem:[%s10] sm:$0x1]
        %v2053 = vperm.slane %v2051, 0
        %v2063 = vunpack.c.l.b16 %v2043
        %v2064 = vunpack.c.l.b16 %v2044
        %v2065 = vunpack.c.l.b16 %v2045
        %v2066 = vunpack.c.l.b16 %v2046
        %v2067 = vunpack.c.l.b16 %v2047
        %v2068 = vunpack.c.l.b16 %v2048
        %v2069 = vunpack.c.l.b16 %v2049
        %v2070 = vunpack.c.l.b16 %v2050
        %v2071 = vpack.c.b16 %v2064, %v2063
        %v2072 = vpack.c.b16 %v2066, %v2065
        %v2073 = vpack.c.b16 %v2068, %v2067
        %v2074 = vpack.c.b16 %v2070, %v2069
        %vm2079 = vcmask 523264
        %v2081 = vsel %vm2079, %v2035, 0
        %v2084 = vsel %vm2079, %v2036, 0
        %v2087 = vsel %vm2079, %v2037, 0
        %v2090 = vsel %vm2079, %v2038, 0
        %v2093 = vsel %vm2079, %v2039, 0
        %v2096 = vsel %vm2079, %v2040, 0
        %v2099 = vsel %vm2079, %v2041, 0
        %v2102 = vsel %vm2079, %v2042, 0
        %2104 = vmatpush.bf16.msra.mxu0 0
        %2105 = vmatpush.bf16.msra.mxu0 0
        %2106 = vmatpush.bf16.msra.mxu0 0
        %2107 = vmatpush.bf16.msra.mxu0 0
        %2108 = vmatpush.bf16.msra.mxu0 %v2074
        %2109 = vmatpush.bf16.msra.mxu0 %v2073
        %2110 = vmatpush.bf16.msra.mxu0 %v2072
        %2111 = vmatpush.bf16.msra.mxu0 %v2071
        %2112 = vmatmul.bf16.gmra.mxu0 %v2081
        %v2113 = vpop.f32.mrf.mxu0
        %v2114 = vadd.f32 %v2053, %v2113
        %v2115 = vpop.f32.mrf.mxu0
        %v2116 = vadd.f32 %v2053, %v2115
        %2117 = vmatmul.bf16.gmra.mxu0 %v2084
        %v2118 = vpop.f32.mrf.mxu0
        %v2119 = vadd.f32 %v2053, %v2118
        %v2120 = vpop.f32.mrf.mxu0
        %v2121 = vadd.f32 %v2053, %v2120
        %2122 = vmatmul.bf16.gmra.mxu0 %v2087
        %v2123 = vpop.f32.mrf.mxu0
        %v2124 = vadd.f32 %v2053, %v2123
        %v2125 = vpop.f32.mrf.mxu0
        %v2126 = vadd.f32 %v2053, %v2125
        %2127 = vmatmul.bf16.gmra.mxu0 %v2090
        %v2128 = vpop.f32.mrf.mxu0
        %v2129 = vadd.f32 %v2053, %v2128
        %v2130 = vpop.f32.mrf.mxu0
        %v2131 = vadd.f32 %v2053, %v2130
        %2132 = vmatmul.bf16.gmra.mxu0 %v2093
        %v2133 = vpop.f32.mrf.mxu0
        %v2134 = vadd.f32 %v2053, %v2133
        %v2135 = vpop.f32.mrf.mxu0
        %v2136 = vadd.f32 %v2053, %v2135
        %2137 = vmatmul.bf16.gmra.mxu0 %v2096
        %v2138 = vpop.f32.mrf.mxu0
        %v2139 = vadd.f32 %v2053, %v2138
        %v2140 = vpop.f32.mrf.mxu0
        %v2141 = vadd.f32 %v2053, %v2140
        %2142 = vmatmul.bf16.gmra.mxu0 %v2099
        %v2143 = vpop.f32.mrf.mxu0
        %v2144 = vadd.f32 %v2053, %v2143
        %v2145 = vpop.f32.mrf.mxu0
        %v2146 = vadd.f32 %v2053, %v2145
        %2147 = vmatmul.bf16.gmra.mxu0 %v2102
        %v2148 = vpop.f32.mrf.mxu0
        %v2149 = vadd.f32 %v2053, %v2148
        %v2150 = vpop.f32.mrf.mxu0
        %v2151 = vadd.f32 %v2053, %v2150
        %2152 = vdwg.mxu0
        %2153 = vst [vmem:[%s410] sm:$0xff] %v2114
        %2154 = vst [vmem:[%s410 + $0x8] sm:$0xff] %v2116
        %2155 = vst [vmem:[%s410 + $0x10] sm:$0xff] %v2119
        %2156 = vst [vmem:[%s410 + $0x18] sm:$0xff] %v2121
        %2157 = vst [vmem:[%s410 + $0x20] sm:$0xff] %v2124
        %2158 = vst [vmem:[%s410 + $0x28] sm:$0xff] %v2126
        %2159 = vst [vmem:[%s410 + $0x30] sm:$0xff] %v2129
        %2160 = vst [vmem:[%s410 + $0x38] sm:$0xff] %v2131
        %2161 = vst [vmem:[%s410 + $0x40] sm:$0xff] %v2134
        %2162 = vst [vmem:[%s410 + $0x48] sm:$0xff] %v2136
        %2163 = vst [vmem:[%s410 + $0x50] sm:$0xff] %v2139
        %2164 = vst [vmem:[%s410 + $0x58] sm:$0xff] %v2141
        %2165 = vst [vmem:[%s410 + $0x60] sm:$0xff] %v2144
        %2166 = vst [vmem:[%s410 + $0x68] sm:$0xff] %v2146
        %2167 = vst [vmem:[%s410 + $0x70] sm:$0xff] %v2149
        %2168 = vst [vmem:[%s410 + $0x78] sm:$0xff] %v2151
        %s2169 = scalar_lea.vmem %s415, 128
        %v2170 = vld [vmem:[%s2169] sm:$0xff]
        %v2171 = vld [vmem:[%s2169 + $0x8] sm:$0xff]
        %v2172 = vld [vmem:[%s2169 + $0x10] sm:$0xff]
        %v2173 = vld [vmem:[%s2169 + $0x18] sm:$0xff]
        %v2174 = vld [vmem:[%s2169 + $0x20] sm:$0xff]
        %v2175 = vld [vmem:[%s2169 + $0x28] sm:$0xff]
        %v2176 = vld [vmem:[%s2169 + $0x30] sm:$0xff]
        %v2177 = vld [vmem:[%s2169 + $0x38] sm:$0xff]
        %v2178 = vld [vmem:[%s2169 + $0x40] sm:$0xff]
        %v2179 = vld [vmem:[%s2169 + $0x48] sm:$0xff]
        %v2180 = vld [vmem:[%s2169 + $0x50] sm:$0xff]
        %v2181 = vld [vmem:[%s2169 + $0x58] sm:$0xff]
        %v2182 = vld [vmem:[%s2169 + $0x60] sm:$0xff]
        %v2183 = vld [vmem:[%s2169 + $0x68] sm:$0xff]
        %v2184 = vld [vmem:[%s2169 + $0x70] sm:$0xff]
        %v2185 = vld [vmem:[%s2169 + $0x78] sm:$0xff]
        %v2186 = vpack.c.bf16 %v2171, %v2170
        %v2187 = vpack.c.bf16 %v2173, %v2172
        %v2188 = vpack.c.bf16 %v2175, %v2174
        %v2189 = vpack.c.bf16 %v2177, %v2176
        %v2190 = vpack.c.bf16 %v2179, %v2178
        %v2191 = vpack.c.bf16 %v2181, %v2180
        %v2192 = vpack.c.bf16 %v2183, %v2182
        %v2193 = vpack.c.bf16 %v2185, %v2184
        %v2194 = vld [vmem:[%s1] sm:$0xff]
        %v2195 = vld [vmem:[%s1 + $0x8] sm:$0xff]
        %v2196 = vld [vmem:[%s1 + $0x10] sm:$0xff]
        %v2197 = vld [vmem:[%s1 + $0x18] sm:$0xff]
        %v2198 = vld [vmem:[%s1 + $0x20] sm:$0xff]
        %v2199 = vld [vmem:[%s1 + $0x28] sm:$0xff]
        %v2200 = vld [vmem:[%s1 + $0x30] sm:$0xff]
        %v2201 = vld [vmem:[%s1 + $0x38] sm:$0xff]
        %v2202 = vld [vmem:[#allocation2] sm:$0xf]
        %v2204 = vperm.slane %v2202, 0
        %v2205 = vperm.slane %v2202, 1
        %v2206 = vperm.slane %v2202, 2
        %v2207 = vperm.slane %v2202, 3
        %v2220 = vunpack.c.l.b16 %v2194
        %v2221 = vunpack.c.h.b16 %v2194
        %v2222 = vunpack.c.l.b16 %v2195
        %v2223 = vunpack.c.h.b16 %v2195
        %v2224 = vunpack.c.l.b16 %v2196
        %v2225 = vunpack.c.h.b16 %v2196
        %v2226 = vunpack.c.l.b16 %v2197
        %v2227 = vunpack.c.h.b16 %v2197
        %v2228 = vunpack.c.l.b16 %v2198
        %v2229 = vunpack.c.h.b16 %v2198
        %v2230 = vunpack.c.l.b16 %v2199
        %v2231 = vunpack.c.h.b16 %v2199
        %v2232 = vunpack.c.l.b16 %v2200
        %v2233 = vunpack.c.h.b16 %v2200
        %v2234 = vunpack.c.l.b16 %v2201
        %v2235 = vunpack.c.h.b16 %v2201
        %v2236 = vpack.c.b16 %v2224, %v2220
        %v2237 = vpack.c.b16 %v2225, %v2221
        %v2238 = vpack.c.b16 %v2226, %v2222
        %v2239 = vpack.c.b16 %v2227, %v2223
        %v2240 = vpack.c.b16 %v2232, %v2228
        %v2241 = vpack.c.b16 %v2233, %v2229
        %v2242 = vpack.c.b16 %v2234, %v2230
        %v2243 = vpack.c.b16 %v2235, %v2231
        %v2253 = vsel %vm501, %v2186, 0
        %v2256 = vsel %vm501, %v2187, 0
        %v2259 = vsel %vm501, %v2188, 0
        %v2262 = vsel %vm501, %v2189, 0
        %v2265 = vsel %vm501, %v2190, 0
        %v2268 = vsel %vm501, %v2191, 0
        %v2271 = vsel %vm501, %v2192, 0
        %v2274 = vsel %vm501, %v2193, 0
        %2276 = vmatpush.bf16.msra.mxu0 0
        %2277 = vmatpush.bf16.msra.mxu0 0
        %2278 = vmatpush.bf16.msra.mxu0 0
        %2279 = vmatpush.bf16.msra.mxu0 0
        %2280 = vmatpush.bf16.msra.mxu0 0
        %2281 = vmatpush.bf16.msra.mxu0 0
        %2282 = vmatpush.bf16.msra.mxu0 %v2240
        %2283 = vmatpush.bf16.msra.mxu0 %v2236
        %2284 = vmatmul.bf16.gmra.mxu0 %v2253
        %v2285 = vpop.f32.mrf.mxu0
        %v2286 = vadd.f32 %v2204, %v2285
        %v2287 = vpop.f32.mrf.mxu0
        %v2288 = vadd.f32 %v2204, %v2287
        %2289 = vmatmul.bf16.gmra.mxu0 %v2256
        %v2290 = vpop.f32.mrf.mxu0
        %v2291 = vadd.f32 %v2204, %v2290
        %v2292 = vpop.f32.mrf.mxu0
        %v2293 = vadd.f32 %v2204, %v2292
        %2294 = vmatmul.bf16.gmra.mxu0 %v2259
        %v2295 = vpop.f32.mrf.mxu0
        %v2296 = vadd.f32 %v2204, %v2295
        %v2297 = vpop.f32.mrf.mxu0
        %v2298 = vadd.f32 %v2204, %v2297
        %2299 = vmatmul.bf16.gmra.mxu0 %v2262
        %v2300 = vpop.f32.mrf.mxu0
        %v2301 = vadd.f32 %v2204, %v2300
        %v2302 = vpop.f32.mrf.mxu0
        %v2303 = vadd.f32 %v2204, %v2302
        %2304 = vmatmul.bf16.gmra.mxu0 %v2265
        %v2305 = vpop.f32.mrf.mxu0
        %v2306 = vadd.f32 %v2204, %v2305
        %v2307 = vpop.f32.mrf.mxu0
        %v2308 = vadd.f32 %v2204, %v2307
        %2309 = vmatmul.bf16.gmra.mxu0 %v2268
        %v2310 = vpop.f32.mrf.mxu0
        %v2311 = vadd.f32 %v2204, %v2310
        %v2312 = vpop.f32.mrf.mxu0
        %v2313 = vadd.f32 %v2204, %v2312
        %2314 = vmatmul.bf16.gmra.mxu0 %v2271
        %v2315 = vpop.f32.mrf.mxu0
        %v2316 = vadd.f32 %v2204, %v2315
        %v2317 = vpop.f32.mrf.mxu0
        %v2318 = vadd.f32 %v2204, %v2317
        %2319 = vmatmul.bf16.gmra.mxu0 %v2274
        %v2320 = vpop.f32.mrf.mxu0
        %v2321 = vadd.f32 %v2204, %v2320
        %v2322 = vpop.f32.mrf.mxu0
        %v2323 = vadd.f32 %v2204, %v2322
        %2324 = vdwg.mxu0
        %2325 = vmatpush.bf16.msra.mxu0 0
        %2326 = vmatpush.bf16.msra.mxu0 0
        %2327 = vmatpush.bf16.msra.mxu0 0
        %2328 = vmatpush.bf16.msra.mxu0 0
        %2329 = vmatpush.bf16.msra.mxu0 0
        %2330 = vmatpush.bf16.msra.mxu0 0
        %2331 = vmatpush.bf16.msra.mxu0 %v2241
        %2332 = vmatpush.bf16.msra.mxu0 %v2237
        %2333 = vmatmul.bf16.gmra.mxu0 %v2253
        %v2334 = vpop.f32.mrf.mxu0
        %v2335 = vadd.f32 %v2205, %v2334
        %v2336 = vpop.f32.mrf.mxu0
        %v2337 = vadd.f32 %v2205, %v2336
        %2338 = vmatmul.bf16.gmra.mxu0 %v2256
        %v2339 = vpop.f32.mrf.mxu0
        %v2340 = vadd.f32 %v2205, %v2339
        %v2341 = vpop.f32.mrf.mxu0
        %v2342 = vadd.f32 %v2205, %v2341
        %2343 = vmatmul.bf16.gmra.mxu0 %v2259
        %v2344 = vpop.f32.mrf.mxu0
        %v2345 = vadd.f32 %v2205, %v2344
        %v2346 = vpop.f32.mrf.mxu0
        %v2347 = vadd.f32 %v2205, %v2346
        %2348 = vmatmul.bf16.gmra.mxu0 %v2262
        %v2349 = vpop.f32.mrf.mxu0
        %v2350 = vadd.f32 %v2205, %v2349
        %v2351 = vpop.f32.mrf.mxu0
        %v2352 = vadd.f32 %v2205, %v2351
        %2353 = vmatmul.bf16.gmra.mxu0 %v2265
        %v2354 = vpop.f32.mrf.mxu0
        %v2355 = vadd.f32 %v2205, %v2354
        %v2356 = vpop.f32.mrf.mxu0
        %v2357 = vadd.f32 %v2205, %v2356
        %2358 = vmatmul.bf16.gmra.mxu0 %v2268
        %v2359 = vpop.f32.mrf.mxu0
        %v2360 = vadd.f32 %v2205, %v2359
        %v2361 = vpop.f32.mrf.mxu0
        %v2362 = vadd.f32 %v2205, %v2361
        %2363 = vmatmul.bf16.gmra.mxu0 %v2271
        %v2364 = vpop.f32.mrf.mxu0
        %v2365 = vadd.f32 %v2205, %v2364
        %v2366 = vpop.f32.mrf.mxu0
        %v2367 = vadd.f32 %v2205, %v2366
        %2368 = vmatmul.bf16.gmra.mxu0 %v2274
        %v2369 = vpop.f32.mrf.mxu0
        %v2370 = vadd.f32 %v2205, %v2369
        %v2371 = vpop.f32.mrf.mxu0
        %v2372 = vadd.f32 %v2205, %v2371
        %2373 = vdwg.mxu0
        %2374 = vmatpush.bf16.msra.mxu0 0
        %2375 = vmatpush.bf16.msra.mxu0 0
        %2376 = vmatpush.bf16.msra.mxu0 0
        %2377 = vmatpush.bf16.msra.mxu0 0
        %2378 = vmatpush.bf16.msra.mxu0 0
        %2379 = vmatpush.bf16.msra.mxu0 0
        %2380 = vmatpush.bf16.msra.mxu0 %v2242
        %2381 = vmatpush.bf16.msra.mxu0 %v2238
        %2382 = vmatmul.bf16.gmra.mxu0 %v2253
        %v2383 = vpop.f32.mrf.mxu0
        %v2384 = vadd.f32 %v2206, %v2383
        %v2385 = vpop.f32.mrf.mxu0
        %v2386 = vadd.f32 %v2206, %v2385
        %2387 = vmatmul.bf16.gmra.mxu0 %v2256
        %v2388 = vpop.f32.mrf.mxu0
        %v2389 = vadd.f32 %v2206, %v2388
        %v2390 = vpop.f32.mrf.mxu0
        %v2391 = vadd.f32 %v2206, %v2390
        %2392 = vmatmul.bf16.gmra.mxu0 %v2259
        %v2393 = vpop.f32.mrf.mxu0
        %v2394 = vadd.f32 %v2206, %v2393
        %v2395 = vpop.f32.mrf.mxu0
        %v2396 = vadd.f32 %v2206, %v2395
        %2397 = vmatmul.bf16.gmra.mxu0 %v2262
        %v2398 = vpop.f32.mrf.mxu0
        %v2399 = vadd.f32 %v2206, %v2398
        %v2400 = vpop.f32.mrf.mxu0
        %v2401 = vadd.f32 %v2206, %v2400
        %2402 = vmatmul.bf16.gmra.mxu0 %v2265
        %v2403 = vpop.f32.mrf.mxu0
        %v2404 = vadd.f32 %v2206, %v2403
        %v2405 = vpop.f32.mrf.mxu0
        %v2406 = vadd.f32 %v2206, %v2405
        %2407 = vmatmul.bf16.gmra.mxu0 %v2268
        %v2408 = vpop.f32.mrf.mxu0
        %v2409 = vadd.f32 %v2206, %v2408
        %v2410 = vpop.f32.mrf.mxu0
        %v2411 = vadd.f32 %v2206, %v2410
        %2412 = vmatmul.bf16.gmra.mxu0 %v2271
        %v2413 = vpop.f32.mrf.mxu0
        %v2414 = vadd.f32 %v2206, %v2413
        %v2415 = vpop.f32.mrf.mxu0
        %v2416 = vadd.f32 %v2206, %v2415
        %2417 = vmatmul.bf16.gmra.mxu0 %v2274
        %v2418 = vpop.f32.mrf.mxu0
        %v2419 = vadd.f32 %v2206, %v2418
        %v2420 = vpop.f32.mrf.mxu0
        %v2421 = vadd.f32 %v2206, %v2420
        %2422 = vdwg.mxu0
        %2423 = vmatpush.bf16.msra.mxu0 0
        %2424 = vmatpush.bf16.msra.mxu0 0
        %2425 = vmatpush.bf16.msra.mxu0 0
        %2426 = vmatpush.bf16.msra.mxu0 0
        %2427 = vmatpush.bf16.msra.mxu0 0
        %2428 = vmatpush.bf16.msra.mxu0 0
        %2429 = vmatpush.bf16.msra.mxu0 %v2243
        %2430 = vmatpush.bf16.msra.mxu0 %v2239
        %2431 = vmatmul.bf16.gmra.mxu0 %v2253
        %v2432 = vpop.f32.mrf.mxu0
        %v2433 = vadd.f32 %v2207, %v2432
        %v2434 = vpop.f32.mrf.mxu0
        %v2435 = vadd.f32 %v2207, %v2434
        %2436 = vmatmul.bf16.gmra.mxu0 %v2256
        %v2437 = vpop.f32.mrf.mxu0
        %v2438 = vadd.f32 %v2207, %v2437
        %v2439 = vpop.f32.mrf.mxu0
        %v2440 = vadd.f32 %v2207, %v2439
        %2441 = vmatmul.bf16.gmra.mxu0 %v2259
        %v2442 = vpop.f32.mrf.mxu0
        %v2443 = vadd.f32 %v2207, %v2442
        %v2444 = vpop.f32.mrf.mxu0
        %v2445 = vadd.f32 %v2207, %v2444
        %2446 = vmatmul.bf16.gmra.mxu0 %v2262
        %v2447 = vpop.f32.mrf.mxu0
        %v2448 = vadd.f32 %v2207, %v2447
        %v2449 = vpop.f32.mrf.mxu0
        %v2450 = vadd.f32 %v2207, %v2449
        %2451 = vmatmul.bf16.gmra.mxu0 %v2265
        %v2452 = vpop.f32.mrf.mxu0
        %v2453 = vadd.f32 %v2207, %v2452
        %v2454 = vpop.f32.mrf.mxu0
        %v2455 = vadd.f32 %v2207, %v2454
        %2456 = vmatmul.bf16.gmra.mxu0 %v2268
        %v2457 = vpop.f32.mrf.mxu0
        %v2458 = vadd.f32 %v2207, %v2457
        %v2459 = vpop.f32.mrf.mxu0
        %v2460 = vadd.f32 %v2207, %v2459
        %2461 = vmatmul.bf16.gmra.mxu0 %v2271
        %v2462 = vpop.f32.mrf.mxu0
        %v2463 = vadd.f32 %v2207, %v2462
        %v2464 = vpop.f32.mrf.mxu0
        %v2465 = vadd.f32 %v2207, %v2464
        %2466 = vmatmul.bf16.gmra.mxu0 %v2274
        %v2467 = vpop.f32.mrf.mxu0
        %v2468 = vadd.f32 %v2207, %v2467
        %v2469 = vpop.f32.mrf.mxu0
        %v2470 = vadd.f32 %v2207, %v2469
        %2471 = vdwg.mxu0
        %v2472 = vmax.f32 %v2286, 0.0
        %v2473 = vmax.f32 %v2335, 0.0
        %v2474 = vmax.f32 %v2384, 0.0
        %v2475 = vmax.f32 %v2433, 0.0
        %v2476 = vmax.f32 %v2288, 0.0
        %v2477 = vmax.f32 %v2337, 0.0
        %v2478 = vmax.f32 %v2386, 0.0
        %v2479 = vmax.f32 %v2435, 0.0
        %v2480 = vmax.f32 %v2291, 0.0
        %v2481 = vmax.f32 %v2340, 0.0
        %v2482 = vmax.f32 %v2389, 0.0
        %v2483 = vmax.f32 %v2438, 0.0
        %v2484 = vmax.f32 %v2293, 0.0
        %v2485 = vmax.f32 %v2342, 0.0
        %v2486 = vmax.f32 %v2391, 0.0
        %v2487 = vmax.f32 %v2440, 0.0
        %v2488 = vmax.f32 %v2296, 0.0
        %v2489 = vmax.f32 %v2345, 0.0
        %v2490 = vmax.f32 %v2394, 0.0
        %v2491 = vmax.f32 %v2443, 0.0
        %v2492 = vmax.f32 %v2298, 0.0
        %v2493 = vmax.f32 %v2347, 0.0
        %v2494 = vmax.f32 %v2396, 0.0
        %v2495 = vmax.f32 %v2445, 0.0
        %v2496 = vmax.f32 %v2301, 0.0
        %v2497 = vmax.f32 %v2350, 0.0
        %v2498 = vmax.f32 %v2399, 0.0
        %v2499 = vmax.f32 %v2448, 0.0
        %v2500 = vmax.f32 %v2303, 0.0
        %v2501 = vmax.f32 %v2352, 0.0
        %v2502 = vmax.f32 %v2401, 0.0
        %v2503 = vmax.f32 %v2450, 0.0
        %v2504 = vmax.f32 %v2306, 0.0
        %v2505 = vmax.f32 %v2355, 0.0
        %v2506 = vmax.f32 %v2404, 0.0
        %v2507 = vmax.f32 %v2453, 0.0
        %v2508 = vmax.f32 %v2308, 0.0
        %v2509 = vmax.f32 %v2357, 0.0
        %v2510 = vmax.f32 %v2406, 0.0
        %v2511 = vmax.f32 %v2455, 0.0
        %v2512 = vmax.f32 %v2311, 0.0
        %v2513 = vmax.f32 %v2360, 0.0
        %v2514 = vmax.f32 %v2409, 0.0
        %v2515 = vmax.f32 %v2458, 0.0
        %v2516 = vmax.f32 %v2313, 0.0
        %v2517 = vmax.f32 %v2362, 0.0
        %v2518 = vmax.f32 %v2411, 0.0
        %v2519 = vmax.f32 %v2460, 0.0
        %v2520 = vmax.f32 %v2316, 0.0
        %v2521 = vmax.f32 %v2365, 0.0
        %v2522 = vmax.f32 %v2414, 0.0
        %v2523 = vmax.f32 %v2463, 0.0
        %v2524 = vmax.f32 %v2318, 0.0
        %v2525 = vmax.f32 %v2367, 0.0
        %v2526 = vmax.f32 %v2416, 0.0
        %v2527 = vmax.f32 %v2465, 0.0
        %v2528 = vmax.f32 %v2321, 0.0
        %v2529 = vmax.f32 %v2370, 0.0
        %v2530 = vmax.f32 %v2419, 0.0
        %v2531 = vmax.f32 %v2468, 0.0
        %v2532 = vmax.f32 %v2323, 0.0
        %v2533 = vmax.f32 %v2372, 0.0
        %v2534 = vmax.f32 %v2421, 0.0
        %v2535 = vmax.f32 %v2470, 0.0
        %v2536 = vpack.c.bf16 %v2476, %v2472
        %v2537 = vpack.c.bf16 %v2477, %v2473
        %v2538 = vpack.c.bf16 %v2478, %v2474
        %v2539 = vpack.c.bf16 %v2479, %v2475
        %v2540 = vpack.c.bf16 %v2484, %v2480
        %v2541 = vpack.c.bf16 %v2485, %v2481
        %v2542 = vpack.c.bf16 %v2486, %v2482
        %v2543 = vpack.c.bf16 %v2487, %v2483
        %v2544 = vpack.c.bf16 %v2492, %v2488
        %v2545 = vpack.c.bf16 %v2493, %v2489
        %v2546 = vpack.c.bf16 %v2494, %v2490
        %v2547 = vpack.c.bf16 %v2495, %v2491
        %v2548 = vpack.c.bf16 %v2500, %v2496
        %v2549 = vpack.c.bf16 %v2501, %v2497
        %v2550 = vpack.c.bf16 %v2502, %v2498
        %v2551 = vpack.c.bf16 %v2503, %v2499
        %v2552 = vpack.c.bf16 %v2508, %v2504
        %v2553 = vpack.c.bf16 %v2509, %v2505
        %v2554 = vpack.c.bf16 %v2510, %v2506
        %v2555 = vpack.c.bf16 %v2511, %v2507
        %v2556 = vpack.c.bf16 %v2516, %v2512
        %v2557 = vpack.c.bf16 %v2517, %v2513
        %v2558 = vpack.c.bf16 %v2518, %v2514
        %v2559 = vpack.c.bf16 %v2519, %v2515
        %v2560 = vpack.c.bf16 %v2524, %v2520
        %v2561 = vpack.c.bf16 %v2525, %v2521
        %v2562 = vpack.c.bf16 %v2526, %v2522
        %v2563 = vpack.c.bf16 %v2527, %v2523
        %v2564 = vpack.c.bf16 %v2532, %v2528
        %v2565 = vpack.c.bf16 %v2533, %v2529
        %v2566 = vpack.c.bf16 %v2534, %v2530
        %v2567 = vpack.c.bf16 %v2535, %v2531
        %v2568 = vld [vmem:[%s3] sm:$0xff]
        %v2569 = vld [vmem:[%s3 + $0x8] sm:$0xff]
        %v2570 = vld [vmem:[%s3 + $0x10] sm:$0xff]
        %v2571 = vld [vmem:[%s3 + $0x18] sm:$0xff]
        %v2572 = vld [vmem:[%s3 + $0x20] sm:$0xff]
        %v2573 = vld [vmem:[%s3 + $0x28] sm:$0xff]
        %v2574 = vld [vmem:[%s3 + $0x30] sm:$0xff]
        %v2575 = vld [vmem:[%s3 + $0x38] sm:$0xff]
        %v2576 = vld [vmem:[%s3 + $0x40] sm:$0xff]
        %v2577 = vld [vmem:[%s3 + $0x48] sm:$0xff]
        %v2578 = vld [vmem:[%s3 + $0x50] sm:$0xff]
        %v2579 = vld [vmem:[%s3 + $0x58] sm:$0xff]
        %v2580 = vld [vmem:[%s3 + $0x60] sm:$0xff]
        %v2581 = vld [vmem:[%s3 + $0x68] sm:$0xff]
        %v2582 = vld [vmem:[%s3 + $0x70] sm:$0xff]
        %v2583 = vld [vmem:[%s3 + $0x78] sm:$0xff]
        %v2584 = vld [vmem:[%s3 + $0x80] sm:$0xff]
        %v2585 = vld [vmem:[%s3 + $0x88] sm:$0xff]
        %v2586 = vld [vmem:[%s3 + $0x90] sm:$0xff]
        %v2587 = vld [vmem:[%s3 + $0x98] sm:$0xff]
        %v2588 = vld [vmem:[%s3 + $0xa0] sm:$0xff]
        %v2589 = vld [vmem:[%s3 + $0xa8] sm:$0xff]
        %v2590 = vld [vmem:[%s3 + $0xb0] sm:$0xff]
        %v2591 = vld [vmem:[%s3 + $0xb8] sm:$0xff]
        %v2592 = vld [vmem:[%s3 + $0xc0] sm:$0xff]
        %v2593 = vld [vmem:[%s3 + $0xc8] sm:$0xff]
        %v2594 = vld [vmem:[%s3 + $0xd0] sm:$0xff]
        %v2595 = vld [vmem:[%s3 + $0xd8] sm:$0xff]
        %v2596 = vld [vmem:[%s3 + $0xe0] sm:$0xff]
        %v2597 = vld [vmem:[%s3 + $0xe8] sm:$0xff]
        %v2598 = vld [vmem:[%s3 + $0xf0] sm:$0xff]
        %v2599 = vld [vmem:[%s3 + $0xf8] sm:$0xff]
        %v2600 = vld [vmem:[%s3 + $0x100] sm:$0xff]
        %v2601 = vld [vmem:[%s3 + $0x108] sm:$0xff]
        %v2602 = vld [vmem:[%s3 + $0x110] sm:$0xff]
        %v2603 = vld [vmem:[%s3 + $0x118] sm:$0xff]
        %v2604 = vld [vmem:[%s3 + $0x120] sm:$0xff]
        %v2605 = vld [vmem:[%s3 + $0x128] sm:$0xff]
        %v2606 = vld [vmem:[%s3 + $0x130] sm:$0xff]
        %v2607 = vld [vmem:[%s3 + $0x138] sm:$0xff]
        %v2608 = vld [vmem:[%s3 + $0x140] sm:$0xff]
        %v2609 = vld [vmem:[%s3 + $0x148] sm:$0xff]
        %v2610 = vld [vmem:[%s3 + $0x150] sm:$0xff]
        %v2611 = vld [vmem:[%s3 + $0x158] sm:$0xff]
        %v2612 = vld [vmem:[%s3 + $0x160] sm:$0xff]
        %v2613 = vld [vmem:[%s3 + $0x168] sm:$0xff]
        %v2614 = vld [vmem:[%s3 + $0x170] sm:$0xff]
        %v2615 = vld [vmem:[%s3 + $0x178] sm:$0xff]
        %v2616 = vld [vmem:[%s3 + $0x180] sm:$0xff]
        %v2617 = vld [vmem:[%s3 + $0x188] sm:$0xff]
        %v2618 = vld [vmem:[%s3 + $0x190] sm:$0xff]
        %v2619 = vld [vmem:[%s3 + $0x198] sm:$0xff]
        %v2620 = vld [vmem:[%s3 + $0x1a0] sm:$0xff]
        %v2621 = vld [vmem:[%s3 + $0x1a8] sm:$0xff]
        %v2622 = vld [vmem:[%s3 + $0x1b0] sm:$0xff]
        %v2623 = vld [vmem:[%s3 + $0x1b8] sm:$0xff]
        %v2624 = vld [vmem:[%s3 + $0x1c0] sm:$0xff]
        %v2625 = vld [vmem:[%s3 + $0x1c8] sm:$0xff]
        %v2626 = vld [vmem:[%s3 + $0x1d0] sm:$0xff]
        %v2627 = vld [vmem:[%s3 + $0x1d8] sm:$0xff]
        %v2628 = vld [vmem:[%s3 + $0x1e0] sm:$0xff]
        %v2629 = vld [vmem:[%s3 + $0x1e8] sm:$0xff]
        %v2630 = vld [vmem:[%s3 + $0x1f0] sm:$0xff]
        %v2631 = vld [vmem:[%s3 + $0x1f8] sm:$0xff]
        %v2632 = vld [vmem:[%s4] sm:$0x3]
        %v2634 = vperm.slane %v2632, 0
        %v2635 = vperm.slane %v2632, 1
        %v2702 = vunpack.c.l.b16 %v2568
        %v2703 = vunpack.c.h.b16 %v2568
        %v2704 = vunpack.c.l.b16 %v2569
        %v2705 = vunpack.c.h.b16 %v2569
        %v2706 = vunpack.c.l.b16 %v2570
        %v2707 = vunpack.c.h.b16 %v2570
        %v2708 = vunpack.c.l.b16 %v2571
        %v2709 = vunpack.c.h.b16 %v2571
        %v2710 = vunpack.c.l.b16 %v2572
        %v2711 = vunpack.c.h.b16 %v2572
        %v2712 = vunpack.c.l.b16 %v2573
        %v2713 = vunpack.c.h.b16 %v2573
        %v2714 = vunpack.c.l.b16 %v2574
        %v2715 = vunpack.c.h.b16 %v2574
        %v2716 = vunpack.c.l.b16 %v2575
        %v2717 = vunpack.c.h.b16 %v2575
        %v2718 = vunpack.c.l.b16 %v2576
        %v2719 = vunpack.c.h.b16 %v2576
        %v2720 = vunpack.c.l.b16 %v2577
        %v2721 = vunpack.c.h.b16 %v2577
        %v2722 = vunpack.c.l.b16 %v2578
        %v2723 = vunpack.c.h.b16 %v2578
        %v2724 = vunpack.c.l.b16 %v2579
        %v2725 = vunpack.c.h.b16 %v2579
        %v2726 = vunpack.c.l.b16 %v2580
        %v2727 = vunpack.c.h.b16 %v2580
        %v2728 = vunpack.c.l.b16 %v2581
        %v2729 = vunpack.c.h.b16 %v2581
        %v2730 = vunpack.c.l.b16 %v2582
        %v2731 = vunpack.c.h.b16 %v2582
        %v2732 = vunpack.c.l.b16 %v2583
        %v2733 = vunpack.c.h.b16 %v2583
        %v2734 = vunpack.c.l.b16 %v2584
        %v2735 = vunpack.c.h.b16 %v2584
        %v2736 = vunpack.c.l.b16 %v2585
        %v2737 = vunpack.c.h.b16 %v2585
        %v2738 = vunpack.c.l.b16 %v2586
        %v2739 = vunpack.c.h.b16 %v2586
        %v2740 = vunpack.c.l.b16 %v2587
        %v2741 = vunpack.c.h.b16 %v2587
        %v2742 = vunpack.c.l.b16 %v2588
        %v2743 = vunpack.c.h.b16 %v2588
        %v2744 = vunpack.c.l.b16 %v2589
        %v2745 = vunpack.c.h.b16 %v2589
        %v2746 = vunpack.c.l.b16 %v2590
        %v2747 = vunpack.c.h.b16 %v2590
        %v2748 = vunpack.c.l.b16 %v2591
        %v2749 = vunpack.c.h.b16 %v2591
        %v2750 = vunpack.c.l.b16 %v2592
        %v2751 = vunpack.c.h.b16 %v2592
        %v2752 = vunpack.c.l.b16 %v2593
        %v2753 = vunpack.c.h.b16 %v2593
        %v2754 = vunpack.c.l.b16 %v2594
        %v2755 = vunpack.c.h.b16 %v2594
        %v2756 = vunpack.c.l.b16 %v2595
        %v2757 = vunpack.c.h.b16 %v2595
        %v2758 = vunpack.c.l.b16 %v2596
        %v2759 = vunpack.c.h.b16 %v2596
        %v2760 = vunpack.c.l.b16 %v2597
        %v2761 = vunpack.c.h.b16 %v2597
        %v2762 = vunpack.c.l.b16 %v2598
        %v2763 = vunpack.c.h.b16 %v2598
        %v2764 = vunpack.c.l.b16 %v2599
        %v2765 = vunpack.c.h.b16 %v2599
        %v2766 = vunpack.c.l.b16 %v2600
        %v2767 = vunpack.c.h.b16 %v2600
        %v2768 = vunpack.c.l.b16 %v2601
        %v2769 = vunpack.c.h.b16 %v2601
        %v2770 = vunpack.c.l.b16 %v2602
        %v2771 = vunpack.c.h.b16 %v2602
        %v2772 = vunpack.c.l.b16 %v2603
        %v2773 = vunpack.c.h.b16 %v2603
        %v2774 = vunpack.c.l.b16 %v2604
        %v2775 = vunpack.c.h.b16 %v2604
        %v2776 = vunpack.c.l.b16 %v2605
        %v2777 = vunpack.c.h.b16 %v2605
        %v2778 = vunpack.c.l.b16 %v2606
        %v2779 = vunpack.c.h.b16 %v2606
        %v2780 = vunpack.c.l.b16 %v2607
        %v2781 = vunpack.c.h.b16 %v2607
        %v2782 = vunpack.c.l.b16 %v2608
        %v2783 = vunpack.c.h.b16 %v2608
        %v2784 = vunpack.c.l.b16 %v2609
        %v2785 = vunpack.c.h.b16 %v2609
        %v2786 = vunpack.c.l.b16 %v2610
        %v2787 = vunpack.c.h.b16 %v2610
        %v2788 = vunpack.c.l.b16 %v2611
        %v2789 = vunpack.c.h.b16 %v2611
        %v2790 = vunpack.c.l.b16 %v2612
        %v2791 = vunpack.c.h.b16 %v2612
        %v2792 = vunpack.c.l.b16 %v2613
        %v2793 = vunpack.c.h.b16 %v2613
        %v2794 = vunpack.c.l.b16 %v2614
        %v2795 = vunpack.c.h.b16 %v2614
        %v2796 = vunpack.c.l.b16 %v2615
        %v2797 = vunpack.c.h.b16 %v2615
        %v2798 = vunpack.c.l.b16 %v2616
        %v2799 = vunpack.c.h.b16 %v2616
        %v2800 = vunpack.c.l.b16 %v2617
        %v2801 = vunpack.c.h.b16 %v2617
        %v2802 = vunpack.c.l.b16 %v2618
        %v2803 = vunpack.c.h.b16 %v2618
        %v2804 = vunpack.c.l.b16 %v2619
        %v2805 = vunpack.c.h.b16 %v2619
        %v2806 = vunpack.c.l.b16 %v2620
        %v2807 = vunpack.c.h.b16 %v2620
        %v2808 = vunpack.c.l.b16 %v2621
        %v2809 = vunpack.c.h.b16 %v2621
        %v2810 = vunpack.c.l.b16 %v2622
        %v2811 = vunpack.c.h.b16 %v2622
        %v2812 = vunpack.c.l.b16 %v2623
        %v2813 = vunpack.c.h.b16 %v2623
        %v2814 = vunpack.c.l.b16 %v2624
        %v2815 = vunpack.c.h.b16 %v2624
        %v2816 = vunpack.c.l.b16 %v2625
        %v2817 = vunpack.c.h.b16 %v2625
        %v2818 = vunpack.c.l.b16 %v2626
        %v2819 = vunpack.c.h.b16 %v2626
        %v2820 = vunpack.c.l.b16 %v2627
        %v2821 = vunpack.c.h.b16 %v2627
        %v2822 = vunpack.c.l.b16 %v2628
        %v2823 = vunpack.c.h.b16 %v2628
        %v2824 = vunpack.c.l.b16 %v2629
        %v2825 = vunpack.c.h.b16 %v2629
        %v2826 = vunpack.c.l.b16 %v2630
        %v2827 = vunpack.c.h.b16 %v2630
        %v2828 = vunpack.c.l.b16 %v2631
        %v2829 = vunpack.c.h.b16 %v2631
        %v2830 = vpack.c.b16 %v2704, %v2702
        %v2831 = vpack.c.b16 %v2705, %v2703
        %v2832 = vpack.c.b16 %v2708, %v2706
        %v2833 = vpack.c.b16 %v2709, %v2707
        %v2834 = vpack.c.b16 %v2712, %v2710
        %v2835 = vpack.c.b16 %v2713, %v2711
        %v2836 = vpack.c.b16 %v2716, %v2714
        %v2837 = vpack.c.b16 %v2717, %v2715
        %v2838 = vpack.c.b16 %v2720, %v2718
        %v2839 = vpack.c.b16 %v2721, %v2719
        %v2840 = vpack.c.b16 %v2724, %v2722
        %v2841 = vpack.c.b16 %v2725, %v2723
        %v2842 = vpack.c.b16 %v2728, %v2726
        %v2843 = vpack.c.b16 %v2729, %v2727
        %v2844 = vpack.c.b16 %v2732, %v2730
        %v2845 = vpack.c.b16 %v2733, %v2731
        %v2846 = vpack.c.b16 %v2736, %v2734
        %v2847 = vpack.c.b16 %v2737, %v2735
        %v2848 = vpack.c.b16 %v2740, %v2738
        %v2849 = vpack.c.b16 %v2741, %v2739
        %v2850 = vpack.c.b16 %v2744, %v2742
        %v2851 = vpack.c.b16 %v2745, %v2743
        %v2852 = vpack.c.b16 %v2748, %v2746
        %v2853 = vpack.c.b16 %v2749, %v2747
        %v2854 = vpack.c.b16 %v2752, %v2750
        %v2855 = vpack.c.b16 %v2753, %v2751
        %v2856 = vpack.c.b16 %v2756, %v2754
        %v2857 = vpack.c.b16 %v2757, %v2755
        %v2858 = vpack.c.b16 %v2760, %v2758
        %v2859 = vpack.c.b16 %v2761, %v2759
        %v2860 = vpack.c.b16 %v2764, %v2762
        %v2861 = vpack.c.b16 %v2765, %v2763
        %v2862 = vpack.c.b16 %v2768, %v2766
        %v2863 = vpack.c.b16 %v2769, %v2767
        %v2864 = vpack.c.b16 %v2772, %v2770
        %v2865 = vpack.c.b16 %v2773, %v2771
        %v2866 = vpack.c.b16 %v2776, %v2774
        %v2867 = vpack.c.b16 %v2777, %v2775
        %v2868 = vpack.c.b16 %v2780, %v2778
        %v2869 = vpack.c.b16 %v2781, %v2779
        %v2870 = vpack.c.b16 %v2784, %v2782
        %v2871 = vpack.c.b16 %v2785, %v2783
        %v2872 = vpack.c.b16 %v2788, %v2786
        %v2873 = vpack.c.b16 %v2789, %v2787
        %v2874 = vpack.c.b16 %v2792, %v2790
        %v2875 = vpack.c.b16 %v2793, %v2791
        %v2876 = vpack.c.b16 %v2796, %v2794
        %v2877 = vpack.c.b16 %v2797, %v2795
        %v2878 = vpack.c.b16 %v2800, %v2798
        %v2879 = vpack.c.b16 %v2801, %v2799
        %v2880 = vpack.c.b16 %v2804, %v2802
        %v2881 = vpack.c.b16 %v2805, %v2803
        %v2882 = vpack.c.b16 %v2808, %v2806
        %v2883 = vpack.c.b16 %v2809, %v2807
        %v2884 = vpack.c.b16 %v2812, %v2810
        %v2885 = vpack.c.b16 %v2813, %v2811
        %v2886 = vpack.c.b16 %v2816, %v2814
        %v2887 = vpack.c.b16 %v2817, %v2815
        %v2888 = vpack.c.b16 %v2820, %v2818
        %v2889 = vpack.c.b16 %v2821, %v2819
        %v2890 = vpack.c.b16 %v2824, %v2822
        %v2891 = vpack.c.b16 %v2825, %v2823
        %v2892 = vpack.c.b16 %v2828, %v2826
        %v2893 = vpack.c.b16 %v2829, %v2827
        %2958 = vmatpush.bf16.msra.mxu0 %v2844
        %2959 = vmatpush.bf16.msra.mxu0 %v2842
        %2960 = vmatpush.bf16.msra.mxu0 %v2840
        %2961 = vmatpush.bf16.msra.mxu0 %v2838
        %2962 = vmatpush.bf16.msra.mxu0 %v2836
        %2963 = vmatpush.bf16.msra.mxu0 %v2834
        %2964 = vmatpush.bf16.msra.mxu0 %v2832
        %2965 = vmatpush.bf16.msra.mxu0 %v2830
        %2966 = vmatmul.bf16.gmra.mxu0 %v2536
        %v2967 = vpop.f32.mrf.mxu0
        %v2968 = vadd.f32 %v2634, %v2967
        %v2969 = vpop.f32.mrf.mxu0
        %v2970 = vadd.f32 %v2634, %v2969
        %2971 = vmatmul.bf16.gmra.mxu0 %v2540
        %v2972 = vpop.f32.mrf.mxu0
        %v2973 = vadd.f32 %v2634, %v2972
        %v2974 = vpop.f32.mrf.mxu0
        %v2975 = vadd.f32 %v2634, %v2974
        %2976 = vmatmul.bf16.gmra.mxu0 %v2544
        %v2977 = vpop.f32.mrf.mxu0
        %v2978 = vadd.f32 %v2634, %v2977
        %v2979 = vpop.f32.mrf.mxu0
        %v2980 = vadd.f32 %v2634, %v2979
        %2981 = vmatmul.bf16.gmra.mxu0 %v2548
        %v2982 = vpop.f32.mrf.mxu0
        %v2983 = vadd.f32 %v2634, %v2982
        %v2984 = vpop.f32.mrf.mxu0
        %v2985 = vadd.f32 %v2634, %v2984
        %2986 = vmatmul.bf16.gmra.mxu0 %v2552
        %v2987 = vpop.f32.mrf.mxu0
        %v2988 = vadd.f32 %v2634, %v2987
        %v2989 = vpop.f32.mrf.mxu0
        %v2990 = vadd.f32 %v2634, %v2989
        %2991 = vmatmul.bf16.gmra.mxu0 %v2556
        %v2992 = vpop.f32.mrf.mxu0
        %v2993 = vadd.f32 %v2634, %v2992
        %v2994 = vpop.f32.mrf.mxu0
        %v2995 = vadd.f32 %v2634, %v2994
        %2996 = vmatmul.bf16.gmra.mxu0 %v2560
        %v2997 = vpop.f32.mrf.mxu0
        %v2998 = vadd.f32 %v2634, %v2997
        %v2999 = vpop.f32.mrf.mxu0
        %v3000 = vadd.f32 %v2634, %v2999
        %3001 = vmatmul.bf16.gmra.mxu0 %v2564
        %v3002 = vpop.f32.mrf.mxu0
        %v3003 = vadd.f32 %v2634, %v3002
        %v3004 = vpop.f32.mrf.mxu0
        %v3005 = vadd.f32 %v2634, %v3004
        %3006 = vdwg.mxu0
        %3007 = vmatpush.bf16.msra.mxu0 %v2860
        %3008 = vmatpush.bf16.msra.mxu0 %v2858
        %3009 = vmatpush.bf16.msra.mxu0 %v2856
        %3010 = vmatpush.bf16.msra.mxu0 %v2854
        %3011 = vmatpush.bf16.msra.mxu0 %v2852
        %3012 = vmatpush.bf16.msra.mxu0 %v2850
        %3013 = vmatpush.bf16.msra.mxu0 %v2848
        %3014 = vmatpush.bf16.msra.mxu0 %v2846
        %3015 = vmatmul.bf16.gmra.mxu0 %v2537
        %v3016 = vpop.f32.mrf.mxu0
        %v3017 = vadd.f32 %v2968, %v3016
        %v3018 = vpop.f32.mrf.mxu0
        %v3019 = vadd.f32 %v2970, %v3018
        %3020 = vmatmul.bf16.gmra.mxu0 %v2541
        %v3021 = vpop.f32.mrf.mxu0
        %v3022 = vadd.f32 %v2973, %v3021
        %v3023 = vpop.f32.mrf.mxu0
        %v3024 = vadd.f32 %v2975, %v3023
        %3025 = vmatmul.bf16.gmra.mxu0 %v2545
        %v3026 = vpop.f32.mrf.mxu0
        %v3027 = vadd.f32 %v2978, %v3026
        %v3028 = vpop.f32.mrf.mxu0
        %v3029 = vadd.f32 %v2980, %v3028
        %3030 = vmatmul.bf16.gmra.mxu0 %v2549
        %v3031 = vpop.f32.mrf.mxu0
        %v3032 = vadd.f32 %v2983, %v3031
        %v3033 = vpop.f32.mrf.mxu0
        %v3034 = vadd.f32 %v2985, %v3033
        %3035 = vmatmul.bf16.gmra.mxu0 %v2553
        %v3036 = vpop.f32.mrf.mxu0
        %v3037 = vadd.f32 %v2988, %v3036
        %v3038 = vpop.f32.mrf.mxu0
        %v3039 = vadd.f32 %v2990, %v3038
        %3040 = vmatmul.bf16.gmra.mxu0 %v2557
        %v3041 = vpop.f32.mrf.mxu0
        %v3042 = vadd.f32 %v2993, %v3041
        %v3043 = vpop.f32.mrf.mxu0
        %v3044 = vadd.f32 %v2995, %v3043
        %3045 = vmatmul.bf16.gmra.mxu0 %v2561
        %v3046 = vpop.f32.mrf.mxu0
        %v3047 = vadd.f32 %v2998, %v3046
        %v3048 = vpop.f32.mrf.mxu0
        %v3049 = vadd.f32 %v3000, %v3048
        %3050 = vmatmul.bf16.gmra.mxu0 %v2565
        %v3051 = vpop.f32.mrf.mxu0
        %v3052 = vadd.f32 %v3003, %v3051
        %v3053 = vpop.f32.mrf.mxu0
        %v3054 = vadd.f32 %v3005, %v3053
        %3055 = vdwg.mxu0
        %3056 = vmatpush.bf16.msra.mxu0 %v2876
        %3057 = vmatpush.bf16.msra.mxu0 %v2874
        %3058 = vmatpush.bf16.msra.mxu0 %v2872
        %3059 = vmatpush.bf16.msra.mxu0 %v2870
        %3060 = vmatpush.bf16.msra.mxu0 %v2868
        %3061 = vmatpush.bf16.msra.mxu0 %v2866
        %3062 = vmatpush.bf16.msra.mxu0 %v2864
        %3063 = vmatpush.bf16.msra.mxu0 %v2862
        %3064 = vmatmul.bf16.gmra.mxu0 %v2538
        %v3065 = vpop.f32.mrf.mxu0
        %v3066 = vadd.f32 %v3017, %v3065
        %v3067 = vpop.f32.mrf.mxu0
        %v3068 = vadd.f32 %v3019, %v3067
        %3069 = vmatmul.bf16.gmra.mxu0 %v2542
        %v3070 = vpop.f32.mrf.mxu0
        %v3071 = vadd.f32 %v3022, %v3070
        %v3072 = vpop.f32.mrf.mxu0
        %v3073 = vadd.f32 %v3024, %v3072
        %3074 = vmatmul.bf16.gmra.mxu0 %v2546
        %v3075 = vpop.f32.mrf.mxu0
        %v3076 = vadd.f32 %v3027, %v3075
        %v3077 = vpop.f32.mrf.mxu0
        %v3078 = vadd.f32 %v3029, %v3077
        %3079 = vmatmul.bf16.gmra.mxu0 %v2550
        %v3080 = vpop.f32.mrf.mxu0
        %v3081 = vadd.f32 %v3032, %v3080
        %v3082 = vpop.f32.mrf.mxu0
        %v3083 = vadd.f32 %v3034, %v3082
        %3084 = vmatmul.bf16.gmra.mxu0 %v2554
        %v3085 = vpop.f32.mrf.mxu0
        %v3086 = vadd.f32 %v3037, %v3085
        %v3087 = vpop.f32.mrf.mxu0
        %v3088 = vadd.f32 %v3039, %v3087
        %3089 = vmatmul.bf16.gmra.mxu0 %v2558
        %v3090 = vpop.f32.mrf.mxu0
        %v3091 = vadd.f32 %v3042, %v3090
        %v3092 = vpop.f32.mrf.mxu0
        %v3093 = vadd.f32 %v3044, %v3092
        %3094 = vmatmul.bf16.gmra.mxu0 %v2562
        %v3095 = vpop.f32.mrf.mxu0
        %v3096 = vadd.f32 %v3047, %v3095
        %v3097 = vpop.f32.mrf.mxu0
        %v3098 = vadd.f32 %v3049, %v3097
        %3099 = vmatmul.bf16.gmra.mxu0 %v2566
        %v3100 = vpop.f32.mrf.mxu0
        %v3101 = vadd.f32 %v3052, %v3100
        %v3102 = vpop.f32.mrf.mxu0
        %v3103 = vadd.f32 %v3054, %v3102
        %3104 = vdwg.mxu0
        %3105 = vmatpush.bf16.msra.mxu0 %v2892
        %3106 = vmatpush.bf16.msra.mxu0 %v2890
        %3107 = vmatpush.bf16.msra.mxu0 %v2888
        %3108 = vmatpush.bf16.msra.mxu0 %v2886
        %3109 = vmatpush.bf16.msra.mxu0 %v2884
        %3110 = vmatpush.bf16.msra.mxu0 %v2882
        %3111 = vmatpush.bf16.msra.mxu0 %v2880
        %3112 = vmatpush.bf16.msra.mxu0 %v2878
        %3113 = vmatmul.bf16.gmra.mxu0 %v2539
        %v3114 = vpop.f32.mrf.mxu0
        %v3115 = vadd.f32 %v3066, %v3114
        %v3116 = vpop.f32.mrf.mxu0
        %v3117 = vadd.f32 %v3068, %v3116
        %3118 = vmatmul.bf16.gmra.mxu0 %v2543
        %v3119 = vpop.f32.mrf.mxu0
        %v3120 = vadd.f32 %v3071, %v3119
        %v3121 = vpop.f32.mrf.mxu0
        %v3122 = vadd.f32 %v3073, %v3121
        %3123 = vmatmul.bf16.gmra.mxu0 %v2547
        %v3124 = vpop.f32.mrf.mxu0
        %v3125 = vadd.f32 %v3076, %v3124
        %v3126 = vpop.f32.mrf.mxu0
        %v3127 = vadd.f32 %v3078, %v3126
        %3128 = vmatmul.bf16.gmra.mxu0 %v2551
        %v3129 = vpop.f32.mrf.mxu0
        %v3130 = vadd.f32 %v3081, %v3129
        %v3131 = vpop.f32.mrf.mxu0
        %v3132 = vadd.f32 %v3083, %v3131
        %3133 = vmatmul.bf16.gmra.mxu0 %v2555
        %v3134 = vpop.f32.mrf.mxu0
        %v3135 = vadd.f32 %v3086, %v3134
        %v3136 = vpop.f32.mrf.mxu0
        %v3137 = vadd.f32 %v3088, %v3136
        %3138 = vmatmul.bf16.gmra.mxu0 %v2559
        %v3139 = vpop.f32.mrf.mxu0
        %v3140 = vadd.f32 %v3091, %v3139
        %v3141 = vpop.f32.mrf.mxu0
        %v3142 = vadd.f32 %v3093, %v3141
        %3143 = vmatmul.bf16.gmra.mxu0 %v2563
        %v3144 = vpop.f32.mrf.mxu0
        %v3145 = vadd.f32 %v3096, %v3144
        %v3146 = vpop.f32.mrf.mxu0
        %v3147 = vadd.f32 %v3098, %v3146
        %3148 = vmatmul.bf16.gmra.mxu0 %v2567
        %v3149 = vpop.f32.mrf.mxu0
        %v3150 = vadd.f32 %v3101, %v3149
        %v3151 = vpop.f32.mrf.mxu0
        %v3152 = vadd.f32 %v3103, %v3151
        %3153 = vdwg.mxu0
        %3154 = vmatpush.bf16.msra.mxu0 %v2845
        %3155 = vmatpush.bf16.msra.mxu0 %v2843
        %3156 = vmatpush.bf16.msra.mxu0 %v2841
        %3157 = vmatpush.bf16.msra.mxu0 %v2839
        %3158 = vmatpush.bf16.msra.mxu0 %v2837
        %3159 = vmatpush.bf16.msra.mxu0 %v2835
        %3160 = vmatpush.bf16.msra.mxu0 %v2833
        %3161 = vmatpush.bf16.msra.mxu0 %v2831
        %3162 = vmatmul.bf16.gmra.mxu0 %v2536
        %v3163 = vpop.f32.mrf.mxu0
        %v3164 = vadd.f32 %v2635, %v3163
        %v3165 = vpop.f32.mrf.mxu0
        %v3166 = vadd.f32 %v2635, %v3165
        %3167 = vmatmul.bf16.gmra.mxu0 %v2540
        %v3168 = vpop.f32.mrf.mxu0
        %v3169 = vadd.f32 %v2635, %v3168
        %v3170 = vpop.f32.mrf.mxu0
        %v3171 = vadd.f32 %v2635, %v3170
        %3172 = vmatmul.bf16.gmra.mxu0 %v2544
        %v3173 = vpop.f32.mrf.mxu0
        %v3174 = vadd.f32 %v2635, %v3173
        %v3175 = vpop.f32.mrf.mxu0
        %v3176 = vadd.f32 %v2635, %v3175
        %3177 = vmatmul.bf16.gmra.mxu0 %v2548
        %v3178 = vpop.f32.mrf.mxu0
        %v3179 = vadd.f32 %v2635, %v3178
        %v3180 = vpop.f32.mrf.mxu0
        %v3181 = vadd.f32 %v2635, %v3180
        %3182 = vmatmul.bf16.gmra.mxu0 %v2552
        %v3183 = vpop.f32.mrf.mxu0
        %v3184 = vadd.f32 %v2635, %v3183
        %v3185 = vpop.f32.mrf.mxu0
        %v3186 = vadd.f32 %v2635, %v3185
        %3187 = vmatmul.bf16.gmra.mxu0 %v2556
        %v3188 = vpop.f32.mrf.mxu0
        %v3189 = vadd.f32 %v2635, %v3188
        %v3190 = vpop.f32.mrf.mxu0
        %v3191 = vadd.f32 %v2635, %v3190
        %3192 = vmatmul.bf16.gmra.mxu0 %v2560
        %v3193 = vpop.f32.mrf.mxu0
        %v3194 = vadd.f32 %v2635, %v3193
        %v3195 = vpop.f32.mrf.mxu0
        %v3196 = vadd.f32 %v2635, %v3195
        %3197 = vmatmul.bf16.gmra.mxu0 %v2564
        %v3198 = vpop.f32.mrf.mxu0
        %v3199 = vadd.f32 %v2635, %v3198
        %v3200 = vpop.f32.mrf.mxu0
        %v3201 = vadd.f32 %v2635, %v3200
        %3202 = vdwg.mxu0
        %3203 = vmatpush.bf16.msra.mxu0 %v2861
        %3204 = vmatpush.bf16.msra.mxu0 %v2859
        %3205 = vmatpush.bf16.msra.mxu0 %v2857
        %3206 = vmatpush.bf16.msra.mxu0 %v2855
        %3207 = vmatpush.bf16.msra.mxu0 %v2853
        %3208 = vmatpush.bf16.msra.mxu0 %v2851
        %3209 = vmatpush.bf16.msra.mxu0 %v2849
        %3210 = vmatpush.bf16.msra.mxu0 %v2847
        %3211 = vmatmul.bf16.gmra.mxu0 %v2537
        %v3212 = vpop.f32.mrf.mxu0
        %v3213 = vadd.f32 %v3164, %v3212
        %v3214 = vpop.f32.mrf.mxu0
        %v3215 = vadd.f32 %v3166, %v3214
        %3216 = vmatmul.bf16.gmra.mxu0 %v2541
        %v3217 = vpop.f32.mrf.mxu0
        %v3218 = vadd.f32 %v3169, %v3217
        %v3219 = vpop.f32.mrf.mxu0
        %v3220 = vadd.f32 %v3171, %v3219
        %3221 = vmatmul.bf16.gmra.mxu0 %v2545
        %v3222 = vpop.f32.mrf.mxu0
        %v3223 = vadd.f32 %v3174, %v3222
        %v3224 = vpop.f32.mrf.mxu0
        %v3225 = vadd.f32 %v3176, %v3224
        %3226 = vmatmul.bf16.gmra.mxu0 %v2549
        %v3227 = vpop.f32.mrf.mxu0
        %v3228 = vadd.f32 %v3179, %v3227
        %v3229 = vpop.f32.mrf.mxu0
        %v3230 = vadd.f32 %v3181, %v3229
        %3231 = vmatmul.bf16.gmra.mxu0 %v2553
        %v3232 = vpop.f32.mrf.mxu0
        %v3233 = vadd.f32 %v3184, %v3232
        %v3234 = vpop.f32.mrf.mxu0
        %v3235 = vadd.f32 %v3186, %v3234
        %3236 = vmatmul.bf16.gmra.mxu0 %v2557
        %v3237 = vpop.f32.mrf.mxu0
        %v3238 = vadd.f32 %v3189, %v3237
        %v3239 = vpop.f32.mrf.mxu0
        %v3240 = vadd.f32 %v3191, %v3239
        %3241 = vmatmul.bf16.gmra.mxu0 %v2561
        %v3242 = vpop.f32.mrf.mxu0
        %v3243 = vadd.f32 %v3194, %v3242
        %v3244 = vpop.f32.mrf.mxu0
        %v3245 = vadd.f32 %v3196, %v3244
        %3246 = vmatmul.bf16.gmra.mxu0 %v2565
        %v3247 = vpop.f32.mrf.mxu0
        %v3248 = vadd.f32 %v3199, %v3247
        %v3249 = vpop.f32.mrf.mxu0
        %v3250 = vadd.f32 %v3201, %v3249
        %3251 = vdwg.mxu0
        %3252 = vmatpush.bf16.msra.mxu0 %v2877
        %3253 = vmatpush.bf16.msra.mxu0 %v2875
        %3254 = vmatpush.bf16.msra.mxu0 %v2873
        %3255 = vmatpush.bf16.msra.mxu0 %v2871
        %3256 = vmatpush.bf16.msra.mxu0 %v2869
        %3257 = vmatpush.bf16.msra.mxu0 %v2867
        %3258 = vmatpush.bf16.msra.mxu0 %v2865
        %3259 = vmatpush.bf16.msra.mxu0 %v2863
        %3260 = vmatmul.bf16.gmra.mxu0 %v2538
        %v3261 = vpop.f32.mrf.mxu0
        %v3262 = vadd.f32 %v3213, %v3261
        %v3263 = vpop.f32.mrf.mxu0
        %v3264 = vadd.f32 %v3215, %v3263
        %3265 = vmatmul.bf16.gmra.mxu0 %v2542
        %v3266 = vpop.f32.mrf.mxu0
        %v3267 = vadd.f32 %v3218, %v3266
        %v3268 = vpop.f32.mrf.mxu0
        %v3269 = vadd.f32 %v3220, %v3268
        %3270 = vmatmul.bf16.gmra.mxu0 %v2546
        %v3271 = vpop.f32.mrf.mxu0
        %v3272 = vadd.f32 %v3223, %v3271
        %v3273 = vpop.f32.mrf.mxu0
        %v3274 = vadd.f32 %v3225, %v3273
        %3275 = vmatmul.bf16.gmra.mxu0 %v2550
        %v3276 = vpop.f32.mrf.mxu0
        %v3277 = vadd.f32 %v3228, %v3276
        %v3278 = vpop.f32.mrf.mxu0
        %v3279 = vadd.f32 %v3230, %v3278
        %3280 = vmatmul.bf16.gmra.mxu0 %v2554
        %v3281 = vpop.f32.mrf.mxu0
        %v3282 = vadd.f32 %v3233, %v3281
        %v3283 = vpop.f32.mrf.mxu0
        %v3284 = vadd.f32 %v3235, %v3283
        %3285 = vmatmul.bf16.gmra.mxu0 %v2558
        %v3286 = vpop.f32.mrf.mxu0
        %v3287 = vadd.f32 %v3238, %v3286
        %v3288 = vpop.f32.mrf.mxu0
        %v3289 = vadd.f32 %v3240, %v3288
        %3290 = vmatmul.bf16.gmra.mxu0 %v2562
        %v3291 = vpop.f32.mrf.mxu0
        %v3292 = vadd.f32 %v3243, %v3291
        %v3293 = vpop.f32.mrf.mxu0
        %v3294 = vadd.f32 %v3245, %v3293
        %3295 = vmatmul.bf16.gmra.mxu0 %v2566
        %v3296 = vpop.f32.mrf.mxu0
        %v3297 = vadd.f32 %v3248, %v3296
        %v3298 = vpop.f32.mrf.mxu0
        %v3299 = vadd.f32 %v3250, %v3298
        %3300 = vdwg.mxu0
        %3301 = vmatpush.bf16.msra.mxu0 %v2893
        %3302 = vmatpush.bf16.msra.mxu0 %v2891
        %3303 = vmatpush.bf16.msra.mxu0 %v2889
        %3304 = vmatpush.bf16.msra.mxu0 %v2887
        %3305 = vmatpush.bf16.msra.mxu0 %v2885
        %3306 = vmatpush.bf16.msra.mxu0 %v2883
        %3307 = vmatpush.bf16.msra.mxu0 %v2881
        %3308 = vmatpush.bf16.msra.mxu0 %v2879
        %3309 = vmatmul.bf16.gmra.mxu0 %v2539
        %v3310 = vpop.f32.mrf.mxu0
        %v3311 = vadd.f32 %v3262, %v3310
        %v3312 = vpop.f32.mrf.mxu0
        %v3313 = vadd.f32 %v3264, %v3312
        %3314 = vmatmul.bf16.gmra.mxu0 %v2543
        %v3315 = vpop.f32.mrf.mxu0
        %v3316 = vadd.f32 %v3267, %v3315
        %v3317 = vpop.f32.mrf.mxu0
        %v3318 = vadd.f32 %v3269, %v3317
        %3319 = vmatmul.bf16.gmra.mxu0 %v2547
        %v3320 = vpop.f32.mrf.mxu0
        %v3321 = vadd.f32 %v3272, %v3320
        %v3322 = vpop.f32.mrf.mxu0
        %v3323 = vadd.f32 %v3274, %v3322
        %3324 = vmatmul.bf16.gmra.mxu0 %v2551
        %v3325 = vpop.f32.mrf.mxu0
        %v3326 = vadd.f32 %v3277, %v3325
        %v3327 = vpop.f32.mrf.mxu0
        %v3328 = vadd.f32 %v3279, %v3327
        %3329 = vmatmul.bf16.gmra.mxu0 %v2555
        %v3330 = vpop.f32.mrf.mxu0
        %v3331 = vadd.f32 %v3282, %v3330
        %v3332 = vpop.f32.mrf.mxu0
        %v3333 = vadd.f32 %v3284, %v3332
        %3334 = vmatmul.bf16.gmra.mxu0 %v2559
        %v3335 = vpop.f32.mrf.mxu0
        %v3336 = vadd.f32 %v3287, %v3335
        %v3337 = vpop.f32.mrf.mxu0
        %v3338 = vadd.f32 %v3289, %v3337
        %3339 = vmatmul.bf16.gmra.mxu0 %v2563
        %v3340 = vpop.f32.mrf.mxu0
        %v3341 = vadd.f32 %v3292, %v3340
        %v3342 = vpop.f32.mrf.mxu0
        %v3343 = vadd.f32 %v3294, %v3342
        %3344 = vmatmul.bf16.gmra.mxu0 %v2567
        %v3345 = vpop.f32.mrf.mxu0
        %v3346 = vadd.f32 %v3297, %v3345
        %v3347 = vpop.f32.mrf.mxu0
        %v3348 = vadd.f32 %v3299, %v3347
        %3349 = vdwg.mxu0
        %v3350 = vmax.f32 %v3115, 0.0
        %v3351 = vmax.f32 %v3311, 0.0
        %v3352 = vmax.f32 %v3117, 0.0
        %v3353 = vmax.f32 %v3313, 0.0
        %v3354 = vmax.f32 %v3120, 0.0
        %v3355 = vmax.f32 %v3316, 0.0
        %v3356 = vmax.f32 %v3122, 0.0
        %v3357 = vmax.f32 %v3318, 0.0
        %v3358 = vmax.f32 %v3125, 0.0
        %v3359 = vmax.f32 %v3321, 0.0
        %v3360 = vmax.f32 %v3127, 0.0
        %v3361 = vmax.f32 %v3323, 0.0
        %v3362 = vmax.f32 %v3130, 0.0
        %v3363 = vmax.f32 %v3326, 0.0
        %v3364 = vmax.f32 %v3132, 0.0
        %v3365 = vmax.f32 %v3328, 0.0
        %v3366 = vmax.f32 %v3135, 0.0
        %v3367 = vmax.f32 %v3331, 0.0
        %v3368 = vmax.f32 %v3137, 0.0
        %v3369 = vmax.f32 %v3333, 0.0
        %v3370 = vmax.f32 %v3140, 0.0
        %v3371 = vmax.f32 %v3336, 0.0
        %v3372 = vmax.f32 %v3142, 0.0
        %v3373 = vmax.f32 %v3338, 0.0
        %v3374 = vmax.f32 %v3145, 0.0
        %v3375 = vmax.f32 %v3341, 0.0
        %v3376 = vmax.f32 %v3147, 0.0
        %v3377 = vmax.f32 %v3343, 0.0
        %v3378 = vmax.f32 %v3150, 0.0
        %v3379 = vmax.f32 %v3346, 0.0
        %v3380 = vmax.f32 %v3152, 0.0
        %v3381 = vmax.f32 %v3348, 0.0
        %v3382 = vpack.c.bf16 %v3352, %v3350
        %v3383 = vpack.c.bf16 %v3353, %v3351
        %v3384 = vpack.c.bf16 %v3356, %v3354
        %v3385 = vpack.c.bf16 %v3357, %v3355
        %v3386 = vpack.c.bf16 %v3360, %v3358
        %v3387 = vpack.c.bf16 %v3361, %v3359
        %v3388 = vpack.c.bf16 %v3364, %v3362
        %v3389 = vpack.c.bf16 %v3365, %v3363
        %v3390 = vpack.c.bf16 %v3368, %v3366
        %v3391 = vpack.c.bf16 %v3369, %v3367
        %v3392 = vpack.c.bf16 %v3372, %v3370
        %v3393 = vpack.c.bf16 %v3373, %v3371
        %v3394 = vpack.c.bf16 %v3376, %v3374
        %v3395 = vpack.c.bf16 %v3377, %v3375
        %v3396 = vpack.c.bf16 %v3380, %v3378
        %v3397 = vpack.c.bf16 %v3381, %v3379
        %v3398 = vld [vmem:[%s5] sm:$0xf]
        %v3399 = vld [vmem:[%s5 + $0x4] sm:$0xf]
        %v3400 = vld [vmem:[%s5 + $0x8] sm:$0xf]
        %v3401 = vld [vmem:[%s5 + $0xc] sm:$0xf]
        %v3402 = vld [vmem:[%s5 + $0x10] sm:$0xf]
        %v3403 = vld [vmem:[%s5 + $0x14] sm:$0xf]
        %v3404 = vld [vmem:[%s5 + $0x18] sm:$0xf]
        %v3405 = vld [vmem:[%s5 + $0x1c] sm:$0xf]
        %v3406 = vld [vmem:[%s5 + $0x20] sm:$0xf]
        %v3407 = vld [vmem:[%s5 + $0x24] sm:$0xf]
        %v3408 = vld [vmem:[%s5 + $0x28] sm:$0xf]
        %v3409 = vld [vmem:[%s5 + $0x2c] sm:$0xf]
        %v3410 = vld [vmem:[%s5 + $0x30] sm:$0xf]
        %v3411 = vld [vmem:[%s5 + $0x34] sm:$0xf]
        %v3412 = vld [vmem:[%s5 + $0x38] sm:$0xf]
        %v3413 = vld [vmem:[%s5 + $0x3c] sm:$0xf]
        %v3414 = vld [vmem:[%s5 + $0x40] sm:$0xf]
        %v3415 = vld [vmem:[%s5 + $0x44] sm:$0xf]
        %v3416 = vld [vmem:[%s5 + $0x48] sm:$0xf]
        %v3417 = vld [vmem:[%s5 + $0x4c] sm:$0xf]
        %v3418 = vld [vmem:[%s5 + $0x50] sm:$0xf]
        %v3419 = vld [vmem:[%s5 + $0x54] sm:$0xf]
        %v3420 = vld [vmem:[%s5 + $0x58] sm:$0xf]
        %v3421 = vld [vmem:[%s5 + $0x5c] sm:$0xf]
        %v3422 = vld [vmem:[%s5 + $0x60] sm:$0xf]
        %v3423 = vld [vmem:[%s5 + $0x64] sm:$0xf]
        %v3424 = vld [vmem:[%s5 + $0x68] sm:$0xf]
        %v3425 = vld [vmem:[%s5 + $0x6c] sm:$0xf]
        %v3426 = vld [vmem:[%s5 + $0x70] sm:$0xf]
        %v3427 = vld [vmem:[%s5 + $0x74] sm:$0xf]
        %v3428 = vld [vmem:[%s5 + $0x78] sm:$0xf]
        %v3429 = vld [vmem:[%s5 + $0x7c] sm:$0xf]
        %v3430 = vld [vmem:[#allocation5] sm:$0x1]
        %v3432 = vperm.slane %v3430, 0
        %v3466 = vunpack.c.l.b16 %v3398
        %v3467 = vunpack.c.l.b16 %v3399
        %v3468 = vunpack.c.l.b16 %v3400
        %v3469 = vunpack.c.l.b16 %v3401
        %v3470 = vunpack.c.l.b16 %v3402
        %v3471 = vunpack.c.l.b16 %v3403
        %v3472 = vunpack.c.l.b16 %v3404
        %v3473 = vunpack.c.l.b16 %v3405
        %v3474 = vunpack.c.l.b16 %v3406
        %v3475 = vunpack.c.l.b16 %v3407
        %v3476 = vunpack.c.l.b16 %v3408
        %v3477 = vunpack.c.l.b16 %v3409
        %v3478 = vunpack.c.l.b16 %v3410
        %v3479 = vunpack.c.l.b16 %v3411
        %v3480 = vunpack.c.l.b16 %v3412
        %v3481 = vunpack.c.l.b16 %v3413
        %v3482 = vunpack.c.l.b16 %v3414
        %v3483 = vunpack.c.l.b16 %v3415
        %v3484 = vunpack.c.l.b16 %v3416
        %v3485 = vunpack.c.l.b16 %v3417
        %v3486 = vunpack.c.l.b16 %v3418
        %v3487 = vunpack.c.l.b16 %v3419
        %v3488 = vunpack.c.l.b16 %v3420
        %v3489 = vunpack.c.l.b16 %v3421
        %v3490 = vunpack.c.l.b16 %v3422
        %v3491 = vunpack.c.l.b16 %v3423
        %v3492 = vunpack.c.l.b16 %v3424
        %v3493 = vunpack.c.l.b16 %v3425
        %v3494 = vunpack.c.l.b16 %v3426
        %v3495 = vunpack.c.l.b16 %v3427
        %v3496 = vunpack.c.l.b16 %v3428
        %v3497 = vunpack.c.l.b16 %v3429
        %v3498 = vpack.c.b16 %v3467, %v3466
        %v3499 = vpack.c.b16 %v3469, %v3468
        %v3500 = vpack.c.b16 %v3471, %v3470
        %v3501 = vpack.c.b16 %v3473, %v3472
        %v3502 = vpack.c.b16 %v3475, %v3474
        %v3503 = vpack.c.b16 %v3477, %v3476
        %v3504 = vpack.c.b16 %v3479, %v3478
        %v3505 = vpack.c.b16 %v3481, %v3480
        %v3506 = vpack.c.b16 %v3483, %v3482
        %v3507 = vpack.c.b16 %v3485, %v3484
        %v3508 = vpack.c.b16 %v3487, %v3486
        %v3509 = vpack.c.b16 %v3489, %v3488
        %v3510 = vpack.c.b16 %v3491, %v3490
        %v3511 = vpack.c.b16 %v3493, %v3492
        %v3512 = vpack.c.b16 %v3495, %v3494
        %v3513 = vpack.c.b16 %v3497, %v3496
        %3530 = vmatpush.bf16.msra.mxu0 %v3505
        %3531 = vmatpush.bf16.msra.mxu0 %v3504
        %3532 = vmatpush.bf16.msra.mxu0 %v3503
        %3533 = vmatpush.bf16.msra.mxu0 %v3502
        %3534 = vmatpush.bf16.msra.mxu0 %v3501
        %3535 = vmatpush.bf16.msra.mxu0 %v3500
        %3536 = vmatpush.bf16.msra.mxu0 %v3499
        %3537 = vmatpush.bf16.msra.mxu0 %v3498
        %3538 = vmatmul.bf16.gmra.mxu0 %v3382
        %v3539 = vpop.f32.mrf.mxu0
        %v3540 = vadd.f32 %v3432, %v3539
        %v3541 = vpop.f32.mrf.mxu0
        %v3542 = vadd.f32 %v3432, %v3541
        %3543 = vmatmul.bf16.gmra.mxu0 %v3384
        %v3544 = vpop.f32.mrf.mxu0
        %v3545 = vadd.f32 %v3432, %v3544
        %v3546 = vpop.f32.mrf.mxu0
        %v3547 = vadd.f32 %v3432, %v3546
        %3548 = vmatmul.bf16.gmra.mxu0 %v3386
        %v3549 = vpop.f32.mrf.mxu0
        %v3550 = vadd.f32 %v3432, %v3549
        %v3551 = vpop.f32.mrf.mxu0
        %v3552 = vadd.f32 %v3432, %v3551
        %3553 = vmatmul.bf16.gmra.mxu0 %v3388
        %v3554 = vpop.f32.mrf.mxu0
        %v3555 = vadd.f32 %v3432, %v3554
        %v3556 = vpop.f32.mrf.mxu0
        %v3557 = vadd.f32 %v3432, %v3556
        %3558 = vmatmul.bf16.gmra.mxu0 %v3390
        %v3559 = vpop.f32.mrf.mxu0
        %v3560 = vadd.f32 %v3432, %v3559
        %v3561 = vpop.f32.mrf.mxu0
        %v3562 = vadd.f32 %v3432, %v3561
        %3563 = vmatmul.bf16.gmra.mxu0 %v3392
        %v3564 = vpop.f32.mrf.mxu0
        %v3565 = vadd.f32 %v3432, %v3564
        %v3566 = vpop.f32.mrf.mxu0
        %v3567 = vadd.f32 %v3432, %v3566
        %3568 = vmatmul.bf16.gmra.mxu0 %v3394
        %v3569 = vpop.f32.mrf.mxu0
        %v3570 = vadd.f32 %v3432, %v3569
        %v3571 = vpop.f32.mrf.mxu0
        %v3572 = vadd.f32 %v3432, %v3571
        %3573 = vmatmul.bf16.gmra.mxu0 %v3396
        %v3574 = vpop.f32.mrf.mxu0
        %v3575 = vadd.f32 %v3432, %v3574
        %v3576 = vpop.f32.mrf.mxu0
        %v3577 = vadd.f32 %v3432, %v3576
        %3578 = vdwg.mxu0
        %3579 = vmatpush.bf16.msra.mxu0 %v3513
        %3580 = vmatpush.bf16.msra.mxu0 %v3512
        %3581 = vmatpush.bf16.msra.mxu0 %v3511
        %3582 = vmatpush.bf16.msra.mxu0 %v3510
        %3583 = vmatpush.bf16.msra.mxu0 %v3509
        %3584 = vmatpush.bf16.msra.mxu0 %v3508
        %3585 = vmatpush.bf16.msra.mxu0 %v3507
        %3586 = vmatpush.bf16.msra.mxu0 %v3506
        %3587 = vmatmul.bf16.gmra.mxu0 %v3383
        %v3588 = vpop.f32.mrf.mxu0
        %v3589 = vadd.f32 %v3540, %v3588
        %v3590 = vpop.f32.mrf.mxu0
        %v3591 = vadd.f32 %v3542, %v3590
        %3592 = vmatmul.bf16.gmra.mxu0 %v3385
        %v3593 = vpop.f32.mrf.mxu0
        %v3594 = vadd.f32 %v3545, %v3593
        %v3595 = vpop.f32.mrf.mxu0
        %v3596 = vadd.f32 %v3547, %v3595
        %3597 = vmatmul.bf16.gmra.mxu0 %v3387
        %v3598 = vpop.f32.mrf.mxu0
        %v3599 = vadd.f32 %v3550, %v3598
        %v3600 = vpop.f32.mrf.mxu0
        %v3601 = vadd.f32 %v3552, %v3600
        %3602 = vmatmul.bf16.gmra.mxu0 %v3389
        %v3603 = vpop.f32.mrf.mxu0
        %v3604 = vadd.f32 %v3555, %v3603
        %v3605 = vpop.f32.mrf.mxu0
        %v3606 = vadd.f32 %v3557, %v3605
        %3607 = vmatmul.bf16.gmra.mxu0 %v3391
        %v3608 = vpop.f32.mrf.mxu0
        %v3609 = vadd.f32 %v3560, %v3608
        %v3610 = vpop.f32.mrf.mxu0
        %v3611 = vadd.f32 %v3562, %v3610
        %3612 = vmatmul.bf16.gmra.mxu0 %v3393
        %v3613 = vpop.f32.mrf.mxu0
        %v3614 = vadd.f32 %v3565, %v3613
        %v3615 = vpop.f32.mrf.mxu0
        %v3616 = vadd.f32 %v3567, %v3615
        %3617 = vmatmul.bf16.gmra.mxu0 %v3395
        %v3618 = vpop.f32.mrf.mxu0
        %v3619 = vadd.f32 %v3570, %v3618
        %v3620 = vpop.f32.mrf.mxu0
        %v3621 = vadd.f32 %v3572, %v3620
        %3622 = vmatmul.bf16.gmra.mxu0 %v3397
        %v3623 = vpop.f32.mrf.mxu0
        %v3624 = vadd.f32 %v3575, %v3623
        %v3625 = vpop.f32.mrf.mxu0
        %v3626 = vadd.f32 %v3577, %v3625
        %3627 = vdwg.mxu0
        %v3628 = vmax.f32 %v3589, 0.0
        %v3629 = vmax.f32 %v3591, 0.0
        %v3630 = vmax.f32 %v3594, 0.0
        %v3631 = vmax.f32 %v3596, 0.0
        %v3632 = vmax.f32 %v3599, 0.0
        %v3633 = vmax.f32 %v3601, 0.0
        %v3634 = vmax.f32 %v3604, 0.0
        %v3635 = vmax.f32 %v3606, 0.0
        %v3636 = vmax.f32 %v3609, 0.0
        %v3637 = vmax.f32 %v3611, 0.0
        %v3638 = vmax.f32 %v3614, 0.0
        %v3639 = vmax.f32 %v3616, 0.0
        %v3640 = vmax.f32 %v3619, 0.0
        %v3641 = vmax.f32 %v3621, 0.0
        %v3642 = vmax.f32 %v3624, 0.0
        %v3643 = vmax.f32 %v3626, 0.0
        %v3644 = vpack.c.bf16 %v3629, %v3628
        %v3645 = vpack.c.bf16 %v3631, %v3630
        %v3646 = vpack.c.bf16 %v3633, %v3632
        %v3647 = vpack.c.bf16 %v3635, %v3634
        %v3648 = vpack.c.bf16 %v3637, %v3636
        %v3649 = vpack.c.bf16 %v3639, %v3638
        %v3650 = vpack.c.bf16 %v3641, %v3640
        %v3651 = vpack.c.bf16 %v3643, %v3642
        %v3652 = vld [vmem:[%s7] sm:$0xf]
        %v3653 = vld [vmem:[%s7 + $0x4] sm:$0xf]
        %v3654 = vld [vmem:[%s7 + $0x8] sm:$0xf]
        %v3655 = vld [vmem:[%s7 + $0xc] sm:$0xf]
        %v3656 = vld [vmem:[%s7 + $0x10] sm:$0xf]
        %v3657 = vld [vmem:[%s7 + $0x14] sm:$0xf]
        %v3658 = vld [vmem:[%s7 + $0x18] sm:$0xf]
        %v3659 = vld [vmem:[%s7 + $0x1c] sm:$0xf]
        %v3660 = vld [vmem:[%s7 + $0x20] sm:$0xf]
        %v3661 = vld [vmem:[%s7 + $0x24] sm:$0xf]
        %v3662 = vld [vmem:[%s7 + $0x28] sm:$0xf]
        %v3663 = vld [vmem:[%s7 + $0x2c] sm:$0xf]
        %v3664 = vld [vmem:[%s7 + $0x30] sm:$0xf]
        %v3665 = vld [vmem:[%s7 + $0x34] sm:$0xf]
        %v3666 = vld [vmem:[%s7 + $0x38] sm:$0xf]
        %v3667 = vld [vmem:[%s7 + $0x3c] sm:$0xf]
        %v3668 = vld [vmem:[%s8] sm:$0x1]
        %v3670 = vperm.slane %v3668, 0
        %v3688 = vunpack.c.l.b16 %v3652
        %v3689 = vunpack.c.l.b16 %v3653
        %v3690 = vunpack.c.l.b16 %v3654
        %v3691 = vunpack.c.l.b16 %v3655
        %v3692 = vunpack.c.l.b16 %v3656
        %v3693 = vunpack.c.l.b16 %v3657
        %v3694 = vunpack.c.l.b16 %v3658
        %v3695 = vunpack.c.l.b16 %v3659
        %v3696 = vunpack.c.l.b16 %v3660
        %v3697 = vunpack.c.l.b16 %v3661
        %v3698 = vunpack.c.l.b16 %v3662
        %v3699 = vunpack.c.l.b16 %v3663
        %v3700 = vunpack.c.l.b16 %v3664
        %v3701 = vunpack.c.l.b16 %v3665
        %v3702 = vunpack.c.l.b16 %v3666
        %v3703 = vunpack.c.l.b16 %v3667
        %v3704 = vpack.c.b16 %v3689, %v3688
        %v3705 = vpack.c.b16 %v3691, %v3690
        %v3706 = vpack.c.b16 %v3693, %v3692
        %v3707 = vpack.c.b16 %v3695, %v3694
        %v3708 = vpack.c.b16 %v3697, %v3696
        %v3709 = vpack.c.b16 %v3699, %v3698
        %v3710 = vpack.c.b16 %v3701, %v3700
        %v3711 = vpack.c.b16 %v3703, %v3702
        %3720 = vmatpush.bf16.msra.mxu0 %v3711
        %3721 = vmatpush.bf16.msra.mxu0 %v3710
        %3722 = vmatpush.bf16.msra.mxu0 %v3709
        %3723 = vmatpush.bf16.msra.mxu0 %v3708
        %3724 = vmatpush.bf16.msra.mxu0 %v3707
        %3725 = vmatpush.bf16.msra.mxu0 %v3706
        %3726 = vmatpush.bf16.msra.mxu0 %v3705
        %3727 = vmatpush.bf16.msra.mxu0 %v3704
        %3728 = vmatmul.bf16.gmra.mxu0 %v3644
        %v3729 = vpop.f32.mrf.mxu0
        %v3730 = vadd.f32 %v3670, %v3729
        %v3731 = vpop.f32.mrf.mxu0
        %v3732 = vadd.f32 %v3670, %v3731
        %3733 = vmatmul.bf16.gmra.mxu0 %v3645
        %v3734 = vpop.f32.mrf.mxu0
        %v3735 = vadd.f32 %v3670, %v3734
        %v3736 = vpop.f32.mrf.mxu0
        %v3737 = vadd.f32 %v3670, %v3736
        %3738 = vmatmul.bf16.gmra.mxu0 %v3646
        %v3739 = vpop.f32.mrf.mxu0
        %v3740 = vadd.f32 %v3670, %v3739
        %v3741 = vpop.f32.mrf.mxu0
        %v3742 = vadd.f32 %v3670, %v3741
        %3743 = vmatmul.bf16.gmra.mxu0 %v3647
        %v3744 = vpop.f32.mrf.mxu0
        %v3745 = vadd.f32 %v3670, %v3744
        %v3746 = vpop.f32.mrf.mxu0
        %v3747 = vadd.f32 %v3670, %v3746
        %3748 = vmatmul.bf16.gmra.mxu0 %v3648
        %v3749 = vpop.f32.mrf.mxu0
        %v3750 = vadd.f32 %v3670, %v3749
        %v3751 = vpop.f32.mrf.mxu0
        %v3752 = vadd.f32 %v3670, %v3751
        %3753 = vmatmul.bf16.gmra.mxu0 %v3649
        %v3754 = vpop.f32.mrf.mxu0
        %v3755 = vadd.f32 %v3670, %v3754
        %v3756 = vpop.f32.mrf.mxu0
        %v3757 = vadd.f32 %v3670, %v3756
        %3758 = vmatmul.bf16.gmra.mxu0 %v3650
        %v3759 = vpop.f32.mrf.mxu0
        %v3760 = vadd.f32 %v3670, %v3759
        %v3761 = vpop.f32.mrf.mxu0
        %v3762 = vadd.f32 %v3670, %v3761
        %3763 = vmatmul.bf16.gmra.mxu0 %v3651
        %v3764 = vpop.f32.mrf.mxu0
        %v3765 = vadd.f32 %v3670, %v3764
        %v3766 = vpop.f32.mrf.mxu0
        %v3767 = vadd.f32 %v3670, %v3766
        %3768 = vdwg.mxu0
        %v3769 = vmax.f32 %v3730, 0.0
        %v3770 = vmax.f32 %v3732, 0.0
        %v3771 = vmax.f32 %v3735, 0.0
        %v3772 = vmax.f32 %v3737, 0.0
        %v3773 = vmax.f32 %v3740, 0.0
        %v3774 = vmax.f32 %v3742, 0.0
        %v3775 = vmax.f32 %v3745, 0.0
        %v3776 = vmax.f32 %v3747, 0.0
        %v3777 = vmax.f32 %v3750, 0.0
        %v3778 = vmax.f32 %v3752, 0.0
        %v3779 = vmax.f32 %v3755, 0.0
        %v3780 = vmax.f32 %v3757, 0.0
        %v3781 = vmax.f32 %v3760, 0.0
        %v3782 = vmax.f32 %v3762, 0.0
        %v3783 = vmax.f32 %v3765, 0.0
        %v3784 = vmax.f32 %v3767, 0.0
        %v3785 = vpack.c.bf16 %v3770, %v3769
        %v3786 = vpack.c.bf16 %v3772, %v3771
        %v3787 = vpack.c.bf16 %v3774, %v3773
        %v3788 = vpack.c.bf16 %v3776, %v3775
        %v3789 = vpack.c.bf16 %v3778, %v3777
        %v3790 = vpack.c.bf16 %v3780, %v3779
        %v3791 = vpack.c.bf16 %v3782, %v3781
        %v3792 = vpack.c.bf16 %v3784, %v3783
        %v3793 = vld [vmem:[%s9] sm:$0xf]
        %v3794 = vld [vmem:[%s9 + $0x4] sm:$0xf]
        %v3795 = vld [vmem:[%s9 + $0x8] sm:$0xf]
        %v3796 = vld [vmem:[%s9 + $0xc] sm:$0xf]
        %v3797 = vld [vmem:[%s9 + $0x10] sm:$0xf]
        %v3798 = vld [vmem:[%s9 + $0x14] sm:$0xf]
        %v3799 = vld [vmem:[%s9 + $0x18] sm:$0xf]
        %v3800 = vld [vmem:[%s9 + $0x1c] sm:$0xf]
        %v3801 = vld [vmem:[%s10] sm:$0x1]
        %v3803 = vperm.slane %v3801, 0
        %v3813 = vunpack.c.l.b16 %v3793
        %v3814 = vunpack.c.l.b16 %v3794
        %v3815 = vunpack.c.l.b16 %v3795
        %v3816 = vunpack.c.l.b16 %v3796
        %v3817 = vunpack.c.l.b16 %v3797
        %v3818 = vunpack.c.l.b16 %v3798
        %v3819 = vunpack.c.l.b16 %v3799
        %v3820 = vunpack.c.l.b16 %v3800
        %v3821 = vpack.c.b16 %v3814, %v3813
        %v3822 = vpack.c.b16 %v3816, %v3815
        %v3823 = vpack.c.b16 %v3818, %v3817
        %v3824 = vpack.c.b16 %v3820, %v3819
        %v3830 = vsel %vm2079, %v3785, 0
        %v3833 = vsel %vm2079, %v3786, 0
        %v3836 = vsel %vm2079, %v3787, 0
        %v3839 = vsel %vm2079, %v3788, 0
        %v3842 = vsel %vm2079, %v3789, 0
        %v3845 = vsel %vm2079, %v3790, 0
        %v3848 = vsel %vm2079, %v3791, 0
        %v3851 = vsel %vm2079, %v3792, 0
        %3853 = vmatpush.bf16.msra.mxu0 0
        %3854 = vmatpush.bf16.msra.mxu0 0
        %3855 = vmatpush.bf16.msra.mxu0 0
        %3856 = vmatpush.bf16.msra.mxu0 0
        %3857 = vmatpush.bf16.msra.mxu0 %v3824
        %3858 = vmatpush.bf16.msra.mxu0 %v3823
        %3859 = vmatpush.bf16.msra.mxu0 %v3822
        %3860 = vmatpush.bf16.msra.mxu0 %v3821
        %3861 = vmatmul.bf16.gmra.mxu0 %v3830
        %v3862 = vpop.f32.mrf.mxu0
        %v3863 = vadd.f32 %v3803, %v3862
        %v3864 = vpop.f32.mrf.mxu0
        %v3865 = vadd.f32 %v3803, %v3864
        %3866 = vmatmul.bf16.gmra.mxu0 %v3833
        %v3867 = vpop.f32.mrf.mxu0
        %v3868 = vadd.f32 %v3803, %v3867
        %v3869 = vpop.f32.mrf.mxu0
        %v3870 = vadd.f32 %v3803, %v3869
        %3871 = vmatmul.bf16.gmra.mxu0 %v3836
        %v3872 = vpop.f32.mrf.mxu0
        %v3873 = vadd.f32 %v3803, %v3872
        %v3874 = vpop.f32.mrf.mxu0
        %v3875 = vadd.f32 %v3803, %v3874
        %3876 = vmatmul.bf16.gmra.mxu0 %v3839
        %v3877 = vpop.f32.mrf.mxu0
        %v3878 = vadd.f32 %v3803, %v3877
        %v3879 = vpop.f32.mrf.mxu0
        %v3880 = vadd.f32 %v3803, %v3879
        %3881 = vmatmul.bf16.gmra.mxu0 %v3842
        %v3882 = vpop.f32.mrf.mxu0
        %v3883 = vadd.f32 %v3803, %v3882
        %v3884 = vpop.f32.mrf.mxu0
        %v3885 = vadd.f32 %v3803, %v3884
        %3886 = vmatmul.bf16.gmra.mxu0 %v3845
        %v3887 = vpop.f32.mrf.mxu0
        %v3888 = vadd.f32 %v3803, %v3887
        %v3889 = vpop.f32.mrf.mxu0
        %v3890 = vadd.f32 %v3803, %v3889
        %3891 = vmatmul.bf16.gmra.mxu0 %v3848
        %v3892 = vpop.f32.mrf.mxu0
        %v3893 = vadd.f32 %v3803, %v3892
        %v3894 = vpop.f32.mrf.mxu0
        %v3895 = vadd.f32 %v3803, %v3894
        %3896 = vmatmul.bf16.gmra.mxu0 %v3851
        %v3897 = vpop.f32.mrf.mxu0
        %v3898 = vadd.f32 %v3803, %v3897
        %v3899 = vpop.f32.mrf.mxu0
        %v3900 = vadd.f32 %v3803, %v3899
        %3901 = vdwg.mxu0
        %s3902 = scalar_lea.vmem %s410, 128 [#allocation7]
        %3903 = vst [vmem:[%s3902] sm:$0xff] %v3863
        %3904 = vst [vmem:[%s3902 + $0x8] sm:$0xff] %v3865
        %3905 = vst [vmem:[%s3902 + $0x10] sm:$0xff] %v3868
        %3906 = vst [vmem:[%s3902 + $0x18] sm:$0xff] %v3870
        %3907 = vst [vmem:[%s3902 + $0x20] sm:$0xff] %v3873
        %3908 = vst [vmem:[%s3902 + $0x28] sm:$0xff] %v3875
        %3909 = vst [vmem:[%s3902 + $0x30] sm:$0xff] %v3878
        %3910 = vst [vmem:[%s3902 + $0x38] sm:$0xff] %v3880
        %3911 = vst [vmem:[%s3902 + $0x40] sm:$0xff] %v3883
        %3912 = vst [vmem:[%s3902 + $0x48] sm:$0xff] %v3885
        %3913 = vst [vmem:[%s3902 + $0x50] sm:$0xff] %v3888
        %3914 = vst [vmem:[%s3902 + $0x58] sm:$0xff] %v3890
        %3915 = vst [vmem:[%s3902 + $0x60] sm:$0xff] %v3893
        %3916 = vst [vmem:[%s3902 + $0x68] sm:$0xff] %v3895
        %3917 = vst [vmem:[%s3902 + $0x70] sm:$0xff] %v3898
        %3918 = vst [vmem:[%s3902 + $0x78] sm:$0xff] %v3900
        %s3919 = sand.u32 %s271, 1
        %s3920 = scalar_lea.sflag [#allocation4], %s3919
        %s3921 = sand.u32 %s271, 1
        %s3922 = smul.addr %s3921, 256
        %s3923 = scalar_lea.vmem [#allocation7], %s3922
        // Predicated region
        $region73: #{tpu_custom_call.1} parent=63 // pred_check
          %p3924 = pneg %p281
        $region74: #{tpu_custom_call.1} parent=63 // pred_check_branch
          %3926 = sbr.rel (%p3924) target = $region76
        $region75: #{tpu_custom_call.1} parent=63 // pred_region
          %s3927 = smul.u32 32, %s27
          %3929 = vsyncadd %s3920, 0
          %s3930 = smul.addr %s3927, 8
          %s3931 = scalar_lea.hbm %s11, %s3930
          %s3932 = sshll.u32 %s3923, 4
          %s3933 = int_to_ptr.vmem [resolvable:$true] %s3932
          %s3934 = sshll.u32 %s3931, 4
          %s3935 = int_to_ptr.hbm [resolvable:$true] %s3934
          %3940 = dma.vmem_to_hbm [thread:$0]  %s3933, 4096, %s3935, %s3920, 128, 128, 8
        $region76: #{tpu_custom_call.1} parent=63 // pred_fallthru
          _
      $region64: #{tpu_custom_call.1} parent=5 // pred_fallthru
        _
      %p3941 = scmp.le.s32.totalorder 2, %s22
      // Predicated region
      $region77: #{tpu_custom_call.1} parent=5 // pred_check
        %p3942 = pneg %p3941
      $region78: #{tpu_custom_call.1} parent=5 // pred_check_branch
        %3944 = sbr.rel (%p3942) target = $region80
      $region79: #{tpu_custom_call.1} parent=5 // pred_region
        %s3945 = ssub.s32 %s22, 2
        // Predicated region
        $region81: #{tpu_custom_call.1} parent=79 // pred_check
          %p3946 = pneg %p287
        $region82: #{tpu_custom_call.1} parent=79 // pred_check_branch
          %3948 = sbr.rel (%p3946) target = $region84
        $region83: #{tpu_custom_call.1} parent=79 // pred_region
          %s3949 = sand.u32 %s272, 1
          %s3950 = scalar_lea.sflag [#allocation4], %s3949
          %s3951 = sand.u32 %s272, 1
          %s3952 = smul.addr %s3951, 256
          %s3953 = scalar_lea.vmem [#allocation7], %s3952
          %3955 = dma.done %s3950, 4096
        $region84: #{tpu_custom_call.1} parent=79 // pred_fallthru
          _
      $region80: #{tpu_custom_call.1} parent=5 // pred_fallthru
        _
    $region6: #{tpu_custom_call.1} parent=1 // loop_footer
      %s26 = sadd.s32 1, %s22
    $region7: #{tpu_custom_call.1} parent=1 // loop_footer_branch
      %21 = sbr.rel target = $region3
    $region8: #{tpu_custom_call.1} parent=1 // loop_exit
      _
    %3956 = vsyncpa [#allocation3], 1
    %s3957 = scalar_lea.sflag [#allocation3], 1
    %3958 = vsyncpa %s3957, 1
    %3959 = vsyncpa [#allocation6], 1
    %3960 = vsyncpa [#allocation4], 1
    %s3961 = scalar_lea.sflag [#allocation4], 1
    %3962 = vsyncpa %s3961, 1

</llo_original>
